<compile_context>
chip_gen: v6e
topology: v6e:2x2x1
jax: 0.10.0
libtpu: 0.0.40
codegen_flags: <defaults>
</compile_context>

<pallas_src>
import functools

import jax
import jax.numpy as jnp
from jax.experimental import pallas as pl
from jax.experimental.pallas import tpu as pltpu

class_size = 7
NEG_SLOPE = 0.2
BN_EPS = 1e-5


def _round_up(x, m):
    return (x + m - 1) // m * m


# ----------------------------- Pallas kernels ------------------------------ #

def _conv_bn_lrelu_kernel(w_ref, gb_ref, p_ref, o_ref, stats_ref, *,
                          m_valid, tile_m, multi_tile):
    """Fused conv (lane-dense matmul) + BatchNorm(train, batch stats) + LeakyReLU.

    w_ref    : (Cout, K)     bf16  weight, K ordered (kh, kw, cin)
    gb_ref   : (Cout, 2)     f32   [:, 0] = gamma, [:, 1] = beta
    p_ref    : (K, TILE_M)   bf16  patch tile, M ordered (n, oh, ow)
    o_ref    : (Cout, Mp)    bf16  output (resident in the multi-tile fallback)
    stats_ref: (Cout, 2)     f32   streamed (sum, sumsq) accumulator (multi-tile)
    """
    inv_m = jnp.float32(1.0 / m_valid)
    x = jnp.dot(w_ref[...], p_ref[...], preferred_element_type=jnp.float32)

    def scale_shift(s, ss):
        mean = s * inv_m
        var = jnp.maximum(ss * inv_m - mean * mean, 0.0)      # biased, like PyTorch train
        scale = gb_ref[:, 0:1] * jax.lax.rsqrt(var + BN_EPS)
        shift = gb_ref[:, 1:2] - mean * scale
        return scale, shift

    if not multi_tile:
        # One grid step: stats from the hot tile, one normalize+LReLU pass, bf16 store.
        # Zero-padded columns contribute nothing to sum/sumsq; divide by true M.
        scale, shift = scale_shift(jnp.sum(x, axis=1, keepdims=True),
                                   jnp.sum(x * x, axis=1, keepdims=True))
        y = x * scale + shift
        o_ref[...] = jnp.where(y >= 0, y, NEG_SLOPE * y).astype(o_ref.dtype)
    else:
        m = pl.program_id(0)

        @pl.when(m == 0)
        def _():
            stats_ref[...] = jnp.zeros_like(stats_ref)

        stats_ref[:, 0:1] += jnp.sum(x, axis=1, keepdims=True)
        stats_ref[:, 1:2] += jnp.sum(x * x, axis=1, keepdims=True)

        start = pl.multiple_of(m * tile_m, 128)
        o_ref[:, pl.ds(start, tile_m)] = x.astype(o_ref.dtype)   # raw conv (bf16)

        @pl.when(m == pl.num_programs(0) - 1)
        def _():
            scale, shift = scale_shift(stats_ref[:, 0:1], stats_ref[:, 1:2])
            y = o_ref[...].astype(jnp.float32) * scale + shift
            o_ref[...] = jnp.where(y >= 0, y, NEG_SLOPE * y).astype(o_ref.dtype)


def _head_kernel(x_ref, w_ref, b_ref, out_ref, preds_ref):
    """Fused conv6(+sigmoid) and preds_fc2: one matmul, two outputs."""
    y = jnp.dot(x_ref[...], w_ref[...], preferred_element_type=jnp.float32)
    out_ref[...] = jax.nn.sigmoid(y[:, 0:1])                 # conv6 has bias=False
    preds_ref[...] = y[:, 1:] + b_ref[...]


# ------------------------------- JAX glue ---------------------------------- #

def _im2col_cnhw(a, k, s, p):
    """a: (C, N, H, W) -> (K, M); K ordered (kh, kw, c), M ordered (n, oh, ow).

    Transpose-free: stack + reshape only (no layout churn in HBM).
    """
    c, n, h, w = a.shape
    if p:
        a = jnp.pad(a, ((0, 0), (0, 0), (p, p), (p, p)))
    oh = (h + 2 * p - k) // s + 1
    ow = (w + 2 * p - k) // s + 1
    cols = [a[:, :, i:i + s * (oh - 1) + 1:s, j:j + s * (ow - 1) + 1:s]
            for i in range(k) for j in range(k)]
    pat = jnp.stack(cols, axis=0)                    # (k*k, C, N, oh, ow)
    return pat.reshape(k * k * c, n * oh * ow), oh, ow


def conv_bn_lrelu(a, wmat, gb, k, s, p, *, tile_m=4096, single_tile_max=8192):
    """a: (Cin, N, H, W) bf16 -> (Cout, N, OH, OW) bf16. Fused conv+BN(train)+LReLU."""
    cout, kdim = wmat.shape
    n = a.shape[1]
    pat, oh, ow = _im2col_cnhw(a.astype(jnp.bfloat16), k, s, p)
    m = pat.shape[1]

    m128 = _round_up(m, 128)
    multi_tile = m128 > single_tile_max        # demo sizes: always single-tile
    tm = tile_m if multi_tile else m128
    mp = _round_up(m, tm)
    if mp != m:
        pat = jnp.pad(pat, ((0, 0), (0, mp - m)))

    out = pl.pallas_call(
        functools.partial(_conv_bn_lrelu_kernel, m_valid=m, tile_m=tm,
                          multi_tile=multi_tile),
        out_shape=jax.ShapeDtypeStruct((cout, mp), jnp.bfloat16),
        grid=(mp // tm,),
        in_specs=[
            pl.BlockSpec((cout, kdim), lambda i: (0, 0)),
            pl.BlockSpec((cout, 2), lambda i: (0, 0)),
            pl.BlockSpec((kdim, tm), lambda i: (0, i)),
        ],
        out_specs=pl.BlockSpec((cout, mp), lambda i: (0, 0)),
        scratch_shapes=[pltpu.VMEM((cout, 2), jnp.float32)],
        compiler_params=pltpu.CompilerParams(
            dimension_semantics=("arbitrary",),
            vmem_limit_bytes=48 * 1024 * 1024),
    )(wmat, gb, pat)

    return out[:, :m].reshape(cout, n, oh, ow)


def discriminator_forward(x, prep):
    n = x.shape[0]
    # NCHW f32 -> bf16 -> CNHW (channel-major), done once at the input.
    a = jnp.transpose(x.astype(jnp.bfloat16), (1, 0, 2, 3))
    a = conv_bn_lrelu(a, prep["wm1"], prep["gb1"], 4, 2, 1)
    a = conv_bn_lrelu(a, prep["wm2"], prep["gb2"], 4, 2, 0)
    a = conv_bn_lrelu(a, prep["wm3"], prep["gb3"], 4, 2, 1)
    a = conv_bn_lrelu(a, prep["wm4"], prep["gb4"], 4, 2, 1)
    a = conv_bn_lrelu(a, prep["wm5"], prep["gb5"], 3, 1, 0)

    # a: (12*scale, N, 4, 4). torch.reshape(x, (N, 16*scale*12)) flattens per
    # sample in (c, h, w) order, identical to conv6's full-4x4-window patch, so
    # both heads share one feature matrix and one fused kernel.
    c5 = a.shape[0]
    feat = jnp.transpose(a, (1, 0, 2, 3)).reshape(n, c5 * 16)     # (N, 768) bf16

    output, preds = pl.pallas_call(
        _head_kernel,
        out_shape=(jax.ShapeDtypeStruct((n, 1), jnp.float32),
                   jax.ShapeDtypeStruct((n, class_size), jnp.float32)),
        grid=(1,),
        in_specs=[
            pl.BlockSpec((n, c5 * 16), lambda i: (0, 0)),
            pl.BlockSpec((c5 * 16, 1 + class_size), lambda i: (0, 0)),
            pl.BlockSpec((1, class_size), lambda i: (0, 0)),
        ],
        out_specs=(pl.BlockSpec((n, 1), lambda i: (0, 0)),
                   pl.BlockSpec((n, class_size), lambda i: (0, 0))),
    )(feat, prep["wc"], prep["fb"])
    return [output, preds]


def init_params(key, scale):
    ks = jax.random.split(key, 7)

    def conv_w(k, cout, cin, ksz):
        return jax.random.normal(k, (cout, cin, ksz, ksz), jnp.float32) * 0.05

    params = {
        "w1": conv_w(ks[0], scale, 3, 4),
        "w2": conv_w(ks[1], scale * 2, scale, 4),
        "w3": conv_w(ks[2], scale * 4, scale * 2, 4),
        "w4": conv_w(ks[3], scale * 8, scale * 4, 4),
        "w5": conv_w(ks[4], scale * 12, scale * 8, 3),
        "w6": conv_w(ks[5], 1, scale * 12, 4),
        "fc_w": jax.random.normal(ks[6], (scale * 12 * 16, class_size), jnp.float32) * 0.05,
        "fc_b": jnp.zeros((class_size,), jnp.float32),
    }
    for i, c in enumerate([scale, scale * 2, scale * 4, scale * 8, scale * 12], start=1):
        params[f"g{i}"] = jnp.ones((c,), jnp.float32)   # BatchNorm weight init
        params[f"b{i}"] = jnp.zeros((c,), jnp.float32)  # BatchNorm bias init
    return params


def prepare_params(params):
    """One-time packing into kernel-friendly layouts (hoisted out of the forward):
    conv weights -> (Cout, kh*kw*Cin) bf16, BN gamma/beta -> (Cout, 2) f32,
    conv6 + fc weights -> one fused (16*12*scale, 1+class_size) bf16 head matrix."""
    prep = {}
    for i in range(1, 6):
        w = params[f"w{i}"]
        cout = w.shape[0]
        prep[f"wm{i}"] = (w.transpose(0, 2, 3, 1).reshape(cout, -1)
                          .astype(jnp.bfloat16))
        prep[f"gb{i}"] = jnp.stack([params[f"g{i}"], params[f"b{i}"]],
                                   axis=1).astype(jnp.float32)
    w6 = params["w6"].reshape(1, -1).T                       # (768, 1), (c,h,w) order
    prep["wc"] = jnp.concatenate([w6, params["fc_w"]], axis=1).astype(jnp.bfloat16)
    prep["fb"] = params["fc_b"].reshape(1, class_size).astype(jnp.float32)
    return prep


if __name__ == "__main__":
    scale = 4
    key = jax.random.PRNGKey(0)
    kx, kp = jax.random.split(key)

    # Input spatial 100x100 is required so conv5's output is 4x4 (see reshape).
    x = jax.random.normal(kx, (2, 3, 100, 100), jnp.float32)
    params = init_params(kp, scale)
    prep = prepare_params(params)          # done once, outside the jitted forward

    fwd = jax.jit(discriminator_forward)
    output, preds = fwd(x, prep)
    jax.block_until_ready(output)
    jax.block_until_ready(preds)

    assert output.shape == (2, 1)
    assert preds.shape == (2, class_size)
    assert bool(jnp.all((output >= 0.0) & (output <= 1.0)))
    assert bool(jnp.all(jnp.isfinite(preds)))
    print("KERNEL_OK")
</pallas_src>

<mosaic_0001>
module attributes {stable_mosaic.version = 11 : i64} {
  func.func @_conv_bn_lrelu_kernel(%arg0: i32, %arg1: memref<4x48xbf16, #tpu.memory_space<vmem>>, %arg2: memref<4x2xf32, #tpu.memory_space<vmem>>, %arg3: memref<48x5120xbf16, #tpu.memory_space<vmem>>, %arg4: memref<4x5120xbf16, #tpu.memory_space<vmem>>, %arg5: memref<4x2xf32, #tpu.memory_space<vmem>>) attributes {dimension_semantics = [#tpu.dimension_semantics<arbitrary>], iteration_bounds = array<i64: 1>, scalar_prefetch = 0 : i64, scratch_operands = 1 : i64, tpu.core_type = #tpu.core_type<tc>, window_params = [{pipeline_mode = #tpu.pipeline_mode<synchronous>, transform_indices = @transform_0, window_bounds = array<i64: 4, 48>}, {pipeline_mode = #tpu.pipeline_mode<synchronous>, transform_indices = @transform_1, window_bounds = array<i64: 4, 2>}, {transform_indices = @transform_2, window_bounds = array<i64: 48, 5120>}, {pipeline_mode = #tpu.pipeline_mode<synchronous>, transform_indices = @transform_3, window_bounds = array<i64: 4, 5120>}]} {
    %c0 = arith.constant 0 : index
    %c0_0 = arith.constant 0 : index
    %0 = vector.load %arg1[%c0, %c0_0] : memref<4x48xbf16, #tpu.memory_space<vmem>>, vector<4x48xbf16>
    %c0_1 = arith.constant 0 : index
    %c0_2 = arith.constant 0 : index
    %1 = vector.load %arg3[%c0_1, %c0_2] : memref<48x5120xbf16, #tpu.memory_space<vmem>>, vector<48x5120xbf16>
    %cst = arith.constant dense<0.000000e+00> : vector<4x5120xf32>
    %2 = tpu.matmul %0, %1, %cst {dimension_numbers = #tpu.dot_dimension_numbers<[1], [0], [0], [1], [0, 0, 1, 1], [], []>} : vector<4x48xbf16>, vector<48x5120xbf16>, vector<4x5120xf32> -> vector<4x5120xf32>
    %cst_3 = arith.constant dense<0.000000e+00> : vector<4xf32>
    %3 = vector.multi_reduction <add>, %2, %cst_3 [1] : vector<4x5120xf32> to vector<4xf32>
    %4 = vector.shape_cast %3 : vector<4xf32> to vector<4x1xf32>
    %5 = arith.mulf %2, %2 : vector<4x5120xf32>
    %cst_4 = arith.constant dense<0.000000e+00> : vector<4xf32>
    %6 = vector.multi_reduction <add>, %5, %cst_4 [1] : vector<4x5120xf32> to vector<4xf32>
    %7 = vector.shape_cast %6 : vector<4xf32> to vector<4x1xf32>
    %cst_5 = arith.constant 2.000000e-04 : f32
    %8 = vector.broadcast %cst_5 : f32 to vector<4x1xf32>
    %9 = arith.mulf %4, %8 : vector<4x1xf32>
    %cst_6 = arith.constant 2.000000e-04 : f32
    %10 = vector.broadcast %cst_6 : f32 to vector<4x1xf32>
    %11 = arith.mulf %7, %10 : vector<4x1xf32>
    %12 = arith.mulf %9, %9 : vector<4x1xf32>
    %13 = arith.subf %11, %12 : vector<4x1xf32>
    %cst_7 = arith.constant 0.000000e+00 : f32
    %14 = vector.broadcast %cst_7 : f32 to vector<4x1xf32>
    %15 = arith.maximumf %13, %14 : vector<4x1xf32>
    %c0_8 = arith.constant 0 : index
    %c0_9 = arith.constant 0 : index
    %16 = vector.load %arg2[%c0_8, %c0_9] : memref<4x2xf32, #tpu.memory_space<vmem>>, vector<4x1xf32>
    %cst_10 = arith.constant 9.99999974E-6 : f32
    %17 = vector.broadcast %cst_10 : f32 to vector<4x1xf32>
    %18 = arith.addf %15, %17 : vector<4x1xf32>
    %19 = math.rsqrt %18 : vector<4x1xf32>
    %20 = arith.mulf %16, %19 : vector<4x1xf32>
    %c0_11 = arith.constant 0 : index
    %c1 = arith.constant 1 : index
    %21 = vector.load %arg2[%c0_11, %c1] : memref<4x2xf32, #tpu.memory_space<vmem>>, vector<4x1xf32>
    %22 = arith.mulf %9, %20 : vector<4x1xf32>
    %23 = arith.subf %21, %22 : vector<4x1xf32>
    %24 = vector.broadcast %20 : vector<4x1xf32> to vector<4x5120xf32>
    %25 = arith.mulf %2, %24 : vector<4x5120xf32>
    %26 = vector.broadcast %23 : vector<4x1xf32> to vector<4x5120xf32>
    %27 = arith.addf %25, %26 : vector<4x5120xf32>
    %cst_12 = arith.constant 0.000000e+00 : f32
    %28 = vector.broadcast %cst_12 : f32 to vector<4x5120xf32>
    %29 = arith.cmpf oge, %27, %28 : vector<4x5120xf32>
    %cst_13 = arith.constant 2.000000e-01 : f32
    %30 = vector.broadcast %cst_13 : f32 to vector<4x5120xf32>
    %31 = arith.mulf %30, %27 : vector<4x5120xf32>
    %32 = arith.select %29, %27, %31 : vector<4x5120xi1>, vector<4x5120xf32>
    %33 = arith.truncf %32 : vector<4x5120xf32> to vector<4x5120xbf16>
    %c0_14 = arith.constant 0 : index
    %c0_15 = arith.constant 0 : index
    %34 = vector.load %arg4[%c0_14, %c0_15] : memref<4x5120xbf16, #tpu.memory_space<vmem>>, vector<4x5120xbf16>
    tpu.vector_store %arg4[%c0_14, %c0_15], %33 {strides = array<i32>} : memref<4x5120xbf16, #tpu.memory_space<vmem>>, vector<4x5120xbf16>,
    return
  }
  func.func @transform_0(%arg0: i32) -> (i32, i32) {
    %c0_i32 = arith.constant 0 : i32
    %c0_i32_0 = arith.constant 0 : i32
    %c0_i32_1 = arith.constant 0 : i32
    return %c0_i32, %c0_i32_0 : i32, i32
  }
  func.func @transform_1(%arg0: i32) -> (i32, i32) {
    %c0_i32 = arith.constant 0 : i32
    %c0_i32_0 = arith.constant 0 : i32
    %c0_i32_1 = arith.constant 0 : i32
    return %c0_i32, %c0_i32_0 : i32, i32
  }
  func.func @transform_2(%arg0: i32) -> (i32, i32) {
    %c0_i32 = arith.constant 0 : i32
    %c0_i32_0 = arith.constant 0 : i32
    return %c0_i32, %arg0 : i32, i32
  }
  func.func @transform_3(%arg0: i32) -> (i32, i32) {
    %c0_i32 = arith.constant 0 : i32
    %c0_i32_0 = arith.constant 0 : i32
    %c0_i32_1 = arith.constant 0 : i32
    return %c0_i32, %c0_i32_0 : i32, i32
  }
}

module attributes {stable_mosaic.version = 11 : i64} {
  func.func @_conv_bn_lrelu_kernel(%arg0: i32, %arg1: memref<8x64xbf16, #tpu.memory_space<vmem>>, %arg2: memref<8x2xf32, #tpu.memory_space<vmem>>, %arg3: memref<64x1152xbf16, #tpu.memory_space<vmem>>, %arg4: memref<8x1152xbf16, #tpu.memory_space<vmem>>, %arg5: memref<8x2xf32, #tpu.memory_space<vmem>>) attributes {dimension_semantics = [#tpu.dimension_semantics<arbitrary>], iteration_bounds = array<i64: 1>, scalar_prefetch = 0 : i64, scratch_operands = 1 : i64, tpu.core_type = #tpu.core_type<tc>, window_params = [{pipeline_mode = #tpu.pipeline_mode<synchronous>, transform_indices = @transform_0, window_bounds = array<i64: 8, 64>}, {pipeline_mode = #tpu.pipeline_mode<synchronous>, transform_indices = @transform_1, window_bounds = array<i64: 8, 2>}, {transform_indices = @transform_2, window_bounds = array<i64: 64, 1152>}, {pipeline_mode = #tpu.pipeline_mode<synchronous>, transform_indices = @transform_3, window_bounds = array<i64: 8, 1152>}]} {
    %c0 = arith.constant 0 : index
    %c0_0 = arith.constant 0 : index
    %0 = vector.load %arg1[%c0, %c0_0] : memref<8x64xbf16, #tpu.memory_space<vmem>>, vector<8x64xbf16>
    %c0_1 = arith.constant 0 : index
    %c0_2 = arith.constant 0 : index
    %1 = vector.load %arg3[%c0_1, %c0_2] : memref<64x1152xbf16, #tpu.memory_space<vmem>>, vector<64x1152xbf16>
    %cst = arith.constant dense<0.000000e+00> : vector<8x1152xf32>
    %2 = tpu.matmul %0, %1, %cst {dimension_numbers = #tpu.dot_dimension_numbers<[1], [0], [0], [1], [0, 0, 1, 1], [], []>} : vector<8x64xbf16>, vector<64x1152xbf16>, vector<8x1152xf32> -> vector<8x1152xf32>
    %cst_3 = arith.constant dense<0.000000e+00> : vector<8xf32>
    %3 = vector.multi_reduction <add>, %2, %cst_3 [1] : vector<8x1152xf32> to vector<8xf32>
    %4 = vector.shape_cast %3 : vector<8xf32> to vector<8x1xf32>
    %5 = arith.mulf %2, %2 : vector<8x1152xf32>
    %cst_4 = arith.constant dense<0.000000e+00> : vector<8xf32>
    %6 = vector.multi_reduction <add>, %5, %cst_4 [1] : vector<8x1152xf32> to vector<8xf32>
    %7 = vector.shape_cast %6 : vector<8xf32> to vector<8x1xf32>
    %cst_5 = arith.constant 8.68055562E-4 : f32
    %8 = vector.broadcast %cst_5 : f32 to vector<8x1xf32>
    %9 = arith.mulf %4, %8 : vector<8x1xf32>
    %cst_6 = arith.constant 8.68055562E-4 : f32
    %10 = vector.broadcast %cst_6 : f32 to vector<8x1xf32>
    %11 = arith.mulf %7, %10 : vector<8x1xf32>
    %12 = arith.mulf %9, %9 : vector<8x1xf32>
    %13 = arith.subf %11, %12 : vector<8x1xf32>
    %cst_7 = arith.constant 0.000000e+00 : f32
    %14 = vector.broadcast %cst_7 : f32 to vector<8x1xf32>
    %15 = arith.maximumf %13, %14 : vector<8x1xf32>
    %c0_8 = arith.constant 0 : index
    %c0_9 = arith.constant 0 : index
    %16 = vector.load %arg2[%c0_8, %c0_9] : memref<8x2xf32, #tpu.memory_space<vmem>>, vector<8x1xf32>
    %cst_10 = arith.constant 9.99999974E-6 : f32
    %17 = vector.broadcast %cst_10 : f32 to vector<8x1xf32>
    %18 = arith.addf %15, %17 : vector<8x1xf32>
    %19 = math.rsqrt %18 : vector<8x1xf32>
    %20 = arith.mulf %16, %19 : vector<8x1xf32>
    %c0_11 = arith.constant 0 : index
    %c1 = arith.constant 1 : index
    %21 = vector.load %arg2[%c0_11, %c1] : memref<8x2xf32, #tpu.memory_space<vmem>>, vector<8x1xf32>
    %22 = arith.mulf %9, %20 : vector<8x1xf32>
    %23 = arith.subf %21, %22 : vector<8x1xf32>
    %24 = vector.broadcast %20 : vector<8x1xf32> to vector<8x1152xf32>
    %25 = arith.mulf %2, %24 : vector<8x1152xf32>
    %26 = vector.broadcast %23 : vector<8x1xf32> to vector<8x1152xf32>
    %27 = arith.addf %25, %26 : vector<8x1152xf32>
    %cst_12 = arith.constant 0.000000e+00 : f32
    %28 = vector.broadcast %cst_12 : f32 to vector<8x1152xf32>
    %29 = arith.cmpf oge, %27, %28 : vector<8x1152xf32>
    %cst_13 = arith.constant 2.000000e-01 : f32
    %30 = vector.broadcast %cst_13 : f32 to vector<8x1152xf32>
    %31 = arith.mulf %30, %27 : vector<8x1152xf32>
    %32 = arith.select %29, %27, %31 : vector<8x1152xi1>, vector<8x1152xf32>
    %33 = arith.truncf %32 : vector<8x1152xf32> to vector<8x1152xbf16>
    %c0_14 = arith.constant 0 : index
    %c0_15 = arith.constant 0 : index
    %34 = vector.load %arg4[%c0_14, %c0_15] : memref<8x1152xbf16, #tpu.memory_space<vmem>>, vector<8x1152xbf16>
    tpu.vector_store %arg4[%c0_14, %c0_15], %33 {strides = array<i32>} : memref<8x1152xbf16, #tpu.memory_space<vmem>>, vector<8x1152xbf16>,
    return
  }
  func.func @transform_0(%arg0: i32) -> (i32, i32) {
    %c0_i32 = arith.constant 0 : i32
    %c0_i32_0 = arith.constant 0 : i32
    %c0_i32_1 = arith.constant 0 : i32
    return %c0_i32, %c0_i32_0 : i32, i32
  }
  func.func @transform_1(%arg0: i32) -> (i32, i32) {
    %c0_i32 = arith.constant 0 : i32
    %c0_i32_0 = arith.constant 0 : i32
    %c0_i32_1 = arith.constant 0 : i32
    return %c0_i32, %c0_i32_0 : i32, i32
  }
  func.func @transform_2(%arg0: i32) -> (i32, i32) {
    %c0_i32 = arith.constant 0 : i32
    %c0_i32_0 = arith.constant 0 : i32
    return %c0_i32, %arg0 : i32, i32
  }
  func.func @transform_3(%arg0: i32) -> (i32, i32) {
    %c0_i32 = arith.constant 0 : i32
    %c0_i32_0 = arith.constant 0 : i32
    %c0_i32_1 = arith.constant 0 : i32
    return %c0_i32, %c0_i32_0 : i32, i32
  }
}

module attributes {stable_mosaic.version = 11 : i64} {
  func.func @_conv_bn_lrelu_kernel(%arg0: i32, %arg1: memref<16x128xbf16, #tpu.memory_space<vmem>>, %arg2: memref<16x2xf32, #tpu.memory_space<vmem>>, %arg3: memref<128x384xbf16, #tpu.memory_space<vmem>>, %arg4: memref<16x384xbf16, #tpu.memory_space<vmem>>, %arg5: memref<16x2xf32, #tpu.memory_space<vmem>>) attributes {dimension_semantics = [#tpu.dimension_semantics<arbitrary>], iteration_bounds = array<i64: 1>, scalar_prefetch = 0 : i64, scratch_operands = 1 : i64, tpu.core_type = #tpu.core_type<tc>, window_params = [{pipeline_mode = #tpu.pipeline_mode<synchronous>, transform_indices = @transform_0, window_bounds = array<i64: 16, 128>}, {pipeline_mode = #tpu.pipeline_mode<synchronous>, transform_indices = @transform_1, window_bounds = array<i64: 16, 2>}, {transform_indices = @transform_2, window_bounds = array<i64: 128, 384>}, {pipeline_mode = #tpu.pipeline_mode<synchronous>, transform_indices = @transform_3, window_bounds = array<i64: 16, 384>}]} {
    %c0 = arith.constant 0 : index
    %c0_0 = arith.constant 0 : index
    %0 = vector.load %arg1[%c0, %c0_0] : memref<16x128xbf16, #tpu.memory_space<vmem>>, vector<16x128xbf16>
    %c0_1 = arith.constant 0 : index
    %c0_2 = arith.constant 0 : index
    %1 = vector.load %arg3[%c0_1, %c0_2] : memref<128x384xbf16, #tpu.memory_space<vmem>>, vector<128x384xbf16>
    %cst = arith.constant dense<0.000000e+00> : vector<16x384xf32>
    %2 = tpu.matmul %0, %1, %cst {dimension_numbers = #tpu.dot_dimension_numbers<[1], [0], [0], [1], [0, 0, 1, 1], [], []>} : vector<16x128xbf16>, vector<128x384xbf16>, vector<16x384xf32> -> vector<16x384xf32>
    %cst_3 = arith.constant dense<0.000000e+00> : vector<16xf32>
    %3 = vector.multi_reduction <add>, %2, %cst_3 [1] : vector<16x384xf32> to vector<16xf32>
    %4 = vector.shape_cast %3 : vector<16xf32> to vector<16x1xf32>
    %5 = arith.mulf %2, %2 : vector<16x384xf32>
    %cst_4 = arith.constant dense<0.000000e+00> : vector<16xf32>
    %6 = vector.multi_reduction <add>, %5, %cst_4 [1] : vector<16x384xf32> to vector<16xf32>
    %7 = vector.shape_cast %6 : vector<16xf32> to vector<16x1xf32>
    %cst_5 = arith.constant 0.00347222225 : f32
    %8 = vector.broadcast %cst_5 : f32 to vector<16x1xf32>
    %9 = arith.mulf %4, %8 : vector<16x1xf32>
    %cst_6 = arith.constant 0.00347222225 : f32
    %10 = vector.broadcast %cst_6 : f32 to vector<16x1xf32>
    %11 = arith.mulf %7, %10 : vector<16x1xf32>
    %12 = arith.mulf %9, %9 : vector<16x1xf32>
    %13 = arith.subf %11, %12 : vector<16x1xf32>
    %cst_7 = arith.constant 0.000000e+00 : f32
    %14 = vector.broadcast %cst_7 : f32 to vector<16x1xf32>
    %15 = arith.maximumf %13, %14 : vector<16x1xf32>
    %c0_8 = arith.constant 0 : index
    %c0_9 = arith.constant 0 : index
    %16 = vector.load %arg2[%c0_8, %c0_9] : memref<16x2xf32, #tpu.memory_space<vmem>>, vector<16x1xf32>
    %cst_10 = arith.constant 9.99999974E-6 : f32
    %17 = vector.broadcast %cst_10 : f32 to vector<16x1xf32>
    %18 = arith.addf %15, %17 : vector<16x1xf32>
    %19 = math.rsqrt %18 : vector<16x1xf32>
    %20 = arith.mulf %16, %19 : vector<16x1xf32>
    %c0_11 = arith.constant 0 : index
    %c1 = arith.constant 1 : index
    %21 = vector.load %arg2[%c0_11, %c1] : memref<16x2xf32, #tpu.memory_space<vmem>>, vector<16x1xf32>
    %22 = arith.mulf %9, %20 : vector<16x1xf32>
    %23 = arith.subf %21, %22 : vector<16x1xf32>
    %24 = vector.broadcast %20 : vector<16x1xf32> to vector<16x384xf32>
    %25 = arith.mulf %2, %24 : vector<16x384xf32>
    %26 = vector.broadcast %23 : vector<16x1xf32> to vector<16x384xf32>
    %27 = arith.addf %25, %26 : vector<16x384xf32>
    %cst_12 = arith.constant 0.000000e+00 : f32
    %28 = vector.broadcast %cst_12 : f32 to vector<16x384xf32>
    %29 = arith.cmpf oge, %27, %28 : vector<16x384xf32>
    %cst_13 = arith.constant 2.000000e-01 : f32
    %30 = vector.broadcast %cst_13 : f32 to vector<16x384xf32>
    %31 = arith.mulf %30, %27 : vector<16x384xf32>
    %32 = arith.select %29, %27, %31 : vector<16x384xi1>, vector<16x384xf32>
    %33 = arith.truncf %32 : vector<16x384xf32> to vector<16x384xbf16>
    %c0_14 = arith.constant 0 : index
    %c0_15 = arith.constant 0 : index
    %34 = vector.load %arg4[%c0_14, %c0_15] : memref<16x384xbf16, #tpu.memory_space<vmem>>, vector<16x384xbf16>
    tpu.vector_store %arg4[%c0_14, %c0_15], %33 {strides = array<i32>} : memref<16x384xbf16, #tpu.memory_space<vmem>>, vector<16x384xbf16>,
    return
  }
  func.func @transform_0(%arg0: i32) -> (i32, i32) {
    %c0_i32 = arith.constant 0 : i32
    %c0_i32_0 = arith.constant 0 : i32
    %c0_i32_1 = arith.constant 0 : i32
    return %c0_i32, %c0_i32_0 : i32, i32
  }
  func.func @transform_1(%arg0: i32) -> (i32, i32) {
    %c0_i32 = arith.constant 0 : i32
    %c0_i32_0 = arith.constant 0 : i32
    %c0_i32_1 = arith.constant 0 : i32
    return %c0_i32, %c0_i32_0 : i32, i32
  }
  func.func @transform_2(%arg0: i32) -> (i32, i32) {
    %c0_i32 = arith.constant 0 : i32
    %c0_i32_0 = arith.constant 0 : i32
    return %c0_i32, %arg0 : i32, i32
  }
  func.func @transform_3(%arg0: i32) -> (i32, i32) {
    %c0_i32 = arith.constant 0 : i32
    %c0_i32_0 = arith.constant 0 : i32
    %c0_i32_1 = arith.constant 0 : i32
    return %c0_i32, %c0_i32_0 : i32, i32
  }
}

module attributes {stable_mosaic.version = 11 : i64} {
  func.func @_conv_bn_lrelu_kernel(%arg0: i32, %arg1: memref<32x256xbf16, #tpu.memory_space<vmem>>, %arg2: memref<32x2xf32, #tpu.memory_space<vmem>>, %arg3: memref<256x128xbf16, #tpu.memory_space<vmem>>, %arg4: memref<32x128xbf16, #tpu.memory_space<vmem>>, %arg5: memref<32x2xf32, #tpu.memory_space<vmem>>) attributes {dimension_semantics = [#tpu.dimension_semantics<arbitrary>], iteration_bounds = array<i64: 1>, scalar_prefetch = 0 : i64, scratch_operands = 1 : i64, tpu.core_type = #tpu.core_type<tc>, window_params = [{pipeline_mode = #tpu.pipeline_mode<synchronous>, transform_indices = @transform_0, window_bounds = array<i64: 32, 256>}, {pipeline_mode = #tpu.pipeline_mode<synchronous>, transform_indices = @transform_1, window_bounds = array<i64: 32, 2>}, {transform_indices = @transform_2, window_bounds = array<i64: 256, 128>}, {pipeline_mode = #tpu.pipeline_mode<synchronous>, transform_indices = @transform_3, window_bounds = array<i64: 32, 128>}]} {
    %c0 = arith.constant 0 : index
    %c0_0 = arith.constant 0 : index
    %0 = vector.load %arg1[%c0, %c0_0] : memref<32x256xbf16, #tpu.memory_space<vmem>>, vector<32x256xbf16>
    %c0_1 = arith.constant 0 : index
    %c0_2 = arith.constant 0 : index
    %1 = vector.load %arg3[%c0_1, %c0_2] : memref<256x128xbf16, #tpu.memory_space<vmem>>, vector<256x128xbf16>
    %cst = arith.constant dense<0.000000e+00> : vector<32x128xf32>
    %2 = tpu.matmul %0, %1, %cst {dimension_numbers = #tpu.dot_dimension_numbers<[1], [0], [0], [1], [0, 0, 1, 1], [], []>} : vector<32x256xbf16>, vector<256x128xbf16>, vector<32x128xf32> -> vector<32x128xf32>
    %cst_3 = arith.constant dense<0.000000e+00> : vector<32xf32>
    %3 = vector.multi_reduction <add>, %2, %cst_3 [1] : vector<32x128xf32> to vector<32xf32>
    %4 = vector.shape_cast %3 : vector<32xf32> to vector<32x1xf32>
    %5 = arith.mulf %2, %2 : vector<32x128xf32>
    %cst_4 = arith.constant dense<0.000000e+00> : vector<32xf32>
    %6 = vector.multi_reduction <add>, %5, %cst_4 [1] : vector<32x128xf32> to vector<32xf32>
    %7 = vector.shape_cast %6 : vector<32xf32> to vector<32x1xf32>
    %cst_5 = arith.constant 0.013888889 : f32
    %8 = vector.broadcast %cst_5 : f32 to vector<32x1xf32>
    %9 = arith.mulf %4, %8 : vector<32x1xf32>
    %cst_6 = arith.constant 0.013888889 : f32
    %10 = vector.broadcast %cst_6 : f32 to vector<32x1xf32>
    %11 = arith.mulf %7, %10 : vector<32x1xf32>
    %12 = arith.mulf %9, %9 : vector<32x1xf32>
    %13 = arith.subf %11, %12 : vector<32x1xf32>
    %cst_7 = arith.constant 0.000000e+00 : f32
    %14 = vector.broadcast %cst_7 : f32 to vector<32x1xf32>
    %15 = arith.maximumf %13, %14 : vector<32x1xf32>
    %c0_8 = arith.constant 0 : index
    %c0_9 = arith.constant 0 : index
    %16 = vector.load %arg2[%c0_8, %c0_9] : memref<32x2xf32, #tpu.memory_space<vmem>>, vector<32x1xf32>
    %cst_10 = arith.constant 9.99999974E-6 : f32
    %17 = vector.broadcast %cst_10 : f32 to vector<32x1xf32>
    %18 = arith.addf %15, %17 : vector<32x1xf32>
    %19 = math.rsqrt %18 : vector<32x1xf32>
    %20 = arith.mulf %16, %19 : vector<32x1xf32>
    %c0_11 = arith.constant 0 : index
    %c1 = arith.constant 1 : index
    %21 = vector.load %arg2[%c0_11, %c1] : memref<32x2xf32, #tpu.memory_space<vmem>>, vector<32x1xf32>
    %22 = arith.mulf %9, %20 : vector<32x1xf32>
    %23 = arith.subf %21, %22 : vector<32x1xf32>
    %24 = vector.broadcast %20 : vector<32x1xf32> to vector<32x128xf32>
    %25 = arith.mulf %2, %24 : vector<32x128xf32>
    %26 = vector.broadcast %23 : vector<32x1xf32> to vector<32x128xf32>
    %27 = arith.addf %25, %26 : vector<32x128xf32>
    %cst_12 = arith.constant 0.000000e+00 : f32
    %28 = vector.broadcast %cst_12 : f32 to vector<32x128xf32>
    %29 = arith.cmpf oge, %27, %28 : vector<32x128xf32>
    %cst_13 = arith.constant 2.000000e-01 : f32
    %30 = vector.broadcast %cst_13 : f32 to vector<32x128xf32>
    %31 = arith.mulf %30, %27 : vector<32x128xf32>
    %32 = arith.select %29, %27, %31 : vector<32x128xi1>, vector<32x128xf32>
    %33 = arith.truncf %32 : vector<32x128xf32> to vector<32x128xbf16>
    %c0_14 = arith.constant 0 : index
    %c0_15 = arith.constant 0 : index
    %34 = vector.load %arg4[%c0_14, %c0_15] : memref<32x128xbf16, #tpu.memory_space<vmem>>, vector<32x128xbf16>
    tpu.vector_store %arg4[%c0_14, %c0_15], %33 {strides = array<i32>} : memref<32x128xbf16, #tpu.memory_space<vmem>>, vector<32x128xbf16>,
    return
  }
  func.func @transform_0(%arg0: i32) -> (i32, i32) {
    %c0_i32 = arith.constant 0 : i32
    %c0_i32_0 = arith.constant 0 : i32
    %c0_i32_1 = arith.constant 0 : i32
    return %c0_i32, %c0_i32_0 : i32, i32
  }
  func.func @transform_1(%arg0: i32) -> (i32, i32) {
    %c0_i32 = arith.constant 0 : i32
    %c0_i32_0 = arith.constant 0 : i32
    %c0_i32_1 = arith.constant 0 : i32
    return %c0_i32, %c0_i32_0 : i32, i32
  }
  func.func @transform_2(%arg0: i32) -> (i32, i32) {
    %c0_i32 = arith.constant 0 : i32
    %c0_i32_0 = arith.constant 0 : i32
    return %c0_i32, %arg0 : i32, i32
  }
  func.func @transform_3(%arg0: i32) -> (i32, i32) {
    %c0_i32 = arith.constant 0 : i32
    %c0_i32_0 = arith.constant 0 : i32
    %c0_i32_1 = arith.constant 0 : i32
    return %c0_i32, %c0_i32_0 : i32, i32
  }
}

module attributes {stable_mosaic.version = 11 : i64} {
  func.func @_conv_bn_lrelu_kernel(%arg0: i32, %arg1: memref<48x288xbf16, #tpu.memory_space<vmem>>, %arg2: memref<48x2xf32, #tpu.memory_space<vmem>>, %arg3: memref<288x128xbf16, #tpu.memory_space<vmem>>, %arg4: memref<48x128xbf16, #tpu.memory_space<vmem>>, %arg5: memref<48x2xf32, #tpu.memory_space<vmem>>) attributes {dimension_semantics = [#tpu.dimension_semantics<arbitrary>], iteration_bounds = array<i64: 1>, scalar_prefetch = 0 : i64, scratch_operands = 1 : i64, tpu.core_type = #tpu.core_type<tc>, window_params = [{pipeline_mode = #tpu.pipeline_mode<synchronous>, transform_indices = @transform_0, window_bounds = array<i64: 48, 288>}, {pipeline_mode = #tpu.pipeline_mode<synchronous>, transform_indices = @transform_1, window_bounds = array<i64: 48, 2>}, {transform_indices = @transform_2, window_bounds = array<i64: 288, 128>}, {pipeline_mode = #tpu.pipeline_mode<synchronous>, transform_indices = @transform_3, window_bounds = array<i64: 48, 128>}]} {
    %c0 = arith.constant 0 : index
    %c0_0 = arith.constant 0 : index
    %0 = vector.load %arg1[%c0, %c0_0] : memref<48x288xbf16, #tpu.memory_space<vmem>>, vector<48x288xbf16>
    %c0_1 = arith.constant 0 : index
    %c0_2 = arith.constant 0 : index
    %1 = vector.load %arg3[%c0_1, %c0_2] : memref<288x128xbf16, #tpu.memory_space<vmem>>, vector<288x128xbf16>
    %cst = arith.constant dense<0.000000e+00> : vector<48x128xf32>
    %2 = tpu.matmul %0, %1, %cst {dimension_numbers = #tpu.dot_dimension_numbers<[1], [0], [0], [1], [0, 0, 1, 1], [], []>} : vector<48x288xbf16>, vector<288x128xbf16>, vector<48x128xf32> -> vector<48x128xf32>
    %cst_3 = arith.constant dense<0.000000e+00> : vector<48xf32>
    %3 = vector.multi_reduction <add>, %2, %cst_3 [1] : vector<48x128xf32> to vector<48xf32>
    %4 = vector.shape_cast %3 : vector<48xf32> to vector<48x1xf32>
    %5 = arith.mulf %2, %2 : vector<48x128xf32>
    %cst_4 = arith.constant dense<0.000000e+00> : vector<48xf32>
    %6 = vector.multi_reduction <add>, %5, %cst_4 [1] : vector<48x128xf32> to vector<48xf32>
    %7 = vector.shape_cast %6 : vector<48xf32> to vector<48x1xf32>
    %cst_5 = arith.constant 3.125000e-02 : f32
    %8 = vector.broadcast %cst_5 : f32 to vector<48x1xf32>
    %9 = arith.mulf %4, %8 : vector<48x1xf32>
    %cst_6 = arith.constant 3.125000e-02 : f32
    %10 = vector.broadcast %cst_6 : f32 to vector<48x1xf32>
    %11 = arith.mulf %7, %10 : vector<48x1xf32>
    %12 = arith.mulf %9, %9 : vector<48x1xf32>
    %13 = arith.subf %11, %12 : vector<48x1xf32>
    %cst_7 = arith.constant 0.000000e+00 : f32
    %14 = vector.broadcast %cst_7 : f32 to vector<48x1xf32>
    %15 = arith.maximumf %13, %14 : vector<48x1xf32>
    %c0_8 = arith.constant 0 : index
    %c0_9 = arith.constant 0 : index
    %16 = vector.load %arg2[%c0_8, %c0_9] : memref<48x2xf32, #tpu.memory_space<vmem>>, vector<48x1xf32>
    %cst_10 = arith.constant 9.99999974E-6 : f32
    %17 = vector.broadcast %cst_10 : f32 to vector<48x1xf32>
    %18 = arith.addf %15, %17 : vector<48x1xf32>
    %19 = math.rsqrt %18 : vector<48x1xf32>
    %20 = arith.mulf %16, %19 : vector<48x1xf32>
    %c0_11 = arith.constant 0 : index
    %c1 = arith.constant 1 : index
    %21 = vector.load %arg2[%c0_11, %c1] : memref<48x2xf32, #tpu.memory_space<vmem>>, vector<48x1xf32>
    %22 = arith.mulf %9, %20 : vector<48x1xf32>
    %23 = arith.subf %21, %22 : vector<48x1xf32>
    %24 = vector.broadcast %20 : vector<48x1xf32> to vector<48x128xf32>
    %25 = arith.mulf %2, %24 : vector<48x128xf32>
    %26 = vector.broadcast %23 : vector<48x1xf32> to vector<48x128xf32>
    %27 = arith.addf %25, %26 : vector<48x128xf32>
    %cst_12 = arith.constant 0.000000e+00 : f32
    %28 = vector.broadcast %cst_12 : f32 to vector<48x128xf32>
    %29 = arith.cmpf oge, %27, %28 : vector<48x128xf32>
    %cst_13 = arith.constant 2.000000e-01 : f32
    %30 = vector.broadcast %cst_13 : f32 to vector<48x128xf32>
    %31 = arith.mulf %30, %27 : vector<48x128xf32>
    %32 = arith.select %29, %27, %31 : vector<48x128xi1>, vector<48x128xf32>
    %33 = arith.truncf %32 : vector<48x128xf32> to vector<48x128xbf16>
    %c0_14 = arith.constant 0 : index
    %c0_15 = arith.constant 0 : index
    %34 = vector.load %arg4[%c0_14, %c0_15] : memref<48x128xbf16, #tpu.memory_space<vmem>>, vector<48x128xbf16>
    tpu.vector_store %arg4[%c0_14, %c0_15], %33 {strides = array<i32>} : memref<48x128xbf16, #tpu.memory_space<vmem>>, vector<48x128xbf16>,
    return
  }
  func.func @transform_0(%arg0: i32) -> (i32, i32) {
    %c0_i32 = arith.constant 0 : i32
    %c0_i32_0 = arith.constant 0 : i32
    %c0_i32_1 = arith.constant 0 : i32
    return %c0_i32, %c0_i32_0 : i32, i32
  }
  func.func @transform_1(%arg0: i32) -> (i32, i32) {
    %c0_i32 = arith.constant 0 : i32
    %c0_i32_0 = arith.constant 0 : i32
    %c0_i32_1 = arith.constant 0 : i32
    return %c0_i32, %c0_i32_0 : i32, i32
  }
  func.func @transform_2(%arg0: i32) -> (i32, i32) {
    %c0_i32 = arith.constant 0 : i32
    %c0_i32_0 = arith.constant 0 : i32
    return %c0_i32, %arg0 : i32, i32
  }
  func.func @transform_3(%arg0: i32) -> (i32, i32) {
    %c0_i32 = arith.constant 0 : i32
    %c0_i32_0 = arith.constant 0 : i32
    %c0_i32_1 = arith.constant 0 : i32
    return %c0_i32, %c0_i32_0 : i32, i32
  }
}

module attributes {stable_mosaic.version = 11 : i64} {
  func.func @_head_kernel(%arg0: i32, %arg1: memref<2x768xbf16, #tpu.memory_space<vmem>>, %arg2: memref<768x8xbf16, #tpu.memory_space<vmem>>, %arg3: memref<1x7xf32, #tpu.memory_space<vmem>>, %arg4: memref<2x1xf32, #tpu.memory_space<vmem>>, %arg5: memref<2x7xf32, #tpu.memory_space<vmem>>) attributes {dimension_semantics = [#tpu.dimension_semantics<arbitrary>], iteration_bounds = array<i64: 1>, scalar_prefetch = 0 : i64, scratch_operands = 0 : i64, tpu.core_type = #tpu.core_type<tc>, window_params = [{pipeline_mode = #tpu.pipeline_mode<synchronous>, transform_indices = @transform_0, window_bounds = array<i64: 2, 768>}, {pipeline_mode = #tpu.pipeline_mode<synchronous>, transform_indices = @transform_1, window_bounds = array<i64: 768, 8>}, {pipeline_mode = #tpu.pipeline_mode<synchronous>, transform_indices = @transform_2, window_bounds = array<i64: 1, 7>}, {pipeline_mode = #tpu.pipeline_mode<synchronous>, transform_indices = @transform_3, window_bounds = array<i64: 2, 1>}, {pipeline_mode = #tpu.pipeline_mode<synchronous>, transform_indices = @transform_4, window_bounds = array<i64: 2, 7>}]} {
    %c0 = arith.constant 0 : index
    %c0_0 = arith.constant 0 : index
    %0 = vector.load %arg1[%c0, %c0_0] : memref<2x768xbf16, #tpu.memory_space<vmem>>, vector<2x768xbf16>
    %c0_1 = arith.constant 0 : index
    %c0_2 = arith.constant 0 : index
    %1 = vector.load %arg2[%c0_1, %c0_2] : memref<768x8xbf16, #tpu.memory_space<vmem>>, vector<768x8xbf16>
    %cst = arith.constant dense<0.000000e+00> : vector<2x8xf32>
    %2 = tpu.matmul %0, %1, %cst {dimension_numbers = #tpu.dot_dimension_numbers<[1], [0], [0], [1], [0, 0, 1, 1], [], []>} : vector<2x768xbf16>, vector<768x8xbf16>, vector<2x8xf32> -> vector<2x8xf32>
    %3 = vector.extract_strided_slice %2 {offsets = [0, 0], sizes = [2, 1], strides = [1, 1]} : vector<2x8xf32> to vector<2x1xf32>
    %4 = arith.negf %3 : vector<2x1xf32>
    %5 = math.exp %4 : vector<2x1xf32>
    %cst_3 = arith.constant 1.000000e+00 : f32
    %6 = vector.broadcast %cst_3 : f32 to vector<2x1xf32>
    %7 = arith.addf %6, %5 : vector<2x1xf32>
    %8 = arith.divf %6, %7 : vector<2x1xf32>
    %c0_4 = arith.constant 0 : index
    %c0_5 = arith.constant 0 : index
    %9 = vector.load %arg4[%c0_4, %c0_5] : memref<2x1xf32, #tpu.memory_space<vmem>>, vector<2x1xf32>
    tpu.vector_store %arg4[%c0_4, %c0_5], %8 {strides = array<i32>} : memref<2x1xf32, #tpu.memory_space<vmem>>, vector<2x1xf32>,
    %10 = vector.extract_strided_slice %2 {offsets = [0, 1], sizes = [2, 7], strides = [1, 1]} : vector<2x8xf32> to vector<2x7xf32>
    %c0_6 = arith.constant 0 : index
    %c0_7 = arith.constant 0 : index
    %11 = vector.load %arg3[%c0_6, %c0_7] : memref<1x7xf32, #tpu.memory_space<vmem>>, vector<1x7xf32>
    %12 = vector.broadcast %11 : vector<1x7xf32> to vector<2x7xf32>
    %13 = arith.addf %10, %12 : vector<2x7xf32>
    %c0_8 = arith.constant 0 : index
    %c0_9 = arith.constant 0 : index
    %14 = vector.load %arg5[%c0_8, %c0_9] : memref<2x7xf32, #tpu.memory_space<vmem>>, vector<2x7xf32>
    tpu.vector_store %arg5[%c0_8, %c0_9], %13 {strides = array<i32>} : memref<2x7xf32, #tpu.memory_space<vmem>>, vector<2x7xf32>,
    return
  }
  func.func @transform_0(%arg0: i32) -> (i32, i32) {
    %c0_i32 = arith.constant 0 : i32
    %c0_i32_0 = arith.constant 0 : i32
    %c0_i32_1 = arith.constant 0 : i32
    return %c0_i32, %c0_i32_0 : i32, i32
  }
  func.func @transform_1(%arg0: i32) -> (i32, i32) {
    %c0_i32 = arith.constant 0 : i32
    %c0_i32_0 = arith.constant 0 : i32
    %c0_i32_1 = arith.constant 0 : i32
    return %c0_i32, %c0_i32_0 : i32, i32
  }
  func.func @transform_2(%arg0: i32) -> (i32, i32) {
    %c0_i32 = arith.constant 0 : i32
    %c0_i32_0 = arith.constant 0 : i32
    %c0_i32_1 = arith.constant 0 : i32
    return %c0_i32, %c0_i32_0 : i32, i32
  }
  func.func @transform_3(%arg0: i32) -> (i32, i32) {
    %c0_i32 = arith.constant 0 : i32
    %c0_i32_0 = arith.constant 0 : i32
    %c0_i32_1 = arith.constant 0 : i32
    return %c0_i32, %c0_i32_0 : i32, i32
  }
  func.func @transform_4(%arg0: i32) -> (i32, i32) {
    %c0_i32 = arith.constant 0 : i32
    %c0_i32_0 = arith.constant 0 : i32
    %c0_i32_1 = arith.constant 0 : i32
    return %c0_i32, %c0_i32_0 : i32, i32
  }
}

</mosaic_0001>

<llo_original>
// kernel: discriminator_forward.6
$region0: #{discriminator_forward.6}
  #allocation0 [shape = 'u32[]', space=smem, size = 0x4, offset = 0x4, fixed_abs, tag = 'smem constant byte address 0x4 - core index']
  #allocation1 [shape = 'u32[144,128]{1,0:T(1,128)}', space=vmem, size = 0x12000, scoped, tag = 'internal scratch']
  #allocation2 [shape = 'f32[4,2]{1,0:T(4,128)}', space=vmem, size = 0x800, scoped, tag = 'scratch operand']
  %s0 = inlined_call_operand.vmem [shape: bf16[4,48], index: 0, kind: input, shape index: {}]
  %s1 = inlined_call_operand.vmem [shape: f32[4,2], index: 1, kind: input, shape index: {}]
  %s2 = inlined_call_operand.vmem [shape: bf16[48,5120], index: 2, kind: input, shape index: {}]
  %s3 = inlined_call_operand.vmem [shape: bf16[4,5120], index: 3, kind: output, shape index: {}]
  %s4 = sld [smem:[#allocation0]]
  $region22: #{discriminator_forward.6} parent=0
    _
  %s6 = ssub.s32 1, %s4
  %s7 = scalar_select 0, %s6, %s4
  // Predicated region
  $region2: #{discriminator_forward.6} parent=0 // pred_check
    _
  $region3: #{discriminator_forward.6} parent=0 // pred_check_branch
    %9 = sbr.rel (0) target = $region5
  $region4: #{discriminator_forward.6} parent=0 // pred_region
    _
  $region5: #{discriminator_forward.6} parent=0 // pred_fallthru
    _
  // Predicated region
  $region6: #{discriminator_forward.6} parent=0 // pred_check
    _
  $region7: #{discriminator_forward.6} parent=0 // pred_check_branch
    %11 = sbr.rel (0) target = $region9
  $region8: #{discriminator_forward.6} parent=0 // pred_region
    _
  $region9: #{discriminator_forward.6} parent=0 // pred_fallthru
    _
  // Predicated region
  $region10: #{discriminator_forward.6} parent=0 // pred_check
    _
  $region11: #{discriminator_forward.6} parent=0 // pred_check_branch
    %13 = sbr.rel (0) target = $region13
  $region12: #{discriminator_forward.6} parent=0 // pred_region
    _
  $region13: #{discriminator_forward.6} parent=0 // pred_fallthru
    _
  %v15 = vld [vmem:[%s0] sm:$0x3]
  %v16 = vld [vmem:[%s2] sm:$0xff]
  %v17 = vld [vmem:[%s2 + $0x8] sm:$0xff]
  %v18 = vld [vmem:[%s2 + $0x10] sm:$0xff]
  %v19 = vld [vmem:[%s2 + $0x18] sm:$0xff]
  %v20 = vld [vmem:[%s2 + $0x20] sm:$0xff]
  %v21 = vld [vmem:[%s2 + $0x28] sm:$0xff]
  %v22 = vld [vmem:[%s2 + $0x30] sm:$0xff]
  %v23 = vld [vmem:[%s2 + $0x38] sm:$0xff]
  %v24 = vld [vmem:[%s2 + $0x40] sm:$0xff]
  %v25 = vld [vmem:[%s2 + $0x48] sm:$0xff]
  %v26 = vld [vmem:[%s2 + $0x50] sm:$0xff]
  %v27 = vld [vmem:[%s2 + $0x58] sm:$0xff]
  %v28 = vld [vmem:[%s2 + $0x60] sm:$0xff]
  %v29 = vld [vmem:[%s2 + $0x68] sm:$0xff]
  %v30 = vld [vmem:[%s2 + $0x70] sm:$0xff]
  %v31 = vld [vmem:[%s2 + $0x78] sm:$0xff]
  %v32 = vld [vmem:[%s2 + $0x80] sm:$0xff]
  %v33 = vld [vmem:[%s2 + $0x88] sm:$0xff]
  %v34 = vld [vmem:[%s2 + $0x90] sm:$0xff]
  %v35 = vld [vmem:[%s2 + $0x98] sm:$0xff]
  %v36 = vld [vmem:[%s2 + $0xa0] sm:$0xff]
  %v37 = vld [vmem:[%s2 + $0xa8] sm:$0xff]
  %v38 = vld [vmem:[%s2 + $0xb0] sm:$0xff]
  %v39 = vld [vmem:[%s2 + $0xb8] sm:$0xff]
  %v40 = vld [vmem:[%s2 + $0xc0] sm:$0xff]
  %v41 = vld [vmem:[%s2 + $0xc8] sm:$0xff]
  %v42 = vld [vmem:[%s2 + $0xd0] sm:$0xff]
  %v43 = vld [vmem:[%s2 + $0xd8] sm:$0xff]
  %v44 = vld [vmem:[%s2 + $0xe0] sm:$0xff]
  %v45 = vld [vmem:[%s2 + $0xe8] sm:$0xff]
  %v46 = vld [vmem:[%s2 + $0xf0] sm:$0xff]
  %v47 = vld [vmem:[%s2 + $0xf8] sm:$0xff]
  %v48 = vld [vmem:[%s2 + $0x100] sm:$0xff]
  %v49 = vld [vmem:[%s2 + $0x108] sm:$0xff]
  %v50 = vld [vmem:[%s2 + $0x110] sm:$0xff]
  %v51 = vld [vmem:[%s2 + $0x118] sm:$0xff]
  %v52 = vld [vmem:[%s2 + $0x120] sm:$0xff]
  %v53 = vld [vmem:[%s2 + $0x128] sm:$0xff]
  %v54 = vld [vmem:[%s2 + $0x130] sm:$0xff]
  %v55 = vld [vmem:[%s2 + $0x138] sm:$0xff]
  %v56 = vld [vmem:[%s2 + $0x140] sm:$0xff]
  %v57 = vld [vmem:[%s2 + $0x148] sm:$0xff]
  %v58 = vld [vmem:[%s2 + $0x150] sm:$0xff]
  %v59 = vld [vmem:[%s2 + $0x158] sm:$0xff]
  %v60 = vld [vmem:[%s2 + $0x160] sm:$0xff]
  %v61 = vld [vmem:[%s2 + $0x168] sm:$0xff]
  %v62 = vld [vmem:[%s2 + $0x170] sm:$0xff]
  %v63 = vld [vmem:[%s2 + $0x178] sm:$0xff]
  %v64 = vld [vmem:[%s2 + $0x180] sm:$0xff]
  %v65 = vld [vmem:[%s2 + $0x188] sm:$0xff]
  %v66 = vld [vmem:[%s2 + $0x190] sm:$0xff]
  %v67 = vld [vmem:[%s2 + $0x198] sm:$0xff]
  %v68 = vld [vmem:[%s2 + $0x1a0] sm:$0xff]
  %v69 = vld [vmem:[%s2 + $0x1a8] sm:$0xff]
  %v70 = vld [vmem:[%s2 + $0x1b0] sm:$0xff]
  %v71 = vld [vmem:[%s2 + $0x1b8] sm:$0xff]
  %v72 = vld [vmem:[%s2 + $0x1c0] sm:$0xff]
  %v73 = vld [vmem:[%s2 + $0x1c8] sm:$0xff]
  %v74 = vld [vmem:[%s2 + $0x1d0] sm:$0xff]
  %v75 = vld [vmem:[%s2 + $0x1d8] sm:$0xff]
  %v76 = vld [vmem:[%s2 + $0x1e0] sm:$0xff]
  %v77 = vld [vmem:[%s2 + $0x1e8] sm:$0xff]
  %v78 = vld [vmem:[%s2 + $0x1f0] sm:$0xff]
  %v79 = vld [vmem:[%s2 + $0x1f8] sm:$0xff]
  %v80 = vld [vmem:[%s2 + $0x200] sm:$0xff]
  %v81 = vld [vmem:[%s2 + $0x208] sm:$0xff]
  %v82 = vld [vmem:[%s2 + $0x210] sm:$0xff]
  %v83 = vld [vmem:[%s2 + $0x218] sm:$0xff]
  %v84 = vld [vmem:[%s2 + $0x220] sm:$0xff]
  %v85 = vld [vmem:[%s2 + $0x228] sm:$0xff]
  %v86 = vld [vmem:[%s2 + $0x230] sm:$0xff]
  %v87 = vld [vmem:[%s2 + $0x238] sm:$0xff]
  %v88 = vld [vmem:[%s2 + $0x240] sm:$0xff]
  %v89 = vld [vmem:[%s2 + $0x248] sm:$0xff]
  %v90 = vld [vmem:[%s2 + $0x250] sm:$0xff]
  %v91 = vld [vmem:[%s2 + $0x258] sm:$0xff]
  %v92 = vld [vmem:[%s2 + $0x260] sm:$0xff]
  %v93 = vld [vmem:[%s2 + $0x268] sm:$0xff]
  %v94 = vld [vmem:[%s2 + $0x270] sm:$0xff]
  %v95 = vld [vmem:[%s2 + $0x278] sm:$0xff]
  %v96 = vld [vmem:[%s2 + $0x280] sm:$0xff]
  %v97 = vld [vmem:[%s2 + $0x288] sm:$0xff]
  %v98 = vld [vmem:[%s2 + $0x290] sm:$0xff]
  %v99 = vld [vmem:[%s2 + $0x298] sm:$0xff]
  %v100 = vld [vmem:[%s2 + $0x2a0] sm:$0xff]
  %v101 = vld [vmem:[%s2 + $0x2a8] sm:$0xff]
  %v102 = vld [vmem:[%s2 + $0x2b0] sm:$0xff]
  %v103 = vld [vmem:[%s2 + $0x2b8] sm:$0xff]
  %v104 = vld [vmem:[%s2 + $0x2c0] sm:$0xff]
  %v105 = vld [vmem:[%s2 + $0x2c8] sm:$0xff]
  %v106 = vld [vmem:[%s2 + $0x2d0] sm:$0xff]
  %v107 = vld [vmem:[%s2 + $0x2d8] sm:$0xff]
  %v108 = vld [vmem:[%s2 + $0x2e0] sm:$0xff]
  %v109 = vld [vmem:[%s2 + $0x2e8] sm:$0xff]
  %v110 = vld [vmem:[%s2 + $0x2f0] sm:$0xff]
  %v111 = vld [vmem:[%s2 + $0x2f8] sm:$0xff]
  %v112 = vld [vmem:[%s2 + $0x300] sm:$0xff]
  %v113 = vld [vmem:[%s2 + $0x308] sm:$0xff]
  %v114 = vld [vmem:[%s2 + $0x310] sm:$0xff]
  %v115 = vld [vmem:[%s2 + $0x318] sm:$0xff]
  %v116 = vld [vmem:[%s2 + $0x320] sm:$0xff]
  %v117 = vld [vmem:[%s2 + $0x328] sm:$0xff]
  %v118 = vld [vmem:[%s2 + $0x330] sm:$0xff]
  %v119 = vld [vmem:[%s2 + $0x338] sm:$0xff]
  %v120 = vld [vmem:[%s2 + $0x340] sm:$0xff]
  %v121 = vld [vmem:[%s2 + $0x348] sm:$0xff]
  %v122 = vld [vmem:[%s2 + $0x350] sm:$0xff]
  %v123 = vld [vmem:[%s2 + $0x358] sm:$0xff]
  %v124 = vld [vmem:[%s2 + $0x360] sm:$0xff]
  %v125 = vld [vmem:[%s2 + $0x368] sm:$0xff]
  %v126 = vld [vmem:[%s2 + $0x370] sm:$0xff]
  %v127 = vld [vmem:[%s2 + $0x378] sm:$0xff]
  %v128 = vld [vmem:[%s2 + $0x380] sm:$0xff]
  %v129 = vld [vmem:[%s2 + $0x388] sm:$0xff]
  %v130 = vld [vmem:[%s2 + $0x390] sm:$0xff]
  %v131 = vld [vmem:[%s2 + $0x398] sm:$0xff]
  %v132 = vld [vmem:[%s2 + $0x3a0] sm:$0xff]
  %v133 = vld [vmem:[%s2 + $0x3a8] sm:$0xff]
  %v134 = vld [vmem:[%s2 + $0x3b0] sm:$0xff]
  %v135 = vld [vmem:[%s2 + $0x3b8] sm:$0xff]
  %v256 = vunpack.c.l.b16 %v16
  %v257 = vunpack.c.h.b16 %v16
  %v258 = vunpack.c.l.b16 %v17
  %v259 = vunpack.c.h.b16 %v17
  %v260 = vunpack.c.l.b16 %v18
  %v261 = vunpack.c.h.b16 %v18
  %v262 = vunpack.c.l.b16 %v19
  %v263 = vunpack.c.h.b16 %v19
  %v264 = vunpack.c.l.b16 %v20
  %v265 = vunpack.c.h.b16 %v20
  %v266 = vunpack.c.l.b16 %v21
  %v267 = vunpack.c.h.b16 %v21
  %v268 = vunpack.c.l.b16 %v22
  %v269 = vunpack.c.h.b16 %v22
  %v270 = vunpack.c.l.b16 %v23
  %v271 = vunpack.c.h.b16 %v23
  %v272 = vunpack.c.l.b16 %v24
  %v273 = vunpack.c.h.b16 %v24
  %v274 = vunpack.c.l.b16 %v25
  %v275 = vunpack.c.h.b16 %v25
  %v276 = vunpack.c.l.b16 %v26
  %v277 = vunpack.c.h.b16 %v26
  %v278 = vunpack.c.l.b16 %v27
  %v279 = vunpack.c.h.b16 %v27
  %v280 = vunpack.c.l.b16 %v28
  %v281 = vunpack.c.h.b16 %v28
  %v282 = vunpack.c.l.b16 %v29
  %v283 = vunpack.c.h.b16 %v29
  %v284 = vunpack.c.l.b16 %v30
  %v285 = vunpack.c.h.b16 %v30
  %v286 = vunpack.c.l.b16 %v31
  %v287 = vunpack.c.h.b16 %v31
  %v288 = vunpack.c.l.b16 %v32
  %v289 = vunpack.c.h.b16 %v32
  %v290 = vunpack.c.l.b16 %v33
  %v291 = vunpack.c.h.b16 %v33
  %v292 = vunpack.c.l.b16 %v34
  %v293 = vunpack.c.h.b16 %v34
  %v294 = vunpack.c.l.b16 %v35
  %v295 = vunpack.c.h.b16 %v35
  %v296 = vunpack.c.l.b16 %v36
  %v297 = vunpack.c.h.b16 %v36
  %v298 = vunpack.c.l.b16 %v37
  %v299 = vunpack.c.h.b16 %v37
  %v300 = vunpack.c.l.b16 %v38
  %v301 = vunpack.c.h.b16 %v38
  %v302 = vunpack.c.l.b16 %v39
  %v303 = vunpack.c.h.b16 %v39
  %v304 = vunpack.c.l.b16 %v40
  %v305 = vunpack.c.h.b16 %v40
  %v306 = vunpack.c.l.b16 %v41
  %v307 = vunpack.c.h.b16 %v41
  %v308 = vunpack.c.l.b16 %v42
  %v309 = vunpack.c.h.b16 %v42
  %v310 = vunpack.c.l.b16 %v43
  %v311 = vunpack.c.h.b16 %v43
  %v312 = vunpack.c.l.b16 %v44
  %v313 = vunpack.c.h.b16 %v44
  %v314 = vunpack.c.l.b16 %v45
  %v315 = vunpack.c.h.b16 %v45
  %v316 = vunpack.c.l.b16 %v46
  %v317 = vunpack.c.h.b16 %v46
  %v318 = vunpack.c.l.b16 %v47
  %v319 = vunpack.c.h.b16 %v47
  %v320 = vunpack.c.l.b16 %v48
  %v321 = vunpack.c.h.b16 %v48
  %v322 = vunpack.c.l.b16 %v49
  %v323 = vunpack.c.h.b16 %v49
  %v324 = vunpack.c.l.b16 %v50
  %v325 = vunpack.c.h.b16 %v50
  %v326 = vunpack.c.l.b16 %v51
  %v327 = vunpack.c.h.b16 %v51
  %v328 = vunpack.c.l.b16 %v52
  %v329 = vunpack.c.h.b16 %v52
  %v330 = vunpack.c.l.b16 %v53
  %v331 = vunpack.c.h.b16 %v53
  %v332 = vunpack.c.l.b16 %v54
  %v333 = vunpack.c.h.b16 %v54
  %v334 = vunpack.c.l.b16 %v55
  %v335 = vunpack.c.h.b16 %v55
  %v336 = vunpack.c.l.b16 %v56
  %v337 = vunpack.c.h.b16 %v56
  %v338 = vunpack.c.l.b16 %v57
  %v339 = vunpack.c.h.b16 %v57
  %v340 = vunpack.c.l.b16 %v58
  %v341 = vunpack.c.h.b16 %v58
  %v342 = vunpack.c.l.b16 %v59
  %v343 = vunpack.c.h.b16 %v59
  %v344 = vunpack.c.l.b16 %v60
  %v345 = vunpack.c.h.b16 %v60
  %v346 = vunpack.c.l.b16 %v61
  %v347 = vunpack.c.h.b16 %v61
  %v348 = vunpack.c.l.b16 %v62
  %v349 = vunpack.c.h.b16 %v62
  %v350 = vunpack.c.l.b16 %v63
  %v351 = vunpack.c.h.b16 %v63
  %v352 = vunpack.c.l.b16 %v64
  %v353 = vunpack.c.h.b16 %v64
  %v354 = vunpack.c.l.b16 %v65
  %v355 = vunpack.c.h.b16 %v65
  %v356 = vunpack.c.l.b16 %v66
  %v357 = vunpack.c.h.b16 %v66
  %v358 = vunpack.c.l.b16 %v67
  %v359 = vunpack.c.h.b16 %v67
  %v360 = vunpack.c.l.b16 %v68
  %v361 = vunpack.c.h.b16 %v68
  %v362 = vunpack.c.l.b16 %v69
  %v363 = vunpack.c.h.b16 %v69
  %v364 = vunpack.c.l.b16 %v70
  %v365 = vunpack.c.h.b16 %v70
  %v366 = vunpack.c.l.b16 %v71
  %v367 = vunpack.c.h.b16 %v71
  %v368 = vunpack.c.l.b16 %v72
  %v369 = vunpack.c.h.b16 %v72
  %v370 = vunpack.c.l.b16 %v73
  %v371 = vunpack.c.h.b16 %v73
  %v372 = vunpack.c.l.b16 %v74
  %v373 = vunpack.c.h.b16 %v74
  %v374 = vunpack.c.l.b16 %v75
  %v375 = vunpack.c.h.b16 %v75
  %v376 = vunpack.c.l.b16 %v76
  %v377 = vunpack.c.h.b16 %v76
  %v378 = vunpack.c.l.b16 %v77
  %v379 = vunpack.c.h.b16 %v77
  %v380 = vunpack.c.l.b16 %v78
  %v381 = vunpack.c.h.b16 %v78
  %v382 = vunpack.c.l.b16 %v79
  %v383 = vunpack.c.h.b16 %v79
  %v384 = vunpack.c.l.b16 %v80
  %v385 = vunpack.c.h.b16 %v80
  %v386 = vunpack.c.l.b16 %v81
  %v387 = vunpack.c.h.b16 %v81
  %v388 = vunpack.c.l.b16 %v82
  %v389 = vunpack.c.h.b16 %v82
  %v390 = vunpack.c.l.b16 %v83
  %v391 = vunpack.c.h.b16 %v83
  %v392 = vunpack.c.l.b16 %v84
  %v393 = vunpack.c.h.b16 %v84
  %v394 = vunpack.c.l.b16 %v85
  %v395 = vunpack.c.h.b16 %v85
  %v396 = vunpack.c.l.b16 %v86
  %v397 = vunpack.c.h.b16 %v86
  %v398 = vunpack.c.l.b16 %v87
  %v399 = vunpack.c.h.b16 %v87
  %v400 = vunpack.c.l.b16 %v88
  %v401 = vunpack.c.h.b16 %v88
  %v402 = vunpack.c.l.b16 %v89
  %v403 = vunpack.c.h.b16 %v89
  %v404 = vunpack.c.l.b16 %v90
  %v405 = vunpack.c.h.b16 %v90
  %v406 = vunpack.c.l.b16 %v91
  %v407 = vunpack.c.h.b16 %v91
  %v408 = vunpack.c.l.b16 %v92
  %v409 = vunpack.c.h.b16 %v92
  %v410 = vunpack.c.l.b16 %v93
  %v411 = vunpack.c.h.b16 %v93
  %v412 = vunpack.c.l.b16 %v94
  %v413 = vunpack.c.h.b16 %v94
  %v414 = vunpack.c.l.b16 %v95
  %v415 = vunpack.c.h.b16 %v95
  %v416 = vunpack.c.l.b16 %v96
  %v417 = vunpack.c.h.b16 %v96
  %v418 = vunpack.c.l.b16 %v97
  %v419 = vunpack.c.h.b16 %v97
  %v420 = vunpack.c.l.b16 %v98
  %v421 = vunpack.c.h.b16 %v98
  %v422 = vunpack.c.l.b16 %v99
  %v423 = vunpack.c.h.b16 %v99
  %v424 = vunpack.c.l.b16 %v100
  %v425 = vunpack.c.h.b16 %v100
  %v426 = vunpack.c.l.b16 %v101
  %v427 = vunpack.c.h.b16 %v101
  %v428 = vunpack.c.l.b16 %v102
  %v429 = vunpack.c.h.b16 %v102
  %v430 = vunpack.c.l.b16 %v103
  %v431 = vunpack.c.h.b16 %v103
  %v432 = vunpack.c.l.b16 %v104
  %v433 = vunpack.c.h.b16 %v104
  %v434 = vunpack.c.l.b16 %v105
  %v435 = vunpack.c.h.b16 %v105
  %v436 = vunpack.c.l.b16 %v106
  %v437 = vunpack.c.h.b16 %v106
  %v438 = vunpack.c.l.b16 %v107
  %v439 = vunpack.c.h.b16 %v107
  %v440 = vunpack.c.l.b16 %v108
  %v441 = vunpack.c.h.b16 %v108
  %v442 = vunpack.c.l.b16 %v109
  %v443 = vunpack.c.h.b16 %v109
  %v444 = vunpack.c.l.b16 %v110
  %v445 = vunpack.c.h.b16 %v110
  %v446 = vunpack.c.l.b16 %v111
  %v447 = vunpack.c.h.b16 %v111
  %v448 = vunpack.c.l.b16 %v112
  %v449 = vunpack.c.h.b16 %v112
  %v450 = vunpack.c.l.b16 %v113
  %v451 = vunpack.c.h.b16 %v113
  %v452 = vunpack.c.l.b16 %v114
  %v453 = vunpack.c.h.b16 %v114
  %v454 = vunpack.c.l.b16 %v115
  %v455 = vunpack.c.h.b16 %v115
  %v456 = vunpack.c.l.b16 %v116
  %v457 = vunpack.c.h.b16 %v116
  %v458 = vunpack.c.l.b16 %v117
  %v459 = vunpack.c.h.b16 %v117
  %v460 = vunpack.c.l.b16 %v118
  %v461 = vunpack.c.h.b16 %v118
  %v462 = vunpack.c.l.b16 %v119
  %v463 = vunpack.c.h.b16 %v119
  %v464 = vunpack.c.l.b16 %v120
  %v465 = vunpack.c.h.b16 %v120
  %v466 = vunpack.c.l.b16 %v121
  %v467 = vunpack.c.h.b16 %v121
  %v468 = vunpack.c.l.b16 %v122
  %v469 = vunpack.c.h.b16 %v122
  %v470 = vunpack.c.l.b16 %v123
  %v471 = vunpack.c.h.b16 %v123
  %v472 = vunpack.c.l.b16 %v124
  %v473 = vunpack.c.h.b16 %v124
  %v474 = vunpack.c.l.b16 %v125
  %v475 = vunpack.c.h.b16 %v125
  %v476 = vunpack.c.l.b16 %v126
  %v477 = vunpack.c.h.b16 %v126
  %v478 = vunpack.c.l.b16 %v127
  %v479 = vunpack.c.h.b16 %v127
  %v480 = vunpack.c.l.b16 %v128
  %v481 = vunpack.c.h.b16 %v128
  %v482 = vunpack.c.l.b16 %v129
  %v483 = vunpack.c.h.b16 %v129
  %v484 = vunpack.c.l.b16 %v130
  %v485 = vunpack.c.h.b16 %v130
  %v486 = vunpack.c.l.b16 %v131
  %v487 = vunpack.c.h.b16 %v131
  %v488 = vunpack.c.l.b16 %v132
  %v489 = vunpack.c.h.b16 %v132
  %v490 = vunpack.c.l.b16 %v133
  %v491 = vunpack.c.h.b16 %v133
  %v492 = vunpack.c.l.b16 %v134
  %v493 = vunpack.c.h.b16 %v134
  %v494 = vunpack.c.l.b16 %v135
  %v495 = vunpack.c.h.b16 %v135
  %v496 = vpack.c.b16 %v296, %v256
  %v497 = vpack.c.b16 %v297, %v257
  %v498 = vpack.c.b16 %v298, %v258
  %v499 = vpack.c.b16 %v299, %v259
  %v500 = vpack.c.b16 %v300, %v260
  %v501 = vpack.c.b16 %v301, %v261
  %v502 = vpack.c.b16 %v302, %v262
  %v503 = vpack.c.b16 %v303, %v263
  %v504 = vpack.c.b16 %v304, %v264
  %v505 = vpack.c.b16 %v305, %v265
  %v506 = vpack.c.b16 %v306, %v266
  %v507 = vpack.c.b16 %v307, %v267
  %v508 = vpack.c.b16 %v308, %v268
  %v509 = vpack.c.b16 %v309, %v269
  %v510 = vpack.c.b16 %v310, %v270
  %v511 = vpack.c.b16 %v311, %v271
  %v512 = vpack.c.b16 %v312, %v272
  %v513 = vpack.c.b16 %v313, %v273
  %v514 = vpack.c.b16 %v314, %v274
  %v515 = vpack.c.b16 %v315, %v275
  %v516 = vpack.c.b16 %v316, %v276
  %v517 = vpack.c.b16 %v317, %v277
  %v518 = vpack.c.b16 %v318, %v278
  %v519 = vpack.c.b16 %v319, %v279
  %v520 = vpack.c.b16 %v320, %v280
  %v521 = vpack.c.b16 %v321, %v281
  %v522 = vpack.c.b16 %v322, %v282
  %v523 = vpack.c.b16 %v323, %v283
  %v524 = vpack.c.b16 %v324, %v284
  %v525 = vpack.c.b16 %v325, %v285
  %v526 = vpack.c.b16 %v326, %v286
  %v527 = vpack.c.b16 %v327, %v287
  %v528 = vpack.c.b16 %v328, %v288
  %v529 = vpack.c.b16 %v329, %v289
  %v530 = vpack.c.b16 %v330, %v290
  %v531 = vpack.c.b16 %v331, %v291
  %v532 = vpack.c.b16 %v332, %v292
  %v533 = vpack.c.b16 %v333, %v293
  %v534 = vpack.c.b16 %v334, %v294
  %v535 = vpack.c.b16 %v335, %v295
  %v536 = vpack.c.b16 %v376, %v336
  %v537 = vpack.c.b16 %v377, %v337
  %v538 = vpack.c.b16 %v378, %v338
  %v539 = vpack.c.b16 %v379, %v339
  %v540 = vpack.c.b16 %v380, %v340
  %v541 = vpack.c.b16 %v381, %v341
  %v542 = vpack.c.b16 %v382, %v342
  %v543 = vpack.c.b16 %v383, %v343
  %v544 = vpack.c.b16 %v384, %v344
  %v545 = vpack.c.b16 %v385, %v345
  %v546 = vpack.c.b16 %v386, %v346
  %v547 = vpack.c.b16 %v387, %v347
  %v548 = vpack.c.b16 %v388, %v348
  %v549 = vpack.c.b16 %v389, %v349
  %v550 = vpack.c.b16 %v390, %v350
  %v551 = vpack.c.b16 %v391, %v351
  %v552 = vpack.c.b16 %v392, %v352
  %v553 = vpack.c.b16 %v393, %v353
  %v554 = vpack.c.b16 %v394, %v354
  %v555 = vpack.c.b16 %v395, %v355
  %v556 = vpack.c.b16 %v396, %v356
  %v557 = vpack.c.b16 %v397, %v357
  %v558 = vpack.c.b16 %v398, %v358
  %v559 = vpack.c.b16 %v399, %v359
  %v560 = vpack.c.b16 %v400, %v360
  %v561 = vpack.c.b16 %v401, %v361
  %v562 = vpack.c.b16 %v402, %v362
  %v563 = vpack.c.b16 %v403, %v363
  %v564 = vpack.c.b16 %v404, %v364
  %v565 = vpack.c.b16 %v405, %v365
  %v566 = vpack.c.b16 %v406, %v366
  %v567 = vpack.c.b16 %v407, %v367
  %v568 = vpack.c.b16 %v408, %v368
  %v569 = vpack.c.b16 %v409, %v369
  %v570 = vpack.c.b16 %v410, %v370
  %v571 = vpack.c.b16 %v411, %v371
  %v572 = vpack.c.b16 %v412, %v372
  %v573 = vpack.c.b16 %v413, %v373
  %v574 = vpack.c.b16 %v414, %v374
  %v575 = vpack.c.b16 %v415, %v375
  %v576 = vpack.c.b16 %v456, %v416
  %v577 = vpack.c.b16 %v457, %v417
  %v578 = vpack.c.b16 %v458, %v418
  %v579 = vpack.c.b16 %v459, %v419
  %v580 = vpack.c.b16 %v460, %v420
  %v581 = vpack.c.b16 %v461, %v421
  %v582 = vpack.c.b16 %v462, %v422
  %v583 = vpack.c.b16 %v463, %v423
  %v584 = vpack.c.b16 %v464, %v424
  %v585 = vpack.c.b16 %v465, %v425
  %v586 = vpack.c.b16 %v466, %v426
  %v587 = vpack.c.b16 %v467, %v427
  %v588 = vpack.c.b16 %v468, %v428
  %v589 = vpack.c.b16 %v469, %v429
  %v590 = vpack.c.b16 %v470, %v430
  %v591 = vpack.c.b16 %v471, %v431
  %v592 = vpack.c.b16 %v472, %v432
  %v593 = vpack.c.b16 %v473, %v433
  %v594 = vpack.c.b16 %v474, %v434
  %v595 = vpack.c.b16 %v475, %v435
  %v596 = vpack.c.b16 %v476, %v436
  %v597 = vpack.c.b16 %v477, %v437
  %v598 = vpack.c.b16 %v478, %v438
  %v599 = vpack.c.b16 %v479, %v439
  %v600 = vpack.c.b16 %v480, %v440
  %v601 = vpack.c.b16 %v481, %v441
  %v602 = vpack.c.b16 %v482, %v442
  %v603 = vpack.c.b16 %v483, %v443
  %v604 = vpack.c.b16 %v484, %v444
  %v605 = vpack.c.b16 %v485, %v445
  %v606 = vpack.c.b16 %v486, %v446
  %v607 = vpack.c.b16 %v487, %v447
  %v608 = vpack.c.b16 %v488, %v448
  %v609 = vpack.c.b16 %v489, %v449
  %v610 = vpack.c.b16 %v490, %v450
  %v611 = vpack.c.b16 %v491, %v451
  %v612 = vpack.c.b16 %v492, %v452
  %v613 = vpack.c.b16 %v493, %v453
  %v614 = vpack.c.b16 %v494, %v454
  %v615 = vpack.c.b16 %v495, %v455
  %vm736 = vcmask 392192
  %v738 = vsel %vm736, %v15, 0
  %740 = vmatprep.subr.bf16.mxu0 0
  %741 = vmatpush1.bf16.msra.mxu0 0
  %742 = vmatprep.subr.bf16.mxu0 0
  %743 = vmatpush1.bf16.msra.mxu0 0
  %744 = vmatprep.subr.bf16.mxu0 0
  %745 = vmatpush1.bf16.msra.mxu0 0
  %746 = vmatprep.subr.bf16.mxu0 0
  %747 = vmatpush1.bf16.msra.mxu0 0
  %748 = vmatprep.subr.bf16.mxu0 0
  %749 = vmatpush1.bf16.msra.mxu0 0
  %750 = vmatprep.subr.bf16.mxu0 %v577
  %751 = vmatpush1.bf16.msra.mxu0 %v576
  %752 = vmatprep.subr.bf16.mxu0 %v537
  %753 = vmatpush1.bf16.msra.mxu0 %v536
  %754 = vmatprep.subr.bf16.mxu0 %v497
  %755 = vmatpush1.bf16.msra.mxu0 %v496
  %756 = vmatprep.subr.bf16.mxu0 0
  %757 = vmatpush2.bf16.msra.mxu0 0
  %758 = vmatprep.subr.bf16.mxu0 0
  %759 = vmatpush2.bf16.msra.mxu0 0
  %760 = vmatprep.subr.bf16.mxu0 0
  %761 = vmatpush2.bf16.msra.mxu0 0
  %762 = vmatprep.subr.bf16.mxu0 0
  %763 = vmatpush2.bf16.msra.mxu0 0
  %764 = vmatprep.subr.bf16.mxu0 0
  %765 = vmatpush2.bf16.msra.mxu0 0
  %766 = vmatprep.subr.bf16.mxu0 0
  %767 = vmatpush2.bf16.msra.mxu0 0
  %768 = vmatprep.subr.bf16.mxu0 0
  %769 = vmatpush2.bf16.msra.mxu0 0
  %770 = vmatprep.subr.bf16.mxu0 0
  %771 = vmatpush2.bf16.msra.mxu0 0
  %772 = vmatprep.mubr.bf16.mxu0 0
  %773 = vmatmul.mubr.bf16.gmra.mxu0 %v738
  %v774 = vpop.f32.mrf.mxu0
  %v775 = vadd.f32 0.0, %v774
  %v776 = vpop.f32.mrf.mxu0
  %v777 = vadd.f32 0.0, %v776
  %v778 = vpop.f32.mrf.mxu0
  %v779 = vpop.f32.mrf.mxu0
  %780 = vdwg.mxu0
  %781 = vmatprep.subr.bf16.mxu0 0
  %782 = vmatpush1.bf16.msra.mxu0 0
  %783 = vmatprep.subr.bf16.mxu0 0
  %784 = vmatpush1.bf16.msra.mxu0 0
  %785 = vmatprep.subr.bf16.mxu0 0
  %786 = vmatpush1.bf16.msra.mxu0 0
  %787 = vmatprep.subr.bf16.mxu0 0
  %788 = vmatpush1.bf16.msra.mxu0 0
  %789 = vmatprep.subr.bf16.mxu0 0
  %790 = vmatpush1.bf16.msra.mxu0 0
  %791 = vmatprep.subr.bf16.mxu0 %v579
  %792 = vmatpush1.bf16.msra.mxu0 %v578
  %793 = vmatprep.subr.bf16.mxu0 %v539
  %794 = vmatpush1.bf16.msra.mxu0 %v538
  %795 = vmatprep.subr.bf16.mxu0 %v499
  %796 = vmatpush1.bf16.msra.mxu0 %v498
  %797 = vmatprep.subr.bf16.mxu0 0
  %798 = vmatpush2.bf16.msra.mxu0 0
  %799 = vmatprep.subr.bf16.mxu0 0
  %800 = vmatpush2.bf16.msra.mxu0 0
  %801 = vmatprep.subr.bf16.mxu0 0
  %802 = vmatpush2.bf16.msra.mxu0 0
  %803 = vmatprep.subr.bf16.mxu0 0
  %804 = vmatpush2.bf16.msra.mxu0 0
  %805 = vmatprep.subr.bf16.mxu0 0
  %806 = vmatpush2.bf16.msra.mxu0 0
  %807 = vmatprep.subr.bf16.mxu0 0
  %808 = vmatpush2.bf16.msra.mxu0 0
  %809 = vmatprep.subr.bf16.mxu0 0
  %810 = vmatpush2.bf16.msra.mxu0 0
  %811 = vmatprep.subr.bf16.mxu0 0
  %812 = vmatpush2.bf16.msra.mxu0 0
  %813 = vmatprep.mubr.bf16.mxu0 0
  %814 = vmatmul.mubr.bf16.gmra.mxu0 %v738
  %v815 = vpop.f32.mrf.mxu0
  %v816 = vadd.f32 0.0, %v815
  %v817 = vpop.f32.mrf.mxu0
  %v818 = vadd.f32 0.0, %v817
  %v819 = vpop.f32.mrf.mxu0
  %v820 = vpop.f32.mrf.mxu0
  %821 = vdwg.mxu0
  %822 = vmatprep.subr.bf16.mxu0 0
  %823 = vmatpush1.bf16.msra.mxu0 0
  %824 = vmatprep.subr.bf16.mxu0 0
  %825 = vmatpush1.bf16.msra.mxu0 0
  %826 = vmatprep.subr.bf16.mxu0 0
  %827 = vmatpush1.bf16.msra.mxu0 0
  %828 = vmatprep.subr.bf16.mxu0 0
  %829 = vmatpush1.bf16.msra.mxu0 0
  %830 = vmatprep.subr.bf16.mxu0 0
  %831 = vmatpush1.bf16.msra.mxu0 0
  %832 = vmatprep.subr.bf16.mxu0 %v581
  %833 = vmatpush1.bf16.msra.mxu0 %v580
  %834 = vmatprep.subr.bf16.mxu0 %v541
  %835 = vmatpush1.bf16.msra.mxu0 %v540
  %836 = vmatprep.subr.bf16.mxu0 %v501
  %837 = vmatpush1.bf16.msra.mxu0 %v500
  %838 = vmatprep.subr.bf16.mxu0 0
  %839 = vmatpush2.bf16.msra.mxu0 0
  %840 = vmatprep.subr.bf16.mxu0 0
  %841 = vmatpush2.bf16.msra.mxu0 0
  %842 = vmatprep.subr.bf16.mxu0 0
  %843 = vmatpush2.bf16.msra.mxu0 0
  %844 = vmatprep.subr.bf16.mxu0 0
  %845 = vmatpush2.bf16.msra.mxu0 0
  %846 = vmatprep.subr.bf16.mxu0 0
  %847 = vmatpush2.bf16.msra.mxu0 0
  %848 = vmatprep.subr.bf16.mxu0 0
  %849 = vmatpush2.bf16.msra.mxu0 0
  %850 = vmatprep.subr.bf16.mxu0 0
  %851 = vmatpush2.bf16.msra.mxu0 0
  %852 = vmatprep.subr.bf16.mxu0 0
  %853 = vmatpush2.bf16.msra.mxu0 0
  %854 = vmatprep.mubr.bf16.mxu0 0
  %855 = vmatmul.mubr.bf16.gmra.mxu0 %v738
  %v856 = vpop.f32.mrf.mxu0
  %v857 = vadd.f32 0.0, %v856
  %v858 = vpop.f32.mrf.mxu0
  %v859 = vadd.f32 0.0, %v858
  %v860 = vpop.f32.mrf.mxu0
  %v861 = vpop.f32.mrf.mxu0
  %862 = vdwg.mxu0
  %863 = vmatprep.subr.bf16.mxu0 0
  %864 = vmatpush1.bf16.msra.mxu0 0
  %865 = vmatprep.subr.bf16.mxu0 0
  %866 = vmatpush1.bf16.msra.mxu0 0
  %867 = vmatprep.subr.bf16.mxu0 0
  %868 = vmatpush1.bf16.msra.mxu0 0
  %869 = vmatprep.subr.bf16.mxu0 0
  %870 = vmatpush1.bf16.msra.mxu0 0
  %871 = vmatprep.subr.bf16.mxu0 0
  %872 = vmatpush1.bf16.msra.mxu0 0
  %873 = vmatprep.subr.bf16.mxu0 %v583
  %874 = vmatpush1.bf16.msra.mxu0 %v582
  %875 = vmatprep.subr.bf16.mxu0 %v543
  %876 = vmatpush1.bf16.msra.mxu0 %v542
  %877 = vmatprep.subr.bf16.mxu0 %v503
  %878 = vmatpush1.bf16.msra.mxu0 %v502
  %879 = vmatprep.subr.bf16.mxu0 0
  %880 = vmatpush2.bf16.msra.mxu0 0
  %881 = vmatprep.subr.bf16.mxu0 0
  %882 = vmatpush2.bf16.msra.mxu0 0
  %883 = vmatprep.subr.bf16.mxu0 0
  %884 = vmatpush2.bf16.msra.mxu0 0
  %885 = vmatprep.subr.bf16.mxu0 0
  %886 = vmatpush2.bf16.msra.mxu0 0
  %887 = vmatprep.subr.bf16.mxu0 0
  %888 = vmatpush2.bf16.msra.mxu0 0
  %889 = vmatprep.subr.bf16.mxu0 0
  %890 = vmatpush2.bf16.msra.mxu0 0
  %891 = vmatprep.subr.bf16.mxu0 0
  %892 = vmatpush2.bf16.msra.mxu0 0
  %893 = vmatprep.subr.bf16.mxu0 0
  %894 = vmatpush2.bf16.msra.mxu0 0
  %895 = vmatprep.mubr.bf16.mxu0 0
  %896 = vmatmul.mubr.bf16.gmra.mxu0 %v738
  %v897 = vpop.f32.mrf.mxu0
  %v898 = vadd.f32 0.0, %v897
  %v899 = vpop.f32.mrf.mxu0
  %v900 = vadd.f32 0.0, %v899
  %v901 = vpop.f32.mrf.mxu0
  %v902 = vpop.f32.mrf.mxu0
  %903 = vdwg.mxu0
  %904 = vmatprep.subr.bf16.mxu0 0
  %905 = vmatpush1.bf16.msra.mxu0 0
  %906 = vmatprep.subr.bf16.mxu0 0
  %907 = vmatpush1.bf16.msra.mxu0 0
  %908 = vmatprep.subr.bf16.mxu0 0
  %909 = vmatpush1.bf16.msra.mxu0 0
  %910 = vmatprep.subr.bf16.mxu0 0
  %911 = vmatpush1.bf16.msra.mxu0 0
  %912 = vmatprep.subr.bf16.mxu0 0
  %913 = vmatpush1.bf16.msra.mxu0 0
  %914 = vmatprep.subr.bf16.mxu0 %v585
  %915 = vmatpush1.bf16.msra.mxu0 %v584
  %916 = vmatprep.subr.bf16.mxu0 %v545
  %917 = vmatpush1.bf16.msra.mxu0 %v544
  %918 = vmatprep.subr.bf16.mxu0 %v505
  %919 = vmatpush1.bf16.msra.mxu0 %v504
  %920 = vmatprep.subr.bf16.mxu0 0
  %921 = vmatpush2.bf16.msra.mxu0 0
  %922 = vmatprep.subr.bf16.mxu0 0
  %923 = vmatpush2.bf16.msra.mxu0 0
  %924 = vmatprep.subr.bf16.mxu0 0
  %925 = vmatpush2.bf16.msra.mxu0 0
  %926 = vmatprep.subr.bf16.mxu0 0
  %927 = vmatpush2.bf16.msra.mxu0 0
  %928 = vmatprep.subr.bf16.mxu0 0
  %929 = vmatpush2.bf16.msra.mxu0 0
  %930 = vmatprep.subr.bf16.mxu0 0
  %931 = vmatpush2.bf16.msra.mxu0 0
  %932 = vmatprep.subr.bf16.mxu0 0
  %933 = vmatpush2.bf16.msra.mxu0 0
  %934 = vmatprep.subr.bf16.mxu0 0
  %935 = vmatpush2.bf16.msra.mxu0 0
  %936 = vmatprep.mubr.bf16.mxu0 0
  %937 = vmatmul.mubr.bf16.gmra.mxu0 %v738
  %v938 = vpop.f32.mrf.mxu0
  %v939 = vadd.f32 0.0, %v938
  %v940 = vpop.f32.mrf.mxu0
  %v941 = vadd.f32 0.0, %v940
  %v942 = vpop.f32.mrf.mxu0
  %v943 = vpop.f32.mrf.mxu0
  %944 = vdwg.mxu0
  %945 = vmatprep.subr.bf16.mxu0 0
  %946 = vmatpush1.bf16.msra.mxu0 0
  %947 = vmatprep.subr.bf16.mxu0 0
  %948 = vmatpush1.bf16.msra.mxu0 0
  %949 = vmatprep.subr.bf16.mxu0 0
  %950 = vmatpush1.bf16.msra.mxu0 0
  %951 = vmatprep.subr.bf16.mxu0 0
  %952 = vmatpush1.bf16.msra.mxu0 0
  %953 = vmatprep.subr.bf16.mxu0 0
  %954 = vmatpush1.bf16.msra.mxu0 0
  %955 = vmatprep.subr.bf16.mxu0 %v587
  %956 = vmatpush1.bf16.msra.mxu0 %v586
  %957 = vmatprep.subr.bf16.mxu0 %v547
  %958 = vmatpush1.bf16.msra.mxu0 %v546
  %959 = vmatprep.subr.bf16.mxu0 %v507
  %960 = vmatpush1.bf16.msra.mxu0 %v506
  %961 = vmatprep.subr.bf16.mxu0 0
  %962 = vmatpush2.bf16.msra.mxu0 0
  %963 = vmatprep.subr.bf16.mxu0 0
  %964 = vmatpush2.bf16.msra.mxu0 0
  %965 = vmatprep.subr.bf16.mxu0 0
  %966 = vmatpush2.bf16.msra.mxu0 0
  %967 = vmatprep.subr.bf16.mxu0 0
  %968 = vmatpush2.bf16.msra.mxu0 0
  %969 = vmatprep.subr.bf16.mxu0 0
  %970 = vmatpush2.bf16.msra.mxu0 0
  %971 = vmatprep.subr.bf16.mxu0 0
  %972 = vmatpush2.bf16.msra.mxu0 0
  %973 = vmatprep.subr.bf16.mxu0 0
  %974 = vmatpush2.bf16.msra.mxu0 0
  %975 = vmatprep.subr.bf16.mxu0 0
  %976 = vmatpush2.bf16.msra.mxu0 0
  %977 = vmatprep.mubr.bf16.mxu0 0
  %978 = vmatmul.mubr.bf16.gmra.mxu0 %v738
  %v979 = vpop.f32.mrf.mxu0
  %v980 = vadd.f32 0.0, %v979
  %v981 = vpop.f32.mrf.mxu0
  %v982 = vadd.f32 0.0, %v981
  %v983 = vpop.f32.mrf.mxu0
  %v984 = vpop.f32.mrf.mxu0
  %985 = vdwg.mxu0
  %986 = vmatprep.subr.bf16.mxu0 0
  %987 = vmatpush1.bf16.msra.mxu0 0
  %988 = vmatprep.subr.bf16.mxu0 0
  %989 = vmatpush1.bf16.msra.mxu0 0
  %990 = vmatprep.subr.bf16.mxu0 0
  %991 = vmatpush1.bf16.msra.mxu0 0
  %992 = vmatprep.subr.bf16.mxu0 0
  %993 = vmatpush1.bf16.msra.mxu0 0
  %994 = vmatprep.subr.bf16.mxu0 0
  %995 = vmatpush1.bf16.msra.mxu0 0
  %996 = vmatprep.subr.bf16.mxu0 %v589
  %997 = vmatpush1.bf16.msra.mxu0 %v588
  %998 = vmatprep.subr.bf16.mxu0 %v549
  %999 = vmatpush1.bf16.msra.mxu0 %v548
  %1000 = vmatprep.subr.bf16.mxu0 %v509
  %1001 = vmatpush1.bf16.msra.mxu0 %v508
  %1002 = vmatprep.subr.bf16.mxu0 0
  %1003 = vmatpush2.bf16.msra.mxu0 0
  %1004 = vmatprep.subr.bf16.mxu0 0
  %1005 = vmatpush2.bf16.msra.mxu0 0
  %1006 = vmatprep.subr.bf16.mxu0 0
  %1007 = vmatpush2.bf16.msra.mxu0 0
  %1008 = vmatprep.subr.bf16.mxu0 0
  %1009 = vmatpush2.bf16.msra.mxu0 0
  %1010 = vmatprep.subr.bf16.mxu0 0
  %1011 = vmatpush2.bf16.msra.mxu0 0
  %1012 = vmatprep.subr.bf16.mxu0 0
  %1013 = vmatpush2.bf16.msra.mxu0 0
  %1014 = vmatprep.subr.bf16.mxu0 0
  %1015 = vmatpush2.bf16.msra.mxu0 0
  %1016 = vmatprep.subr.bf16.mxu0 0
  %1017 = vmatpush2.bf16.msra.mxu0 0
  %1018 = vmatprep.mubr.bf16.mxu0 0
  %1019 = vmatmul.mubr.bf16.gmra.mxu0 %v738
  %v1020 = vpop.f32.mrf.mxu0
  %v1021 = vadd.f32 0.0, %v1020
  %v1022 = vpop.f32.mrf.mxu0
  %v1023 = vadd.f32 0.0, %v1022
  %v1024 = vpop.f32.mrf.mxu0
  %v1025 = vpop.f32.mrf.mxu0
  %1026 = vdwg.mxu0
  %1027 = vmatprep.subr.bf16.mxu0 0
  %1028 = vmatpush1.bf16.msra.mxu0 0
  %1029 = vmatprep.subr.bf16.mxu0 0
  %1030 = vmatpush1.bf16.msra.mxu0 0
  %1031 = vmatprep.subr.bf16.mxu0 0
  %1032 = vmatpush1.bf16.msra.mxu0 0
  %1033 = vmatprep.subr.bf16.mxu0 0
  %1034 = vmatpush1.bf16.msra.mxu0 0
  %1035 = vmatprep.subr.bf16.mxu0 0
  %1036 = vmatpush1.bf16.msra.mxu0 0
  %1037 = vmatprep.subr.bf16.mxu0 %v591
  %1038 = vmatpush1.bf16.msra.mxu0 %v590
  %1039 = vmatprep.subr.bf16.mxu0 %v551
  %1040 = vmatpush1.bf16.msra.mxu0 %v550
  %1041 = vmatprep.subr.bf16.mxu0 %v511
  %1042 = vmatpush1.bf16.msra.mxu0 %v510
  %1043 = vmatprep.subr.bf16.mxu0 0
  %1044 = vmatpush2.bf16.msra.mxu0 0
  %1045 = vmatprep.subr.bf16.mxu0 0
  %1046 = vmatpush2.bf16.msra.mxu0 0
  %1047 = vmatprep.subr.bf16.mxu0 0
  %1048 = vmatpush2.bf16.msra.mxu0 0
  %1049 = vmatprep.subr.bf16.mxu0 0
  %1050 = vmatpush2.bf16.msra.mxu0 0
  %1051 = vmatprep.subr.bf16.mxu0 0
  %1052 = vmatpush2.bf16.msra.mxu0 0
  %1053 = vmatprep.subr.bf16.mxu0 0
  %1054 = vmatpush2.bf16.msra.mxu0 0
  %1055 = vmatprep.subr.bf16.mxu0 0
  %1056 = vmatpush2.bf16.msra.mxu0 0
  %1057 = vmatprep.subr.bf16.mxu0 0
  %1058 = vmatpush2.bf16.msra.mxu0 0
  %1059 = vmatprep.mubr.bf16.mxu0 0
  %1060 = vmatmul.mubr.bf16.gmra.mxu0 %v738
  %v1061 = vpop.f32.mrf.mxu0
  %v1062 = vadd.f32 0.0, %v1061
  %v1063 = vpop.f32.mrf.mxu0
  %v1064 = vadd.f32 0.0, %v1063
  %v1065 = vpop.f32.mrf.mxu0
  %v1066 = vpop.f32.mrf.mxu0
  %1067 = vdwg.mxu0
  %1068 = vmatprep.subr.bf16.mxu0 0
  %1069 = vmatpush1.bf16.msra.mxu0 0
  %1070 = vmatprep.subr.bf16.mxu0 0
  %1071 = vmatpush1.bf16.msra.mxu0 0
  %1072 = vmatprep.subr.bf16.mxu0 0
  %1073 = vmatpush1.bf16.msra.mxu0 0
  %1074 = vmatprep.subr.bf16.mxu0 0
  %1075 = vmatpush1.bf16.msra.mxu0 0
  %1076 = vmatprep.subr.bf16.mxu0 0
  %1077 = vmatpush1.bf16.msra.mxu0 0
  %1078 = vmatprep.subr.bf16.mxu0 %v593
  %1079 = vmatpush1.bf16.msra.mxu0 %v592
  %1080 = vmatprep.subr.bf16.mxu0 %v553
  %1081 = vmatpush1.bf16.msra.mxu0 %v552
  %1082 = vmatprep.subr.bf16.mxu0 %v513
  %1083 = vmatpush1.bf16.msra.mxu0 %v512
  %1084 = vmatprep.subr.bf16.mxu0 0
  %1085 = vmatpush2.bf16.msra.mxu0 0
  %1086 = vmatprep.subr.bf16.mxu0 0
  %1087 = vmatpush2.bf16.msra.mxu0 0
  %1088 = vmatprep.subr.bf16.mxu0 0
  %1089 = vmatpush2.bf16.msra.mxu0 0
  %1090 = vmatprep.subr.bf16.mxu0 0
  %1091 = vmatpush2.bf16.msra.mxu0 0
  %1092 = vmatprep.subr.bf16.mxu0 0
  %1093 = vmatpush2.bf16.msra.mxu0 0
  %1094 = vmatprep.subr.bf16.mxu0 0
  %1095 = vmatpush2.bf16.msra.mxu0 0
  %1096 = vmatprep.subr.bf16.mxu0 0
  %1097 = vmatpush2.bf16.msra.mxu0 0
  %1098 = vmatprep.subr.bf16.mxu0 0
  %1099 = vmatpush2.bf16.msra.mxu0 0
  %1100 = vmatprep.mubr.bf16.mxu0 0
  %1101 = vmatmul.mubr.bf16.gmra.mxu0 %v738
  %v1102 = vpop.f32.mrf.mxu0
  %v1103 = vadd.f32 0.0, %v1102
  %v1104 = vpop.f32.mrf.mxu0
  %v1105 = vadd.f32 0.0, %v1104
  %v1106 = vpop.f32.mrf.mxu0
  %v1107 = vpop.f32.mrf.mxu0
  %1108 = vdwg.mxu0
  %1109 = vmatprep.subr.bf16.mxu0 0
  %1110 = vmatpush1.bf16.msra.mxu0 0
  %1111 = vmatprep.subr.bf16.mxu0 0
  %1112 = vmatpush1.bf16.msra.mxu0 0
  %1113 = vmatprep.subr.bf16.mxu0 0
  %1114 = vmatpush1.bf16.msra.mxu0 0
  %1115 = vmatprep.subr.bf16.mxu0 0
  %1116 = vmatpush1.bf16.msra.mxu0 0
  %1117 = vmatprep.subr.bf16.mxu0 0
  %1118 = vmatpush1.bf16.msra.mxu0 0
  %1119 = vmatprep.subr.bf16.mxu0 %v595
  %1120 = vmatpush1.bf16.msra.mxu0 %v594
  %1121 = vmatprep.subr.bf16.mxu0 %v555
  %1122 = vmatpush1.bf16.msra.mxu0 %v554
  %1123 = vmatprep.subr.bf16.mxu0 %v515
  %1124 = vmatpush1.bf16.msra.mxu0 %v514
  %1125 = vmatprep.subr.bf16.mxu0 0
  %1126 = vmatpush2.bf16.msra.mxu0 0
  %1127 = vmatprep.subr.bf16.mxu0 0
  %1128 = vmatpush2.bf16.msra.mxu0 0
  %1129 = vmatprep.subr.bf16.mxu0 0
  %1130 = vmatpush2.bf16.msra.mxu0 0
  %1131 = vmatprep.subr.bf16.mxu0 0
  %1132 = vmatpush2.bf16.msra.mxu0 0
  %1133 = vmatprep.subr.bf16.mxu0 0
  %1134 = vmatpush2.bf16.msra.mxu0 0
  %1135 = vmatprep.subr.bf16.mxu0 0
  %1136 = vmatpush2.bf16.msra.mxu0 0
  %1137 = vmatprep.subr.bf16.mxu0 0
  %1138 = vmatpush2.bf16.msra.mxu0 0
  %1139 = vmatprep.subr.bf16.mxu0 0
  %1140 = vmatpush2.bf16.msra.mxu0 0
  %1141 = vmatprep.mubr.bf16.mxu0 0
  %1142 = vmatmul.mubr.bf16.gmra.mxu0 %v738
  %v1143 = vpop.f32.mrf.mxu0
  %v1144 = vadd.f32 0.0, %v1143
  %v1145 = vpop.f32.mrf.mxu0
  %v1146 = vadd.f32 0.0, %v1145
  %v1147 = vpop.f32.mrf.mxu0
  %v1148 = vpop.f32.mrf.mxu0
  %1149 = vdwg.mxu0
  %1150 = vmatprep.subr.bf16.mxu0 0
  %1151 = vmatpush1.bf16.msra.mxu0 0
  %1152 = vmatprep.subr.bf16.mxu0 0
  %1153 = vmatpush1.bf16.msra.mxu0 0
  %1154 = vmatprep.subr.bf16.mxu0 0
  %1155 = vmatpush1.bf16.msra.mxu0 0
  %1156 = vmatprep.subr.bf16.mxu0 0
  %1157 = vmatpush1.bf16.msra.mxu0 0
  %1158 = vmatprep.subr.bf16.mxu0 0
  %1159 = vmatpush1.bf16.msra.mxu0 0
  %1160 = vmatprep.subr.bf16.mxu0 %v597
  %1161 = vmatpush1.bf16.msra.mxu0 %v596
  %1162 = vmatprep.subr.bf16.mxu0 %v557
  %1163 = vmatpush1.bf16.msra.mxu0 %v556
  %1164 = vmatprep.subr.bf16.mxu0 %v517
  %1165 = vmatpush1.bf16.msra.mxu0 %v516
  %1166 = vmatprep.subr.bf16.mxu0 0
  %1167 = vmatpush2.bf16.msra.mxu0 0
  %1168 = vmatprep.subr.bf16.mxu0 0
  %1169 = vmatpush2.bf16.msra.mxu0 0
  %1170 = vmatprep.subr.bf16.mxu0 0
  %1171 = vmatpush2.bf16.msra.mxu0 0
  %1172 = vmatprep.subr.bf16.mxu0 0
  %1173 = vmatpush2.bf16.msra.mxu0 0
  %1174 = vmatprep.subr.bf16.mxu0 0
  %1175 = vmatpush2.bf16.msra.mxu0 0
  %1176 = vmatprep.subr.bf16.mxu0 0
  %1177 = vmatpush2.bf16.msra.mxu0 0
  %1178 = vmatprep.subr.bf16.mxu0 0
  %1179 = vmatpush2.bf16.msra.mxu0 0
  %1180 = vmatprep.subr.bf16.mxu0 0
  %1181 = vmatpush2.bf16.msra.mxu0 0
  %1182 = vmatprep.mubr.bf16.mxu0 0
  %1183 = vmatmul.mubr.bf16.gmra.mxu0 %v738
  %v1184 = vpop.f32.mrf.mxu0
  %v1185 = vadd.f32 0.0, %v1184
  %v1186 = vpop.f32.mrf.mxu0
  %v1187 = vadd.f32 0.0, %v1186
  %v1188 = vpop.f32.mrf.mxu0
  %v1189 = vpop.f32.mrf.mxu0
  %1190 = vdwg.mxu0
  %1191 = vmatprep.subr.bf16.mxu0 0
  %1192 = vmatpush1.bf16.msra.mxu0 0
  %1193 = vmatprep.subr.bf16.mxu0 0
  %1194 = vmatpush1.bf16.msra.mxu0 0
  %1195 = vmatprep.subr.bf16.mxu0 0
  %1196 = vmatpush1.bf16.msra.mxu0 0
  %1197 = vmatprep.subr.bf16.mxu0 0
  %1198 = vmatpush1.bf16.msra.mxu0 0
  %1199 = vmatprep.subr.bf16.mxu0 0
  %1200 = vmatpush1.bf16.msra.mxu0 0
  %1201 = vmatprep.subr.bf16.mxu0 %v599
  %1202 = vmatpush1.bf16.msra.mxu0 %v598
  %1203 = vmatprep.subr.bf16.mxu0 %v559
  %1204 = vmatpush1.bf16.msra.mxu0 %v558
  %1205 = vmatprep.subr.bf16.mxu0 %v519
  %1206 = vmatpush1.bf16.msra.mxu0 %v518
  %1207 = vmatprep.subr.bf16.mxu0 0
  %1208 = vmatpush2.bf16.msra.mxu0 0
  %1209 = vmatprep.subr.bf16.mxu0 0
  %1210 = vmatpush2.bf16.msra.mxu0 0
  %1211 = vmatprep.subr.bf16.mxu0 0
  %1212 = vmatpush2.bf16.msra.mxu0 0
  %1213 = vmatprep.subr.bf16.mxu0 0
  %1214 = vmatpush2.bf16.msra.mxu0 0
  %1215 = vmatprep.subr.bf16.mxu0 0
  %1216 = vmatpush2.bf16.msra.mxu0 0
  %1217 = vmatprep.subr.bf16.mxu0 0
  %1218 = vmatpush2.bf16.msra.mxu0 0
  %1219 = vmatprep.subr.bf16.mxu0 0
  %1220 = vmatpush2.bf16.msra.mxu0 0
  %1221 = vmatprep.subr.bf16.mxu0 0
  %1222 = vmatpush2.bf16.msra.mxu0 0
  %1223 = vmatprep.mubr.bf16.mxu0 0
  %1224 = vmatmul.mubr.bf16.gmra.mxu0 %v738
  %v1225 = vpop.f32.mrf.mxu0
  %v1226 = vadd.f32 0.0, %v1225
  %v1227 = vpop.f32.mrf.mxu0
  %v1228 = vadd.f32 0.0, %v1227
  %v1229 = vpop.f32.mrf.mxu0
  %v1230 = vpop.f32.mrf.mxu0
  %1231 = vdwg.mxu0
  %1232 = vmatprep.subr.bf16.mxu0 0
  %1233 = vmatpush1.bf16.msra.mxu0 0
  %1234 = vmatprep.subr.bf16.mxu0 0
  %1235 = vmatpush1.bf16.msra.mxu0 0
  %1236 = vmatprep.subr.bf16.mxu0 0
  %1237 = vmatpush1.bf16.msra.mxu0 0
  %1238 = vmatprep.subr.bf16.mxu0 0
  %1239 = vmatpush1.bf16.msra.mxu0 0
  %1240 = vmatprep.subr.bf16.mxu0 0
  %1241 = vmatpush1.bf16.msra.mxu0 0
  %1242 = vmatprep.subr.bf16.mxu0 %v601
  %1243 = vmatpush1.bf16.msra.mxu0 %v600
  %1244 = vmatprep.subr.bf16.mxu0 %v561
  %1245 = vmatpush1.bf16.msra.mxu0 %v560
  %1246 = vmatprep.subr.bf16.mxu0 %v521
  %1247 = vmatpush1.bf16.msra.mxu0 %v520
  %1248 = vmatprep.subr.bf16.mxu0 0
  %1249 = vmatpush2.bf16.msra.mxu0 0
  %1250 = vmatprep.subr.bf16.mxu0 0
  %1251 = vmatpush2.bf16.msra.mxu0 0
  %1252 = vmatprep.subr.bf16.mxu0 0
  %1253 = vmatpush2.bf16.msra.mxu0 0
  %1254 = vmatprep.subr.bf16.mxu0 0
  %1255 = vmatpush2.bf16.msra.mxu0 0
  %1256 = vmatprep.subr.bf16.mxu0 0
  %1257 = vmatpush2.bf16.msra.mxu0 0
  %1258 = vmatprep.subr.bf16.mxu0 0
  %1259 = vmatpush2.bf16.msra.mxu0 0
  %1260 = vmatprep.subr.bf16.mxu0 0
  %1261 = vmatpush2.bf16.msra.mxu0 0
  %1262 = vmatprep.subr.bf16.mxu0 0
  %1263 = vmatpush2.bf16.msra.mxu0 0
  %1264 = vmatprep.mubr.bf16.mxu0 0
  %1265 = vmatmul.mubr.bf16.gmra.mxu0 %v738
  %v1266 = vpop.f32.mrf.mxu0
  %v1267 = vadd.f32 0.0, %v1266
  %v1268 = vpop.f32.mrf.mxu0
  %v1269 = vadd.f32 0.0, %v1268
  %v1270 = vpop.f32.mrf.mxu0
  %v1271 = vpop.f32.mrf.mxu0
  %1272 = vdwg.mxu0
  %1273 = vmatprep.subr.bf16.mxu0 0
  %1274 = vmatpush1.bf16.msra.mxu0 0
  %1275 = vmatprep.subr.bf16.mxu0 0
  %1276 = vmatpush1.bf16.msra.mxu0 0
  %1277 = vmatprep.subr.bf16.mxu0 0
  %1278 = vmatpush1.bf16.msra.mxu0 0
  %1279 = vmatprep.subr.bf16.mxu0 0
  %1280 = vmatpush1.bf16.msra.mxu0 0
  %1281 = vmatprep.subr.bf16.mxu0 0
  %1282 = vmatpush1.bf16.msra.mxu0 0
  %1283 = vmatprep.subr.bf16.mxu0 %v603
  %1284 = vmatpush1.bf16.msra.mxu0 %v602
  %1285 = vmatprep.subr.bf16.mxu0 %v563
  %1286 = vmatpush1.bf16.msra.mxu0 %v562
  %1287 = vmatprep.subr.bf16.mxu0 %v523
  %1288 = vmatpush1.bf16.msra.mxu0 %v522
  %1289 = vmatprep.subr.bf16.mxu0 0
  %1290 = vmatpush2.bf16.msra.mxu0 0
  %1291 = vmatprep.subr.bf16.mxu0 0
  %1292 = vmatpush2.bf16.msra.mxu0 0
  %1293 = vmatprep.subr.bf16.mxu0 0
  %1294 = vmatpush2.bf16.msra.mxu0 0
  %1295 = vmatprep.subr.bf16.mxu0 0
  %1296 = vmatpush2.bf16.msra.mxu0 0
  %1297 = vmatprep.subr.bf16.mxu0 0
  %1298 = vmatpush2.bf16.msra.mxu0 0
  %1299 = vmatprep.subr.bf16.mxu0 0
  %1300 = vmatpush2.bf16.msra.mxu0 0
  %1301 = vmatprep.subr.bf16.mxu0 0
  %1302 = vmatpush2.bf16.msra.mxu0 0
  %1303 = vmatprep.subr.bf16.mxu0 0
  %1304 = vmatpush2.bf16.msra.mxu0 0
  %1305 = vmatprep.mubr.bf16.mxu0 0
  %1306 = vmatmul.mubr.bf16.gmra.mxu0 %v738
  %v1307 = vpop.f32.mrf.mxu0
  %v1308 = vadd.f32 0.0, %v1307
  %v1309 = vpop.f32.mrf.mxu0
  %v1310 = vadd.f32 0.0, %v1309
  %v1311 = vpop.f32.mrf.mxu0
  %v1312 = vpop.f32.mrf.mxu0
  %1313 = vdwg.mxu0
  %1314 = vmatprep.subr.bf16.mxu0 0
  %1315 = vmatpush1.bf16.msra.mxu0 0
  %1316 = vmatprep.subr.bf16.mxu0 0
  %1317 = vmatpush1.bf16.msra.mxu0 0
  %1318 = vmatprep.subr.bf16.mxu0 0
  %1319 = vmatpush1.bf16.msra.mxu0 0
  %1320 = vmatprep.subr.bf16.mxu0 0
  %1321 = vmatpush1.bf16.msra.mxu0 0
  %1322 = vmatprep.subr.bf16.mxu0 0
  %1323 = vmatpush1.bf16.msra.mxu0 0
  %1324 = vmatprep.subr.bf16.mxu0 %v605
  %1325 = vmatpush1.bf16.msra.mxu0 %v604
  %1326 = vmatprep.subr.bf16.mxu0 %v565
  %1327 = vmatpush1.bf16.msra.mxu0 %v564
  %1328 = vmatprep.subr.bf16.mxu0 %v525
  %1329 = vmatpush1.bf16.msra.mxu0 %v524
  %1330 = vmatprep.subr.bf16.mxu0 0
  %1331 = vmatpush2.bf16.msra.mxu0 0
  %1332 = vmatprep.subr.bf16.mxu0 0
  %1333 = vmatpush2.bf16.msra.mxu0 0
  %1334 = vmatprep.subr.bf16.mxu0 0
  %1335 = vmatpush2.bf16.msra.mxu0 0
  %1336 = vmatprep.subr.bf16.mxu0 0
  %1337 = vmatpush2.bf16.msra.mxu0 0
  %1338 = vmatprep.subr.bf16.mxu0 0
  %1339 = vmatpush2.bf16.msra.mxu0 0
  %1340 = vmatprep.subr.bf16.mxu0 0
  %1341 = vmatpush2.bf16.msra.mxu0 0
  %1342 = vmatprep.subr.bf16.mxu0 0
  %1343 = vmatpush2.bf16.msra.mxu0 0
  %1344 = vmatprep.subr.bf16.mxu0 0
  %1345 = vmatpush2.bf16.msra.mxu0 0
  %1346 = vmatprep.mubr.bf16.mxu0 0
  %1347 = vmatmul.mubr.bf16.gmra.mxu0 %v738
  %v1348 = vpop.f32.mrf.mxu0
  %v1349 = vadd.f32 0.0, %v1348
  %v1350 = vpop.f32.mrf.mxu0
  %v1351 = vadd.f32 0.0, %v1350
  %v1352 = vpop.f32.mrf.mxu0
  %v1353 = vpop.f32.mrf.mxu0
  %1354 = vdwg.mxu0
  %1355 = vmatprep.subr.bf16.mxu0 0
  %1356 = vmatpush1.bf16.msra.mxu0 0
  %1357 = vmatprep.subr.bf16.mxu0 0
  %1358 = vmatpush1.bf16.msra.mxu0 0
  %1359 = vmatprep.subr.bf16.mxu0 0
  %1360 = vmatpush1.bf16.msra.mxu0 0
  %1361 = vmatprep.subr.bf16.mxu0 0
  %1362 = vmatpush1.bf16.msra.mxu0 0
  %1363 = vmatprep.subr.bf16.mxu0 0
  %1364 = vmatpush1.bf16.msra.mxu0 0
  %1365 = vmatprep.subr.bf16.mxu0 %v607
  %1366 = vmatpush1.bf16.msra.mxu0 %v606
  %1367 = vmatprep.subr.bf16.mxu0 %v567
  %1368 = vmatpush1.bf16.msra.mxu0 %v566
  %1369 = vmatprep.subr.bf16.mxu0 %v527
  %1370 = vmatpush1.bf16.msra.mxu0 %v526
  %1371 = vmatprep.subr.bf16.mxu0 0
  %1372 = vmatpush2.bf16.msra.mxu0 0
  %1373 = vmatprep.subr.bf16.mxu0 0
  %1374 = vmatpush2.bf16.msra.mxu0 0
  %1375 = vmatprep.subr.bf16.mxu0 0
  %1376 = vmatpush2.bf16.msra.mxu0 0
  %1377 = vmatprep.subr.bf16.mxu0 0
  %1378 = vmatpush2.bf16.msra.mxu0 0
  %1379 = vmatprep.subr.bf16.mxu0 0
  %1380 = vmatpush2.bf16.msra.mxu0 0
  %1381 = vmatprep.subr.bf16.mxu0 0
  %1382 = vmatpush2.bf16.msra.mxu0 0
  %1383 = vmatprep.subr.bf16.mxu0 0
  %1384 = vmatpush2.bf16.msra.mxu0 0
  %1385 = vmatprep.subr.bf16.mxu0 0
  %1386 = vmatpush2.bf16.msra.mxu0 0
  %1387 = vmatprep.mubr.bf16.mxu0 0
  %1388 = vmatmul.mubr.bf16.gmra.mxu0 %v738
  %v1389 = vpop.f32.mrf.mxu0
  %v1390 = vadd.f32 0.0, %v1389
  %v1391 = vpop.f32.mrf.mxu0
  %v1392 = vadd.f32 0.0, %v1391
  %v1393 = vpop.f32.mrf.mxu0
  %v1394 = vpop.f32.mrf.mxu0
  %1395 = vdwg.mxu0
  %1396 = vmatprep.subr.bf16.mxu0 0
  %1397 = vmatpush1.bf16.msra.mxu0 0
  %1398 = vmatprep.subr.bf16.mxu0 0
  %1399 = vmatpush1.bf16.msra.mxu0 0
  %1400 = vmatprep.subr.bf16.mxu0 0
  %1401 = vmatpush1.bf16.msra.mxu0 0
  %1402 = vmatprep.subr.bf16.mxu0 0
  %1403 = vmatpush1.bf16.msra.mxu0 0
  %1404 = vmatprep.subr.bf16.mxu0 0
  %1405 = vmatpush1.bf16.msra.mxu0 0
  %1406 = vmatprep.subr.bf16.mxu0 %v609
  %1407 = vmatpush1.bf16.msra.mxu0 %v608
  %1408 = vmatprep.subr.bf16.mxu0 %v569
  %1409 = vmatpush1.bf16.msra.mxu0 %v568
  %1410 = vmatprep.subr.bf16.mxu0 %v529
  %1411 = vmatpush1.bf16.msra.mxu0 %v528
  %1412 = vmatprep.subr.bf16.mxu0 0
  %1413 = vmatpush2.bf16.msra.mxu0 0
  %1414 = vmatprep.subr.bf16.mxu0 0
  %1415 = vmatpush2.bf16.msra.mxu0 0
  %1416 = vmatprep.subr.bf16.mxu0 0
  %1417 = vmatpush2.bf16.msra.mxu0 0
  %1418 = vmatprep.subr.bf16.mxu0 0
  %1419 = vmatpush2.bf16.msra.mxu0 0
  %1420 = vmatprep.subr.bf16.mxu0 0
  %1421 = vmatpush2.bf16.msra.mxu0 0
  %1422 = vmatprep.subr.bf16.mxu0 0
  %1423 = vmatpush2.bf16.msra.mxu0 0
  %1424 = vmatprep.subr.bf16.mxu0 0
  %1425 = vmatpush2.bf16.msra.mxu0 0
  %1426 = vmatprep.subr.bf16.mxu0 0
  %1427 = vmatpush2.bf16.msra.mxu0 0
  %1428 = vmatprep.mubr.bf16.mxu0 0
  %1429 = vmatmul.mubr.bf16.gmra.mxu0 %v738
  %v1430 = vpop.f32.mrf.mxu0
  %v1431 = vadd.f32 0.0, %v1430
  %v1432 = vpop.f32.mrf.mxu0
  %v1433 = vadd.f32 0.0, %v1432
  %v1434 = vpop.f32.mrf.mxu0
  %v1435 = vpop.f32.mrf.mxu0
  %1436 = vdwg.mxu0
  %1437 = vmatprep.subr.bf16.mxu0 0
  %1438 = vmatpush1.bf16.msra.mxu0 0
  %1439 = vmatprep.subr.bf16.mxu0 0
  %1440 = vmatpush1.bf16.msra.mxu0 0
  %1441 = vmatprep.subr.bf16.mxu0 0
  %1442 = vmatpush1.bf16.msra.mxu0 0
  %1443 = vmatprep.subr.bf16.mxu0 0
  %1444 = vmatpush1.bf16.msra.mxu0 0
  %1445 = vmatprep.subr.bf16.mxu0 0
  %1446 = vmatpush1.bf16.msra.mxu0 0
  %1447 = vmatprep.subr.bf16.mxu0 %v611
  %1448 = vmatpush1.bf16.msra.mxu0 %v610
  %1449 = vmatprep.subr.bf16.mxu0 %v571
  %1450 = vmatpush1.bf16.msra.mxu0 %v570
  %1451 = vmatprep.subr.bf16.mxu0 %v531
  %1452 = vmatpush1.bf16.msra.mxu0 %v530
  %1453 = vmatprep.subr.bf16.mxu0 0
  %1454 = vmatpush2.bf16.msra.mxu0 0
  %1455 = vmatprep.subr.bf16.mxu0 0
  %1456 = vmatpush2.bf16.msra.mxu0 0
  %1457 = vmatprep.subr.bf16.mxu0 0
  %1458 = vmatpush2.bf16.msra.mxu0 0
  %1459 = vmatprep.subr.bf16.mxu0 0
  %1460 = vmatpush2.bf16.msra.mxu0 0
  %1461 = vmatprep.subr.bf16.mxu0 0
  %1462 = vmatpush2.bf16.msra.mxu0 0
  %1463 = vmatprep.subr.bf16.mxu0 0
  %1464 = vmatpush2.bf16.msra.mxu0 0
  %1465 = vmatprep.subr.bf16.mxu0 0
  %1466 = vmatpush2.bf16.msra.mxu0 0
  %1467 = vmatprep.subr.bf16.mxu0 0
  %1468 = vmatpush2.bf16.msra.mxu0 0
  %1469 = vmatprep.mubr.bf16.mxu0 0
  %1470 = vmatmul.mubr.bf16.gmra.mxu0 %v738
  %v1471 = vpop.f32.mrf.mxu0
  %v1472 = vadd.f32 0.0, %v1471
  %v1473 = vpop.f32.mrf.mxu0
  %v1474 = vadd.f32 0.0, %v1473
  %v1475 = vpop.f32.mrf.mxu0
  %v1476 = vpop.f32.mrf.mxu0
  %1477 = vdwg.mxu0
  %1478 = vmatprep.subr.bf16.mxu0 0
  %1479 = vmatpush1.bf16.msra.mxu0 0
  %1480 = vmatprep.subr.bf16.mxu0 0
  %1481 = vmatpush1.bf16.msra.mxu0 0
  %1482 = vmatprep.subr.bf16.mxu0 0
  %1483 = vmatpush1.bf16.msra.mxu0 0
  %1484 = vmatprep.subr.bf16.mxu0 0
  %1485 = vmatpush1.bf16.msra.mxu0 0
  %1486 = vmatprep.subr.bf16.mxu0 0
  %1487 = vmatpush1.bf16.msra.mxu0 0
  %1488 = vmatprep.subr.bf16.mxu0 %v613
  %1489 = vmatpush1.bf16.msra.mxu0 %v612
  %1490 = vmatprep.subr.bf16.mxu0 %v573
  %1491 = vmatpush1.bf16.msra.mxu0 %v572
  %1492 = vmatprep.subr.bf16.mxu0 %v533
  %1493 = vmatpush1.bf16.msra.mxu0 %v532
  %1494 = vmatprep.subr.bf16.mxu0 0
  %1495 = vmatpush2.bf16.msra.mxu0 0
  %1496 = vmatprep.subr.bf16.mxu0 0
  %1497 = vmatpush2.bf16.msra.mxu0 0
  %1498 = vmatprep.subr.bf16.mxu0 0
  %1499 = vmatpush2.bf16.msra.mxu0 0
  %1500 = vmatprep.subr.bf16.mxu0 0
  %1501 = vmatpush2.bf16.msra.mxu0 0
  %1502 = vmatprep.subr.bf16.mxu0 0
  %1503 = vmatpush2.bf16.msra.mxu0 0
  %1504 = vmatprep.subr.bf16.mxu0 0
  %1505 = vmatpush2.bf16.msra.mxu0 0
  %1506 = vmatprep.subr.bf16.mxu0 0
  %1507 = vmatpush2.bf16.msra.mxu0 0
  %1508 = vmatprep.subr.bf16.mxu0 0
  %1509 = vmatpush2.bf16.msra.mxu0 0
  %1510 = vmatprep.mubr.bf16.mxu0 0
  %1511 = vmatmul.mubr.bf16.gmra.mxu0 %v738
  %v1512 = vpop.f32.mrf.mxu0
  %v1513 = vadd.f32 0.0, %v1512
  %v1514 = vpop.f32.mrf.mxu0
  %v1515 = vadd.f32 0.0, %v1514
  %v1516 = vpop.f32.mrf.mxu0
  %v1517 = vpop.f32.mrf.mxu0
  %1518 = vdwg.mxu0
  %1519 = vmatprep.subr.bf16.mxu0 0
  %1520 = vmatpush1.bf16.msra.mxu0 0
  %1521 = vmatprep.subr.bf16.mxu0 0
  %1522 = vmatpush1.bf16.msra.mxu0 0
  %1523 = vmatprep.subr.bf16.mxu0 0
  %1524 = vmatpush1.bf16.msra.mxu0 0
  %1525 = vmatprep.subr.bf16.mxu0 0
  %1526 = vmatpush1.bf16.msra.mxu0 0
  %1527 = vmatprep.subr.bf16.mxu0 0
  %1528 = vmatpush1.bf16.msra.mxu0 0
  %1529 = vmatprep.subr.bf16.mxu0 %v615
  %1530 = vmatpush1.bf16.msra.mxu0 %v614
  %1531 = vmatprep.subr.bf16.mxu0 %v575
  %1532 = vmatpush1.bf16.msra.mxu0 %v574
  %1533 = vmatprep.subr.bf16.mxu0 %v535
  %1534 = vmatpush1.bf16.msra.mxu0 %v534
  %1535 = vmatprep.subr.bf16.mxu0 0
  %1536 = vmatpush2.bf16.msra.mxu0 0
  %1537 = vmatprep.subr.bf16.mxu0 0
  %1538 = vmatpush2.bf16.msra.mxu0 0
  %1539 = vmatprep.subr.bf16.mxu0 0
  %1540 = vmatpush2.bf16.msra.mxu0 0
  %1541 = vmatprep.subr.bf16.mxu0 0
  %1542 = vmatpush2.bf16.msra.mxu0 0
  %1543 = vmatprep.subr.bf16.mxu0 0
  %1544 = vmatpush2.bf16.msra.mxu0 0
  %1545 = vmatprep.subr.bf16.mxu0 0
  %1546 = vmatpush2.bf16.msra.mxu0 0
  %1547 = vmatprep.subr.bf16.mxu0 0
  %1548 = vmatpush2.bf16.msra.mxu0 0
  %1549 = vmatprep.subr.bf16.mxu0 0
  %1550 = vmatpush2.bf16.msra.mxu0 0
  %1551 = vmatprep.mubr.bf16.mxu0 0
  %1552 = vmatmul.mubr.bf16.gmra.mxu0 %v738
  %v1553 = vpop.f32.mrf.mxu0
  %v1554 = vadd.f32 0.0, %v1553
  %v1555 = vpop.f32.mrf.mxu0
  %v1556 = vadd.f32 0.0, %v1555
  %v1557 = vpop.f32.mrf.mxu0
  %v1558 = vpop.f32.mrf.mxu0
  %1559 = vdwg.mxu0
  %vm1560 = vcmask 1043456
  %v1561 = vsel %vm1560, %v775, 0.0
  %v1562 = vsel %vm1560, %v777, 0.0
  %v1563 = vadd.f32 %v1561, %v1562
  %v1564 = vsel %vm1560, %v816, 0.0
  %v1565 = vadd.f32 %v1563, %v1564
  %v1566 = vsel %vm1560, %v818, 0.0
  %v1567 = vadd.f32 %v1565, %v1566
  %v1568 = vsel %vm1560, %v857, 0.0
  %v1569 = vadd.f32 %v1567, %v1568
  %v1570 = vsel %vm1560, %v859, 0.0
  %v1571 = vadd.f32 %v1569, %v1570
  %v1572 = vsel %vm1560, %v898, 0.0
  %v1573 = vadd.f32 %v1571, %v1572
  %v1574 = vsel %vm1560, %v900, 0.0
  %v1575 = vadd.f32 %v1573, %v1574
  %v1576 = vsel %vm1560, %v939, 0.0
  %v1577 = vadd.f32 %v1575, %v1576
  %v1578 = vsel %vm1560, %v941, 0.0
  %v1579 = vadd.f32 %v1577, %v1578
  %v1580 = vsel %vm1560, %v980, 0.0
  %v1581 = vadd.f32 %v1579, %v1580
  %v1582 = vsel %vm1560, %v982, 0.0
  %v1583 = vadd.f32 %v1581, %v1582
  %v1584 = vsel %vm1560, %v1021, 0.0
  %v1585 = vadd.f32 %v1583, %v1584
  %v1586 = vsel %vm1560, %v1023, 0.0
  %v1587 = vadd.f32 %v1585, %v1586
  %v1588 = vsel %vm1560, %v1062, 0.0
  %v1589 = vadd.f32 %v1587, %v1588
  %v1590 = vsel %vm1560, %v1064, 0.0
  %v1591 = vadd.f32 %v1589, %v1590
  %v1592 = vsel %vm1560, %v1103, 0.0
  %v1593 = vadd.f32 %v1591, %v1592
  %v1594 = vsel %vm1560, %v1105, 0.0
  %v1595 = vadd.f32 %v1593, %v1594
  %v1596 = vsel %vm1560, %v1144, 0.0
  %v1597 = vadd.f32 %v1595, %v1596
  %v1598 = vsel %vm1560, %v1146, 0.0
  %v1599 = vadd.f32 %v1597, %v1598
  %v1600 = vsel %vm1560, %v1185, 0.0
  %v1601 = vadd.f32 %v1599, %v1600
  %v1602 = vsel %vm1560, %v1187, 0.0
  %v1603 = vadd.f32 %v1601, %v1602
  %v1604 = vsel %vm1560, %v1226, 0.0
  %v1605 = vadd.f32 %v1603, %v1604
  %v1606 = vsel %vm1560, %v1228, 0.0
  %v1607 = vadd.f32 %v1605, %v1606
  %v1608 = vsel %vm1560, %v1267, 0.0
  %v1609 = vadd.f32 %v1607, %v1608
  %v1610 = vsel %vm1560, %v1269, 0.0
  %v1611 = vadd.f32 %v1609, %v1610
  %v1612 = vsel %vm1560, %v1308, 0.0
  %v1613 = vadd.f32 %v1611, %v1612
  %v1614 = vsel %vm1560, %v1310, 0.0
  %v1615 = vadd.f32 %v1613, %v1614
  %v1616 = vsel %vm1560, %v1349, 0.0
  %v1617 = vadd.f32 %v1615, %v1616
  %v1618 = vsel %vm1560, %v1351, 0.0
  %v1619 = vadd.f32 %v1617, %v1618
  %v1620 = vsel %vm1560, %v1390, 0.0
  %v1621 = vadd.f32 %v1619, %v1620
  %v1622 = vsel %vm1560, %v1392, 0.0
  %v1623 = vadd.f32 %v1621, %v1622
  %v1624 = vsel %vm1560, %v1431, 0.0
  %v1625 = vadd.f32 %v1623, %v1624
  %v1626 = vsel %vm1560, %v1433, 0.0
  %v1627 = vadd.f32 %v1625, %v1626
  %v1628 = vsel %vm1560, %v1472, 0.0
  %v1629 = vadd.f32 %v1627, %v1628
  %v1630 = vsel %vm1560, %v1474, 0.0
  %v1631 = vadd.f32 %v1629, %v1630
  %v1632 = vsel %vm1560, %v1513, 0.0
  %v1633 = vadd.f32 %v1631, %v1632
  %v1634 = vsel %vm1560, %v1515, 0.0
  %v1635 = vadd.f32 %v1633, %v1634
  %v1636 = vsel %vm1560, %v1554, 0.0
  %v1637 = vadd.f32 %v1635, %v1636
  %v1638 = vsel %vm1560, %v1556, 0.0
  %v1639 = vadd.f32 %v1637, %v1638
  %1640 = vadd.xlane.f32.xlu0 %v1639
  %v1641 = vpop.xlane.xlu0 %1640
  %v1642 = vmul.f32 %v775, %v775
  %v1643 = vmul.f32 %v777, %v777
  %v1644 = vmul.f32 %v816, %v816
  %v1645 = vmul.f32 %v818, %v818
  %v1646 = vmul.f32 %v857, %v857
  %v1647 = vmul.f32 %v859, %v859
  %v1648 = vmul.f32 %v898, %v898
  %v1649 = vmul.f32 %v900, %v900
  %v1650 = vmul.f32 %v939, %v939
  %v1651 = vmul.f32 %v941, %v941
  %v1652 = vmul.f32 %v980, %v980
  %v1653 = vmul.f32 %v982, %v982
  %v1654 = vmul.f32 %v1021, %v1021
  %v1655 = vmul.f32 %v1023, %v1023
  %v1656 = vmul.f32 %v1062, %v1062
  %v1657 = vmul.f32 %v1064, %v1064
  %v1658 = vmul.f32 %v1103, %v1103
  %v1659 = vmul.f32 %v1105, %v1105
  %v1660 = vmul.f32 %v1144, %v1144
  %v1661 = vmul.f32 %v1146, %v1146
  %v1662 = vmul.f32 %v1185, %v1185
  %v1663 = vmul.f32 %v1187, %v1187
  %v1664 = vmul.f32 %v1226, %v1226
  %v1665 = vmul.f32 %v1228, %v1228
  %v1666 = vmul.f32 %v1267, %v1267
  %v1667 = vmul.f32 %v1269, %v1269
  %v1668 = vmul.f32 %v1308, %v1308
  %v1669 = vmul.f32 %v1310, %v1310
  %v1670 = vmul.f32 %v1349, %v1349
  %v1671 = vmul.f32 %v1351, %v1351
  %v1672 = vmul.f32 %v1390, %v1390
  %v1673 = vmul.f32 %v1392, %v1392
  %v1674 = vmul.f32 %v1431, %v1431
  %v1675 = vmul.f32 %v1433, %v1433
  %v1676 = vmul.f32 %v1472, %v1472
  %v1677 = vmul.f32 %v1474, %v1474
  %v1678 = vmul.f32 %v1513, %v1513
  %v1679 = vmul.f32 %v1515, %v1515
  %v1680 = vmul.f32 %v1554, %v1554
  %v1681 = vmul.f32 %v1556, %v1556
  %v1682 = vsel %vm1560, %v1642, 0.0
  %v1683 = vsel %vm1560, %v1643, 0.0
  %v1684 = vadd.f32 %v1682, %v1683
  %v1685 = vsel %vm1560, %v1644, 0.0
  %v1686 = vadd.f32 %v1684, %v1685
  %v1687 = vsel %vm1560, %v1645, 0.0
  %v1688 = vadd.f32 %v1686, %v1687
  %v1689 = vsel %vm1560, %v1646, 0.0
  %v1690 = vadd.f32 %v1688, %v1689
  %v1691 = vsel %vm1560, %v1647, 0.0
  %v1692 = vadd.f32 %v1690, %v1691
  %v1693 = vsel %vm1560, %v1648, 0.0
  %v1694 = vadd.f32 %v1692, %v1693
  %v1695 = vsel %vm1560, %v1649, 0.0
  %v1696 = vadd.f32 %v1694, %v1695
  %v1697 = vsel %vm1560, %v1650, 0.0
  %v1698 = vadd.f32 %v1696, %v1697
  %v1699 = vsel %vm1560, %v1651, 0.0
  %v1700 = vadd.f32 %v1698, %v1699
  %v1701 = vsel %vm1560, %v1652, 0.0
  %v1702 = vadd.f32 %v1700, %v1701
  %v1703 = vsel %vm1560, %v1653, 0.0
  %v1704 = vadd.f32 %v1702, %v1703
  %v1705 = vsel %vm1560, %v1654, 0.0
  %v1706 = vadd.f32 %v1704, %v1705
  %v1707 = vsel %vm1560, %v1655, 0.0
  %v1708 = vadd.f32 %v1706, %v1707
  %v1709 = vsel %vm1560, %v1656, 0.0
  %v1710 = vadd.f32 %v1708, %v1709
  %v1711 = vsel %vm1560, %v1657, 0.0
  %v1712 = vadd.f32 %v1710, %v1711
  %v1713 = vsel %vm1560, %v1658, 0.0
  %v1714 = vadd.f32 %v1712, %v1713
  %v1715 = vsel %vm1560, %v1659, 0.0
  %v1716 = vadd.f32 %v1714, %v1715
  %v1717 = vsel %vm1560, %v1660, 0.0
  %v1718 = vadd.f32 %v1716, %v1717
  %v1719 = vsel %vm1560, %v1661, 0.0
  %v1720 = vadd.f32 %v1718, %v1719
  %v1721 = vsel %vm1560, %v1662, 0.0
  %v1722 = vadd.f32 %v1720, %v1721
  %v1723 = vsel %vm1560, %v1663, 0.0
  %v1724 = vadd.f32 %v1722, %v1723
  %v1725 = vsel %vm1560, %v1664, 0.0
  %v1726 = vadd.f32 %v1724, %v1725
  %v1727 = vsel %vm1560, %v1665, 0.0
  %v1728 = vadd.f32 %v1726, %v1727
  %v1729 = vsel %vm1560, %v1666, 0.0
  %v1730 = vadd.f32 %v1728, %v1729
  %v1731 = vsel %vm1560, %v1667, 0.0
  %v1732 = vadd.f32 %v1730, %v1731
  %v1733 = vsel %vm1560, %v1668, 0.0
  %v1734 = vadd.f32 %v1732, %v1733
  %v1735 = vsel %vm1560, %v1669, 0.0
  %v1736 = vadd.f32 %v1734, %v1735
  %v1737 = vsel %vm1560, %v1670, 0.0
  %v1738 = vadd.f32 %v1736, %v1737
  %v1739 = vsel %vm1560, %v1671, 0.0
  %v1740 = vadd.f32 %v1738, %v1739
  %v1741 = vsel %vm1560, %v1672, 0.0
  %v1742 = vadd.f32 %v1740, %v1741
  %v1743 = vsel %vm1560, %v1673, 0.0
  %v1744 = vadd.f32 %v1742, %v1743
  %v1745 = vsel %vm1560, %v1674, 0.0
  %v1746 = vadd.f32 %v1744, %v1745
  %v1747 = vsel %vm1560, %v1675, 0.0
  %v1748 = vadd.f32 %v1746, %v1747
  %v1749 = vsel %vm1560, %v1676, 0.0
  %v1750 = vadd.f32 %v1748, %v1749
  %v1751 = vsel %vm1560, %v1677, 0.0
  %v1752 = vadd.f32 %v1750, %v1751
  %v1753 = vsel %vm1560, %v1678, 0.0
  %v1754 = vadd.f32 %v1752, %v1753
  %v1755 = vsel %vm1560, %v1679, 0.0
  %v1756 = vadd.f32 %v1754, %v1755
  %v1757 = vsel %vm1560, %v1680, 0.0
  %v1758 = vadd.f32 %v1756, %v1757
  %v1759 = vsel %vm1560, %v1681, 0.0
  %v1760 = vadd.f32 %v1758, %v1759
  %1761 = vadd.xlane.f32.xlu0 %v1760
  %v1762 = vpop.xlane.xlu0 %1761
  %v1763 = vmul.f32 %v1641, 0.0002
  %v1764 = vmul.f32 %v1762, 0.0002
  %v1765 = vmul.f32 %v1763, %v1763
  %v1766 = vsub.f32 %v1764, %v1765
  %v1767 = vmax.f32 %v1766, 0.0
  %v1768 = vld [vmem:[%s1] sm:$0xf]
  %v1769 = vadd.f32 %v1767, 1e-05
  %v1770 = vrsqrt.pop %v1769
  %v1771 = vmul.f32 %v1768, %v1770
  %v1772 = vmul.f32 %v1763, %v1771
  %1774 = vrot.lane.b32.xlu0 %v1772, 1
  %v1775 = vpop.permute.xlu0 %1774
  %v1777 = vsub.f32 %v1768, %v1775
  %1779 = vset.pattern.permute.xlu0 0
  %1780 = vperm.xlu0 %1779, %v1771
  %v1781 = vpop.permute.xlu0 %1780
  %v1783 = vmul.f32 %v775, %v1781
  %v1784 = vmul.f32 %v777, %v1781
  %v1785 = vmul.f32 %v816, %v1781
  %v1786 = vmul.f32 %v818, %v1781
  %v1787 = vmul.f32 %v857, %v1781
  %v1788 = vmul.f32 %v859, %v1781
  %v1789 = vmul.f32 %v898, %v1781
  %v1790 = vmul.f32 %v900, %v1781
  %v1791 = vmul.f32 %v939, %v1781
  %v1792 = vmul.f32 %v941, %v1781
  %v1793 = vmul.f32 %v980, %v1781
  %v1794 = vmul.f32 %v982, %v1781
  %v1795 = vmul.f32 %v1021, %v1781
  %v1796 = vmul.f32 %v1023, %v1781
  %v1797 = vmul.f32 %v1062, %v1781
  %v1798 = vmul.f32 %v1064, %v1781
  %v1799 = vmul.f32 %v1103, %v1781
  %v1800 = vmul.f32 %v1105, %v1781
  %v1801 = vmul.f32 %v1144, %v1781
  %v1802 = vmul.f32 %v1146, %v1781
  %v1803 = vmul.f32 %v1185, %v1781
  %v1804 = vmul.f32 %v1187, %v1781
  %v1805 = vmul.f32 %v1226, %v1781
  %v1806 = vmul.f32 %v1228, %v1781
  %v1807 = vmul.f32 %v1267, %v1781
  %v1808 = vmul.f32 %v1269, %v1781
  %v1809 = vmul.f32 %v1308, %v1781
  %v1810 = vmul.f32 %v1310, %v1781
  %v1811 = vmul.f32 %v1349, %v1781
  %v1812 = vmul.f32 %v1351, %v1781
  %v1813 = vmul.f32 %v1390, %v1781
  %v1814 = vmul.f32 %v1392, %v1781
  %v1815 = vmul.f32 %v1431, %v1781
  %v1816 = vmul.f32 %v1433, %v1781
  %v1817 = vmul.f32 %v1472, %v1781
  %v1818 = vmul.f32 %v1474, %v1781
  %v1819 = vmul.f32 %v1513, %v1781
  %v1820 = vmul.f32 %v1515, %v1781
  %v1821 = vmul.f32 %v1554, %v1781
  %v1822 = vmul.f32 %v1556, %v1781
  %1824 = vset.pattern.permute.xlu0 1
  %1825 = vperm.xlu0 %1824, %v1777
  %v1826 = vpop.permute.xlu0 %1825
  %v1828 = vadd.f32 %v1783, %v1826
  %v1829 = vadd.f32 %v1784, %v1826
  %v1830 = vadd.f32 %v1785, %v1826
  %v1831 = vadd.f32 %v1786, %v1826
  %v1832 = vadd.f32 %v1787, %v1826
  %v1833 = vadd.f32 %v1788, %v1826
  %v1834 = vadd.f32 %v1789, %v1826
  %v1835 = vadd.f32 %v1790, %v1826
  %v1836 = vadd.f32 %v1791, %v1826
  %v1837 = vadd.f32 %v1792, %v1826
  %v1838 = vadd.f32 %v1793, %v1826
  %v1839 = vadd.f32 %v1794, %v1826
  %v1840 = vadd.f32 %v1795, %v1826
  %v1841 = vadd.f32 %v1796, %v1826
  %v1842 = vadd.f32 %v1797, %v1826
  %v1843 = vadd.f32 %v1798, %v1826
  %v1844 = vadd.f32 %v1799, %v1826
  %v1845 = vadd.f32 %v1800, %v1826
  %v1846 = vadd.f32 %v1801, %v1826
  %v1847 = vadd.f32 %v1802, %v1826
  %v1848 = vadd.f32 %v1803, %v1826
  %v1849 = vadd.f32 %v1804, %v1826
  %v1850 = vadd.f32 %v1805, %v1826
  %v1851 = vadd.f32 %v1806, %v1826
  %v1852 = vadd.f32 %v1807, %v1826
  %v1853 = vadd.f32 %v1808, %v1826
  %v1854 = vadd.f32 %v1809, %v1826
  %v1855 = vadd.f32 %v1810, %v1826
  %v1856 = vadd.f32 %v1811, %v1826
  %v1857 = vadd.f32 %v1812, %v1826
  %v1858 = vadd.f32 %v1813, %v1826
  %v1859 = vadd.f32 %v1814, %v1826
  %v1860 = vadd.f32 %v1815, %v1826
  %v1861 = vadd.f32 %v1816, %v1826
  %v1862 = vadd.f32 %v1817, %v1826
  %v1863 = vadd.f32 %v1818, %v1826
  %v1864 = vadd.f32 %v1819, %v1826
  %v1865 = vadd.f32 %v1820, %v1826
  %v1866 = vadd.f32 %v1821, %v1826
  %v1867 = vadd.f32 %v1822, %v1826
  %vm1868 = vcmp.ge.f32.partialorder %v1828, 0.0
  %vm1869 = vcmp.ge.f32.partialorder %v1829, 0.0
  %vm1870 = vcmp.ge.f32.partialorder %v1830, 0.0
  %vm1871 = vcmp.ge.f32.partialorder %v1831, 0.0
  %vm1872 = vcmp.ge.f32.partialorder %v1832, 0.0
  %vm1873 = vcmp.ge.f32.partialorder %v1833, 0.0
  %vm1874 = vcmp.ge.f32.partialorder %v1834, 0.0
  %vm1875 = vcmp.ge.f32.partialorder %v1835, 0.0
  %vm1876 = vcmp.ge.f32.partialorder %v1836, 0.0
  %vm1877 = vcmp.ge.f32.partialorder %v1837, 0.0
  %vm1878 = vcmp.ge.f32.partialorder %v1838, 0.0
  %vm1879 = vcmp.ge.f32.partialorder %v1839, 0.0
  %vm1880 = vcmp.ge.f32.partialorder %v1840, 0.0
  %vm1881 = vcmp.ge.f32.partialorder %v1841, 0.0
  %vm1882 = vcmp.ge.f32.partialorder %v1842, 0.0
  %vm1883 = vcmp.ge.f32.partialorder %v1843, 0.0
  %vm1884 = vcmp.ge.f32.partialorder %v1844, 0.0
  %vm1885 = vcmp.ge.f32.partialorder %v1845, 0.0
  %vm1886 = vcmp.ge.f32.partialorder %v1846, 0.0
  %vm1887 = vcmp.ge.f32.partialorder %v1847, 0.0
  %vm1888 = vcmp.ge.f32.partialorder %v1848, 0.0
  %vm1889 = vcmp.ge.f32.partialorder %v1849, 0.0
  %vm1890 = vcmp.ge.f32.partialorder %v1850, 0.0
  %vm1891 = vcmp.ge.f32.partialorder %v1851, 0.0
  %vm1892 = vcmp.ge.f32.partialorder %v1852, 0.0
  %vm1893 = vcmp.ge.f32.partialorder %v1853, 0.0
  %vm1894 = vcmp.ge.f32.partialorder %v1854, 0.0
  %vm1895 = vcmp.ge.f32.partialorder %v1855, 0.0
  %vm1896 = vcmp.ge.f32.partialorder %v1856, 0.0
  %vm1897 = vcmp.ge.f32.partialorder %v1857, 0.0
  %vm1898 = vcmp.ge.f32.partialorder %v1858, 0.0
  %vm1899 = vcmp.ge.f32.partialorder %v1859, 0.0
  %vm1900 = vcmp.ge.f32.partialorder %v1860, 0.0
  %vm1901 = vcmp.ge.f32.partialorder %v1861, 0.0
  %vm1902 = vcmp.ge.f32.partialorder %v1862, 0.0
  %vm1903 = vcmp.ge.f32.partialorder %v1863, 0.0
  %vm1904 = vcmp.ge.f32.partialorder %v1864, 0.0
  %vm1905 = vcmp.ge.f32.partialorder %v1865, 0.0
  %vm1906 = vcmp.ge.f32.partialorder %v1866, 0.0
  %vm1907 = vcmp.ge.f32.partialorder %v1867, 0.0
  %v1908 = vmul.f32 %v1828, 0.2
  %v1909 = vmul.f32 %v1829, 0.2
  %v1910 = vmul.f32 %v1830, 0.2
  %v1911 = vmul.f32 %v1831, 0.2
  %v1912 = vmul.f32 %v1832, 0.2
  %v1913 = vmul.f32 %v1833, 0.2
  %v1914 = vmul.f32 %v1834, 0.2
  %v1915 = vmul.f32 %v1835, 0.2
  %v1916 = vmul.f32 %v1836, 0.2
  %v1917 = vmul.f32 %v1837, 0.2
  %v1918 = vmul.f32 %v1838, 0.2
  %v1919 = vmul.f32 %v1839, 0.2
  %v1920 = vmul.f32 %v1840, 0.2
  %v1921 = vmul.f32 %v1841, 0.2
  %v1922 = vmul.f32 %v1842, 0.2
  %v1923 = vmul.f32 %v1843, 0.2
  %v1924 = vmul.f32 %v1844, 0.2
  %v1925 = vmul.f32 %v1845, 0.2
  %v1926 = vmul.f32 %v1846, 0.2
  %v1927 = vmul.f32 %v1847, 0.2
  %v1928 = vmul.f32 %v1848, 0.2
  %v1929 = vmul.f32 %v1849, 0.2
  %v1930 = vmul.f32 %v1850, 0.2
  %v1931 = vmul.f32 %v1851, 0.2
  %v1932 = vmul.f32 %v1852, 0.2
  %v1933 = vmul.f32 %v1853, 0.2
  %v1934 = vmul.f32 %v1854, 0.2
  %v1935 = vmul.f32 %v1855, 0.2
  %v1936 = vmul.f32 %v1856, 0.2
  %v1937 = vmul.f32 %v1857, 0.2
  %v1938 = vmul.f32 %v1858, 0.2
  %v1939 = vmul.f32 %v1859, 0.2
  %v1940 = vmul.f32 %v1860, 0.2
  %v1941 = vmul.f32 %v1861, 0.2
  %v1942 = vmul.f32 %v1862, 0.2
  %v1943 = vmul.f32 %v1863, 0.2
  %v1944 = vmul.f32 %v1864, 0.2
  %v1945 = vmul.f32 %v1865, 0.2
  %v1946 = vmul.f32 %v1866, 0.2
  %v1947 = vmul.f32 %v1867, 0.2
  %v1948 = vsel %vm1868, %v1828, %v1908
  %v1949 = vsel %vm1869, %v1829, %v1909
  %v1950 = vsel %vm1870, %v1830, %v1910
  %v1951 = vsel %vm1871, %v1831, %v1911
  %v1952 = vsel %vm1872, %v1832, %v1912
  %v1953 = vsel %vm1873, %v1833, %v1913
  %v1954 = vsel %vm1874, %v1834, %v1914
  %v1955 = vsel %vm1875, %v1835, %v1915
  %v1956 = vsel %vm1876, %v1836, %v1916
  %v1957 = vsel %vm1877, %v1837, %v1917
  %v1958 = vsel %vm1878, %v1838, %v1918
  %v1959 = vsel %vm1879, %v1839, %v1919
  %v1960 = vsel %vm1880, %v1840, %v1920
  %v1961 = vsel %vm1881, %v1841, %v1921
  %v1962 = vsel %vm1882, %v1842, %v1922
  %v1963 = vsel %vm1883, %v1843, %v1923
  %v1964 = vsel %vm1884, %v1844, %v1924
  %v1965 = vsel %vm1885, %v1845, %v1925
  %v1966 = vsel %vm1886, %v1846, %v1926
  %v1967 = vsel %vm1887, %v1847, %v1927
  %v1968 = vsel %vm1888, %v1848, %v1928
  %v1969 = vsel %vm1889, %v1849, %v1929
  %v1970 = vsel %vm1890, %v1850, %v1930
  %v1971 = vsel %vm1891, %v1851, %v1931
  %v1972 = vsel %vm1892, %v1852, %v1932
  %v1973 = vsel %vm1893, %v1853, %v1933
  %v1974 = vsel %vm1894, %v1854, %v1934
  %v1975 = vsel %vm1895, %v1855, %v1935
  %v1976 = vsel %vm1896, %v1856, %v1936
  %v1977 = vsel %vm1897, %v1857, %v1937
  %v1978 = vsel %vm1898, %v1858, %v1938
  %v1979 = vsel %vm1899, %v1859, %v1939
  %v1980 = vsel %vm1900, %v1860, %v1940
  %v1981 = vsel %vm1901, %v1861, %v1941
  %v1982 = vsel %vm1902, %v1862, %v1942
  %v1983 = vsel %vm1903, %v1863, %v1943
  %v1984 = vsel %vm1904, %v1864, %v1944
  %v1985 = vsel %vm1905, %v1865, %v1945
  %v1986 = vsel %vm1906, %v1866, %v1946
  %v1987 = vsel %vm1907, %v1867, %v1947
  %v1988 = vpack.c.bf16 %v1948, %v1948
  %v1989 = vpack.c.bf16 %v1949, %v1949
  %v1990 = vpack.c.bf16 %v1950, %v1950
  %v1991 = vpack.c.bf16 %v1951, %v1951
  %v1992 = vpack.c.bf16 %v1952, %v1952
  %v1993 = vpack.c.bf16 %v1953, %v1953
  %v1994 = vpack.c.bf16 %v1954, %v1954
  %v1995 = vpack.c.bf16 %v1955, %v1955
  %v1996 = vpack.c.bf16 %v1956, %v1956
  %v1997 = vpack.c.bf16 %v1957, %v1957
  %v1998 = vpack.c.bf16 %v1958, %v1958
  %v1999 = vpack.c.bf16 %v1959, %v1959
  %v2000 = vpack.c.bf16 %v1960, %v1960
  %v2001 = vpack.c.bf16 %v1961, %v1961
  %v2002 = vpack.c.bf16 %v1962, %v1962
  %v2003 = vpack.c.bf16 %v1963, %v1963
  %v2004 = vpack.c.bf16 %v1964, %v1964
  %v2005 = vpack.c.bf16 %v1965, %v1965
  %v2006 = vpack.c.bf16 %v1966, %v1966
  %v2007 = vpack.c.bf16 %v1967, %v1967
  %v2008 = vpack.c.bf16 %v1968, %v1968
  %v2009 = vpack.c.bf16 %v1969, %v1969
  %v2010 = vpack.c.bf16 %v1970, %v1970
  %v2011 = vpack.c.bf16 %v1971, %v1971
  %v2012 = vpack.c.bf16 %v1972, %v1972
  %v2013 = vpack.c.bf16 %v1973, %v1973
  %v2014 = vpack.c.bf16 %v1974, %v1974
  %v2015 = vpack.c.bf16 %v1975, %v1975
  %v2016 = vpack.c.bf16 %v1976, %v1976
  %v2017 = vpack.c.bf16 %v1977, %v1977
  %v2018 = vpack.c.bf16 %v1978, %v1978
  %v2019 = vpack.c.bf16 %v1979, %v1979
  %v2020 = vpack.c.bf16 %v1980, %v1980
  %v2021 = vpack.c.bf16 %v1981, %v1981
  %v2022 = vpack.c.bf16 %v1982, %v1982
  %v2023 = vpack.c.bf16 %v1983, %v1983
  %v2024 = vpack.c.bf16 %v1984, %v1984
  %v2025 = vpack.c.bf16 %v1985, %v1985
  %v2026 = vpack.c.bf16 %v1986, %v1986
  %v2027 = vpack.c.bf16 %v1987, %v1987
  %v2068 = vcombine.low %v1988, %v1989
  %v2069 = vcombine.low %v1990, %v1991
  %v2071 = vunpack.c.l.s4 1983009808
  %v2072 = vunpack.c.0.s8 %v2071
  %v2073 = vlaneseq
  %v2074 = vshrl.u32 %v2073, 7
  %v2075 = vsub.s32 %v2072, %v2074
  %v2076 = vrot.slane %v2068, %v2075
  %v2078 = vunpack.c.l.s4 1983009808
  %v2079 = vunpack.c.0.s8 %v2078
  %v2080 = vlaneseq
  %v2081 = vshrl.u32 %v2080, 7
  %v2082 = vsub.s32 %v2079, %v2081
  %v2083 = vrot.slane %v2069, %v2082
  %v2084 = vcombine.low %v2076, %v2083
  %v2085 = vcombine.low %v1992, %v1993
  %v2086 = vcombine.low %v1994, %v1995
  %v2088 = vunpack.c.l.s4 1983009808
  %v2089 = vunpack.c.0.s8 %v2088
  %v2090 = vlaneseq
  %v2091 = vshrl.u32 %v2090, 7
  %v2092 = vsub.s32 %v2089, %v2091
  %v2093 = vrot.slane %v2085, %v2092
  %v2095 = vunpack.c.l.s4 1983009808
  %v2096 = vunpack.c.0.s8 %v2095
  %v2097 = vlaneseq
  %v2098 = vshrl.u32 %v2097, 7
  %v2099 = vsub.s32 %v2096, %v2098
  %v2100 = vrot.slane %v2086, %v2099
  %v2101 = vcombine.low %v2093, %v2100
  %v2102 = vcombine.low %v1996, %v1997
  %v2103 = vcombine.low %v1998, %v1999
  %v2105 = vunpack.c.l.s4 1983009808
  %v2106 = vunpack.c.0.s8 %v2105
  %v2107 = vlaneseq
  %v2108 = vshrl.u32 %v2107, 7
  %v2109 = vsub.s32 %v2106, %v2108
  %v2110 = vrot.slane %v2102, %v2109
  %v2112 = vunpack.c.l.s4 1983009808
  %v2113 = vunpack.c.0.s8 %v2112
  %v2114 = vlaneseq
  %v2115 = vshrl.u32 %v2114, 7
  %v2116 = vsub.s32 %v2113, %v2115
  %v2117 = vrot.slane %v2103, %v2116
  %v2118 = vcombine.low %v2110, %v2117
  %v2119 = vcombine.low %v2000, %v2001
  %v2120 = vcombine.low %v2002, %v2003
  %v2122 = vunpack.c.l.s4 1983009808
  %v2123 = vunpack.c.0.s8 %v2122
  %v2124 = vlaneseq
  %v2125 = vshrl.u32 %v2124, 7
  %v2126 = vsub.s32 %v2123, %v2125
  %v2127 = vrot.slane %v2119, %v2126
  %v2129 = vunpack.c.l.s4 1983009808
  %v2130 = vunpack.c.0.s8 %v2129
  %v2131 = vlaneseq
  %v2132 = vshrl.u32 %v2131, 7
  %v2133 = vsub.s32 %v2130, %v2132
  %v2134 = vrot.slane %v2120, %v2133
  %v2135 = vcombine.low %v2127, %v2134
  %v2136 = vcombine.low %v2004, %v2005
  %v2137 = vcombine.low %v2006, %v2007
  %v2139 = vunpack.c.l.s4 1983009808
  %v2140 = vunpack.c.0.s8 %v2139
  %v2141 = vlaneseq
  %v2142 = vshrl.u32 %v2141, 7
  %v2143 = vsub.s32 %v2140, %v2142
  %v2144 = vrot.slane %v2136, %v2143
  %v2146 = vunpack.c.l.s4 1983009808
  %v2147 = vunpack.c.0.s8 %v2146
  %v2148 = vlaneseq
  %v2149 = vshrl.u32 %v2148, 7
  %v2150 = vsub.s32 %v2147, %v2149
  %v2151 = vrot.slane %v2137, %v2150
  %v2152 = vcombine.low %v2144, %v2151
  %v2153 = vcombine.low %v2008, %v2009
  %v2154 = vcombine.low %v2010, %v2011
  %v2156 = vunpack.c.l.s4 1983009808
  %v2157 = vunpack.c.0.s8 %v2156
  %v2158 = vlaneseq
  %v2159 = vshrl.u32 %v2158, 7
  %v2160 = vsub.s32 %v2157, %v2159
  %v2161 = vrot.slane %v2153, %v2160
  %v2163 = vunpack.c.l.s4 1983009808
  %v2164 = vunpack.c.0.s8 %v2163
  %v2165 = vlaneseq
  %v2166 = vshrl.u32 %v2165, 7
  %v2167 = vsub.s32 %v2164, %v2166
  %v2168 = vrot.slane %v2154, %v2167
  %v2169 = vcombine.low %v2161, %v2168
  %v2170 = vcombine.low %v2012, %v2013
  %v2171 = vcombine.low %v2014, %v2015
  %v2173 = vunpack.c.l.s4 1983009808
  %v2174 = vunpack.c.0.s8 %v2173
  %v2175 = vlaneseq
  %v2176 = vshrl.u32 %v2175, 7
  %v2177 = vsub.s32 %v2174, %v2176
  %v2178 = vrot.slane %v2170, %v2177
  %v2180 = vunpack.c.l.s4 1983009808
  %v2181 = vunpack.c.0.s8 %v2180
  %v2182 = vlaneseq
  %v2183 = vshrl.u32 %v2182, 7
  %v2184 = vsub.s32 %v2181, %v2183
  %v2185 = vrot.slane %v2171, %v2184
  %v2186 = vcombine.low %v2178, %v2185
  %v2187 = vcombine.low %v2016, %v2017
  %v2188 = vcombine.low %v2018, %v2019
  %v2190 = vunpack.c.l.s4 1983009808
  %v2191 = vunpack.c.0.s8 %v2190
  %v2192 = vlaneseq
  %v2193 = vshrl.u32 %v2192, 7
  %v2194 = vsub.s32 %v2191, %v2193
  %v2195 = vrot.slane %v2187, %v2194
  %v2197 = vunpack.c.l.s4 1983009808
  %v2198 = vunpack.c.0.s8 %v2197
  %v2199 = vlaneseq
  %v2200 = vshrl.u32 %v2199, 7
  %v2201 = vsub.s32 %v2198, %v2200
  %v2202 = vrot.slane %v2188, %v2201
  %v2203 = vcombine.low %v2195, %v2202
  %v2204 = vcombine.low %v2020, %v2021
  %v2205 = vcombine.low %v2022, %v2023
  %v2207 = vunpack.c.l.s4 1983009808
  %v2208 = vunpack.c.0.s8 %v2207
  %v2209 = vlaneseq
  %v2210 = vshrl.u32 %v2209, 7
  %v2211 = vsub.s32 %v2208, %v2210
  %v2212 = vrot.slane %v2204, %v2211
  %v2214 = vunpack.c.l.s4 1983009808
  %v2215 = vunpack.c.0.s8 %v2214
  %v2216 = vlaneseq
  %v2217 = vshrl.u32 %v2216, 7
  %v2218 = vsub.s32 %v2215, %v2217
  %v2219 = vrot.slane %v2205, %v2218
  %v2220 = vcombine.low %v2212, %v2219
  %v2221 = vcombine.low %v2024, %v2025
  %v2222 = vcombine.low %v2026, %v2027
  %v2224 = vunpack.c.l.s4 1983009808
  %v2225 = vunpack.c.0.s8 %v2224
  %v2226 = vlaneseq
  %v2227 = vshrl.u32 %v2226, 7
  %v2228 = vsub.s32 %v2225, %v2227
  %v2229 = vrot.slane %v2221, %v2228
  %v2231 = vunpack.c.l.s4 1983009808
  %v2232 = vunpack.c.0.s8 %v2231
  %v2233 = vlaneseq
  %v2234 = vshrl.u32 %v2233, 7
  %v2235 = vsub.s32 %v2232, %v2234
  %v2236 = vrot.slane %v2222, %v2235
  %v2237 = vcombine.low %v2229, %v2236
  %2248 = vst [vmem:[%s3] sm:$0xff] %v2084
  %2249 = vst [vmem:[%s3 + $0x8] sm:$0xff] %v2101
  %2250 = vst [vmem:[%s3 + $0x10] sm:$0xff] %v2118
  %2251 = vst [vmem:[%s3 + $0x18] sm:$0xff] %v2135
  %2252 = vst [vmem:[%s3 + $0x20] sm:$0xff] %v2152
  %2253 = vst [vmem:[%s3 + $0x28] sm:$0xff] %v2169
  %2254 = vst [vmem:[%s3 + $0x30] sm:$0xff] %v2186
  %2255 = vst [vmem:[%s3 + $0x38] sm:$0xff] %v2203
  %2256 = vst [vmem:[%s3 + $0x40] sm:$0xff] %v2220
  %2257 = vst [vmem:[%s3 + $0x48] sm:$0xff] %v2237
  // Predicated region
  $region14: #{discriminator_forward.6} parent=0 // pred_check
    _
  $region15: #{discriminator_forward.6} parent=0 // pred_check_branch
    %2259 = sbr.rel (0) target = $region17
  $region16: #{discriminator_forward.6} parent=0 // pred_region
    _
  $region17: #{discriminator_forward.6} parent=0 // pred_fallthru
    _
  // Predicated region
  $region18: #{discriminator_forward.6} parent=0 // pred_check
    _
  $region19: #{discriminator_forward.6} parent=0 // pred_check_branch
    %2261 = sbr.rel (0) target = $region21
  $region20: #{discriminator_forward.6} parent=0 // pred_region
    _
  $region21: #{discriminator_forward.6} parent=0 // pred_fallthru
    _

// kernel: discriminator_forward.7
$region0: #{discriminator_forward.7}
  #allocation0 [shape = 'u32[]', space=smem, size = 0x4, offset = 0x4, fixed_abs, tag = 'smem constant byte address 0x4 - core index']
  #allocation1 [shape = 'u32[144,128]{1,0:T(1,128)}', space=vmem, size = 0x12000, scoped, tag = 'internal scratch']
  #allocation2 [shape = 'f32[8,2]{1,0:T(8,128)}', space=vmem, size = 0x1000, scoped, tag = 'scratch operand']
  %s0 = inlined_call_operand.vmem [shape: bf16[8,64], index: 0, kind: input, shape index: {}]
  %s1 = inlined_call_operand.vmem [shape: f32[8,2], index: 1, kind: input, shape index: {}]
  %s2 = inlined_call_operand.vmem [shape: bf16[64,1152], index: 2, kind: input, shape index: {}]
  %s3 = inlined_call_operand.vmem [shape: bf16[8,1152], index: 3, kind: output, shape index: {}]
  %s4 = sld [smem:[#allocation0]]
  $region22: #{discriminator_forward.7} parent=0
    _
  %s6 = ssub.s32 1, %s4
  %s7 = scalar_select 0, %s6, %s4
  // Predicated region
  $region2: #{discriminator_forward.7} parent=0 // pred_check
    _
  $region3: #{discriminator_forward.7} parent=0 // pred_check_branch
    %9 = sbr.rel (0) target = $region5
  $region4: #{discriminator_forward.7} parent=0 // pred_region
    _
  $region5: #{discriminator_forward.7} parent=0 // pred_fallthru
    _
  // Predicated region
  $region6: #{discriminator_forward.7} parent=0 // pred_check
    _
  $region7: #{discriminator_forward.7} parent=0 // pred_check_branch
    %11 = sbr.rel (0) target = $region9
  $region8: #{discriminator_forward.7} parent=0 // pred_region
    _
  $region9: #{discriminator_forward.7} parent=0 // pred_fallthru
    _
  // Predicated region
  $region10: #{discriminator_forward.7} parent=0 // pred_check
    _
  $region11: #{discriminator_forward.7} parent=0 // pred_check_branch
    %13 = sbr.rel (0) target = $region13
  $region12: #{discriminator_forward.7} parent=0 // pred_region
    _
  $region13: #{discriminator_forward.7} parent=0 // pred_fallthru
    _
  %v15 = vld [vmem:[%s0] sm:$0xf]
  %v16 = vld [vmem:[%s2] sm:$0xff]
  %v17 = vld [vmem:[%s2 + $0x8] sm:$0xff]
  %v18 = vld [vmem:[%s2 + $0x10] sm:$0xff]
  %v19 = vld [vmem:[%s2 + $0x18] sm:$0xff]
  %v20 = vld [vmem:[%s2 + $0x20] sm:$0xf]
  %v21 = vld [vmem:[%s2 + $0x24] sm:$0xff]
  %v22 = vld [vmem:[%s2 + $0x2c] sm:$0xff]
  %v23 = vld [vmem:[%s2 + $0x34] sm:$0xff]
  %v24 = vld [vmem:[%s2 + $0x3c] sm:$0xff]
  %v25 = vld [vmem:[%s2 + $0x44] sm:$0xf]
  %v26 = vld [vmem:[%s2 + $0x48] sm:$0xff]
  %v27 = vld [vmem:[%s2 + $0x50] sm:$0xff]
  %v28 = vld [vmem:[%s2 + $0x58] sm:$0xff]
  %v29 = vld [vmem:[%s2 + $0x60] sm:$0xff]
  %v30 = vld [vmem:[%s2 + $0x68] sm:$0xf]
  %v31 = vld [vmem:[%s2 + $0x6c] sm:$0xff]
  %v32 = vld [vmem:[%s2 + $0x74] sm:$0xff]
  %v33 = vld [vmem:[%s2 + $0x7c] sm:$0xff]
  %v34 = vld [vmem:[%s2 + $0x84] sm:$0xff]
  %v35 = vld [vmem:[%s2 + $0x8c] sm:$0xf]
  %v36 = vld [vmem:[%s2 + $0x90] sm:$0xff]
  %v37 = vld [vmem:[%s2 + $0x98] sm:$0xff]
  %v38 = vld [vmem:[%s2 + $0xa0] sm:$0xff]
  %v39 = vld [vmem:[%s2 + $0xa8] sm:$0xff]
  %v40 = vld [vmem:[%s2 + $0xb0] sm:$0xf]
  %v41 = vld [vmem:[%s2 + $0xb4] sm:$0xff]
  %v42 = vld [vmem:[%s2 + $0xbc] sm:$0xff]
  %v43 = vld [vmem:[%s2 + $0xc4] sm:$0xff]
  %v44 = vld [vmem:[%s2 + $0xcc] sm:$0xff]
  %v45 = vld [vmem:[%s2 + $0xd4] sm:$0xf]
  %v46 = vld [vmem:[%s2 + $0xd8] sm:$0xff]
  %v47 = vld [vmem:[%s2 + $0xe0] sm:$0xff]
  %v48 = vld [vmem:[%s2 + $0xe8] sm:$0xff]
  %v49 = vld [vmem:[%s2 + $0xf0] sm:$0xff]
  %v50 = vld [vmem:[%s2 + $0xf8] sm:$0xf]
  %v51 = vld [vmem:[%s2 + $0xfc] sm:$0xff]
  %v52 = vld [vmem:[%s2 + $0x104] sm:$0xff]
  %v53 = vld [vmem:[%s2 + $0x10c] sm:$0xff]
  %v54 = vld [vmem:[%s2 + $0x114] sm:$0xff]
  %v55 = vld [vmem:[%s2 + $0x11c] sm:$0xf]
  %v96 = vunpack.c.l.b16 %v16
  %v97 = vunpack.c.h.b16 %v16
  %v98 = vunpack.c.l.b16 %v17
  %v99 = vunpack.c.h.b16 %v17
  %v100 = vunpack.c.l.b16 %v18
  %v101 = vunpack.c.h.b16 %v18
  %v102 = vunpack.c.l.b16 %v19
  %v103 = vunpack.c.h.b16 %v19
  %v104 = vunpack.c.l.b16 %v20
  %v105 = vunpack.c.l.b16 %v21
  %v106 = vunpack.c.h.b16 %v21
  %v107 = vunpack.c.l.b16 %v22
  %v108 = vunpack.c.h.b16 %v22
  %v109 = vunpack.c.l.b16 %v23
  %v110 = vunpack.c.h.b16 %v23
  %v111 = vunpack.c.l.b16 %v24
  %v112 = vunpack.c.h.b16 %v24
  %v113 = vunpack.c.l.b16 %v25
  %v114 = vunpack.c.l.b16 %v26
  %v115 = vunpack.c.h.b16 %v26
  %v116 = vunpack.c.l.b16 %v27
  %v117 = vunpack.c.h.b16 %v27
  %v118 = vunpack.c.l.b16 %v28
  %v119 = vunpack.c.h.b16 %v28
  %v120 = vunpack.c.l.b16 %v29
  %v121 = vunpack.c.h.b16 %v29
  %v122 = vunpack.c.l.b16 %v30
  %v123 = vunpack.c.l.b16 %v31
  %v124 = vunpack.c.h.b16 %v31
  %v125 = vunpack.c.l.b16 %v32
  %v126 = vunpack.c.h.b16 %v32
  %v127 = vunpack.c.l.b16 %v33
  %v128 = vunpack.c.h.b16 %v33
  %v129 = vunpack.c.l.b16 %v34
  %v130 = vunpack.c.h.b16 %v34
  %v131 = vunpack.c.l.b16 %v35
  %v132 = vunpack.c.l.b16 %v36
  %v133 = vunpack.c.h.b16 %v36
  %v134 = vunpack.c.l.b16 %v37
  %v135 = vunpack.c.h.b16 %v37
  %v136 = vunpack.c.l.b16 %v38
  %v137 = vunpack.c.h.b16 %v38
  %v138 = vunpack.c.l.b16 %v39
  %v139 = vunpack.c.h.b16 %v39
  %v140 = vunpack.c.l.b16 %v40
  %v141 = vunpack.c.l.b16 %v41
  %v142 = vunpack.c.h.b16 %v41
  %v143 = vunpack.c.l.b16 %v42
  %v144 = vunpack.c.h.b16 %v42
  %v145 = vunpack.c.l.b16 %v43
  %v146 = vunpack.c.h.b16 %v43
  %v147 = vunpack.c.l.b16 %v44
  %v148 = vunpack.c.h.b16 %v44
  %v149 = vunpack.c.l.b16 %v45
  %v150 = vunpack.c.l.b16 %v46
  %v151 = vunpack.c.h.b16 %v46
  %v152 = vunpack.c.l.b16 %v47
  %v153 = vunpack.c.h.b16 %v47
  %v154 = vunpack.c.l.b16 %v48
  %v155 = vunpack.c.h.b16 %v48
  %v156 = vunpack.c.l.b16 %v49
  %v157 = vunpack.c.h.b16 %v49
  %v158 = vunpack.c.l.b16 %v50
  %v159 = vunpack.c.l.b16 %v51
  %v160 = vunpack.c.h.b16 %v51
  %v161 = vunpack.c.l.b16 %v52
  %v162 = vunpack.c.h.b16 %v52
  %v163 = vunpack.c.l.b16 %v53
  %v164 = vunpack.c.h.b16 %v53
  %v165 = vunpack.c.l.b16 %v54
  %v166 = vunpack.c.h.b16 %v54
  %v167 = vunpack.c.l.b16 %v55
  %v168 = vpack.c.b16 %v105, %v96
  %v169 = vpack.c.b16 %v106, %v97
  %v170 = vpack.c.b16 %v107, %v98
  %v171 = vpack.c.b16 %v108, %v99
  %v172 = vpack.c.b16 %v109, %v100
  %v173 = vpack.c.b16 %v110, %v101
  %v174 = vpack.c.b16 %v111, %v102
  %v175 = vpack.c.b16 %v112, %v103
  %v176 = vpack.c.b16 %v113, %v104
  %v177 = vpack.c.b16 %v123, %v114
  %v178 = vpack.c.b16 %v124, %v115
  %v179 = vpack.c.b16 %v125, %v116
  %v180 = vpack.c.b16 %v126, %v117
  %v181 = vpack.c.b16 %v127, %v118
  %v182 = vpack.c.b16 %v128, %v119
  %v183 = vpack.c.b16 %v129, %v120
  %v184 = vpack.c.b16 %v130, %v121
  %v185 = vpack.c.b16 %v131, %v122
  %v186 = vpack.c.b16 %v141, %v132
  %v187 = vpack.c.b16 %v142, %v133
  %v188 = vpack.c.b16 %v143, %v134
  %v189 = vpack.c.b16 %v144, %v135
  %v190 = vpack.c.b16 %v145, %v136
  %v191 = vpack.c.b16 %v146, %v137
  %v192 = vpack.c.b16 %v147, %v138
  %v193 = vpack.c.b16 %v148, %v139
  %v194 = vpack.c.b16 %v149, %v140
  %v195 = vpack.c.b16 %v159, %v150
  %v196 = vpack.c.b16 %v160, %v151
  %v197 = vpack.c.b16 %v161, %v152
  %v198 = vpack.c.b16 %v162, %v153
  %v199 = vpack.c.b16 %v163, %v154
  %v200 = vpack.c.b16 %v164, %v155
  %v201 = vpack.c.b16 %v165, %v156
  %v202 = vpack.c.b16 %v166, %v157
  %v203 = vpack.c.b16 %v167, %v158
  %vm240 = vcmask 523264
  %v242 = vsel %vm240, %v15, 0
  %244 = vmatprep.subr.bf16.mxu0 0
  %245 = vmatpush1.bf16.msra.mxu0 0
  %246 = vmatprep.subr.bf16.mxu0 0
  %247 = vmatpush1.bf16.msra.mxu0 0
  %248 = vmatprep.subr.bf16.mxu0 0
  %249 = vmatpush1.bf16.msra.mxu0 0
  %250 = vmatprep.subr.bf16.mxu0 0
  %251 = vmatpush1.bf16.msra.mxu0 0
  %252 = vmatprep.subr.bf16.mxu0 %v196
  %253 = vmatpush1.bf16.msra.mxu0 %v195
  %254 = vmatprep.subr.bf16.mxu0 %v187
  %255 = vmatpush1.bf16.msra.mxu0 %v186
  %256 = vmatprep.subr.bf16.mxu0 %v178
  %257 = vmatpush1.bf16.msra.mxu0 %v177
  %258 = vmatprep.subr.bf16.mxu0 %v169
  %259 = vmatpush1.bf16.msra.mxu0 %v168
  %260 = vmatprep.subr.bf16.mxu0 0
  %261 = vmatpush2.bf16.msra.mxu0 0
  %262 = vmatprep.subr.bf16.mxu0 0
  %263 = vmatpush2.bf16.msra.mxu0 0
  %264 = vmatprep.subr.bf16.mxu0 0
  %265 = vmatpush2.bf16.msra.mxu0 0
  %266 = vmatprep.subr.bf16.mxu0 0
  %267 = vmatpush2.bf16.msra.mxu0 0
  %268 = vmatprep.subr.bf16.mxu0 0
  %269 = vmatpush2.bf16.msra.mxu0 0
  %270 = vmatprep.subr.bf16.mxu0 0
  %271 = vmatpush2.bf16.msra.mxu0 0
  %272 = vmatprep.subr.bf16.mxu0 0
  %273 = vmatpush2.bf16.msra.mxu0 0
  %274 = vmatprep.subr.bf16.mxu0 0
  %275 = vmatpush2.bf16.msra.mxu0 0
  %276 = vmatprep.mubr.bf16.mxu0 0
  %277 = vmatmul.mubr.bf16.gmra.mxu0 %v242
  %v278 = vpop.f32.mrf.mxu0
  %v279 = vadd.f32 0.0, %v278
  %v280 = vpop.f32.mrf.mxu0
  %v281 = vadd.f32 0.0, %v280
  %v282 = vpop.f32.mrf.mxu0
  %v283 = vpop.f32.mrf.mxu0
  %284 = vdwg.mxu0
  %285 = vmatprep.subr.bf16.mxu0 0
  %286 = vmatpush1.bf16.msra.mxu0 0
  %287 = vmatprep.subr.bf16.mxu0 0
  %288 = vmatpush1.bf16.msra.mxu0 0
  %289 = vmatprep.subr.bf16.mxu0 0
  %290 = vmatpush1.bf16.msra.mxu0 0
  %291 = vmatprep.subr.bf16.mxu0 0
  %292 = vmatpush1.bf16.msra.mxu0 0
  %293 = vmatprep.subr.bf16.mxu0 %v198
  %294 = vmatpush1.bf16.msra.mxu0 %v197
  %295 = vmatprep.subr.bf16.mxu0 %v189
  %296 = vmatpush1.bf16.msra.mxu0 %v188
  %297 = vmatprep.subr.bf16.mxu0 %v180
  %298 = vmatpush1.bf16.msra.mxu0 %v179
  %299 = vmatprep.subr.bf16.mxu0 %v171
  %300 = vmatpush1.bf16.msra.mxu0 %v170
  %301 = vmatprep.subr.bf16.mxu0 0
  %302 = vmatpush2.bf16.msra.mxu0 0
  %303 = vmatprep.subr.bf16.mxu0 0
  %304 = vmatpush2.bf16.msra.mxu0 0
  %305 = vmatprep.subr.bf16.mxu0 0
  %306 = vmatpush2.bf16.msra.mxu0 0
  %307 = vmatprep.subr.bf16.mxu0 0
  %308 = vmatpush2.bf16.msra.mxu0 0
  %309 = vmatprep.subr.bf16.mxu0 0
  %310 = vmatpush2.bf16.msra.mxu0 0
  %311 = vmatprep.subr.bf16.mxu0 0
  %312 = vmatpush2.bf16.msra.mxu0 0
  %313 = vmatprep.subr.bf16.mxu0 0
  %314 = vmatpush2.bf16.msra.mxu0 0
  %315 = vmatprep.subr.bf16.mxu0 0
  %316 = vmatpush2.bf16.msra.mxu0 0
  %317 = vmatprep.mubr.bf16.mxu0 0
  %318 = vmatmul.mubr.bf16.gmra.mxu0 %v242
  %v319 = vpop.f32.mrf.mxu0
  %v320 = vadd.f32 0.0, %v319
  %v321 = vpop.f32.mrf.mxu0
  %v322 = vadd.f32 0.0, %v321
  %v323 = vpop.f32.mrf.mxu0
  %v324 = vpop.f32.mrf.mxu0
  %325 = vdwg.mxu0
  %326 = vmatprep.subr.bf16.mxu0 0
  %327 = vmatpush1.bf16.msra.mxu0 0
  %328 = vmatprep.subr.bf16.mxu0 0
  %329 = vmatpush1.bf16.msra.mxu0 0
  %330 = vmatprep.subr.bf16.mxu0 0
  %331 = vmatpush1.bf16.msra.mxu0 0
  %332 = vmatprep.subr.bf16.mxu0 0
  %333 = vmatpush1.bf16.msra.mxu0 0
  %334 = vmatprep.subr.bf16.mxu0 %v200
  %335 = vmatpush1.bf16.msra.mxu0 %v199
  %336 = vmatprep.subr.bf16.mxu0 %v191
  %337 = vmatpush1.bf16.msra.mxu0 %v190
  %338 = vmatprep.subr.bf16.mxu0 %v182
  %339 = vmatpush1.bf16.msra.mxu0 %v181
  %340 = vmatprep.subr.bf16.mxu0 %v173
  %341 = vmatpush1.bf16.msra.mxu0 %v172
  %342 = vmatprep.subr.bf16.mxu0 0
  %343 = vmatpush2.bf16.msra.mxu0 0
  %344 = vmatprep.subr.bf16.mxu0 0
  %345 = vmatpush2.bf16.msra.mxu0 0
  %346 = vmatprep.subr.bf16.mxu0 0
  %347 = vmatpush2.bf16.msra.mxu0 0
  %348 = vmatprep.subr.bf16.mxu0 0
  %349 = vmatpush2.bf16.msra.mxu0 0
  %350 = vmatprep.subr.bf16.mxu0 0
  %351 = vmatpush2.bf16.msra.mxu0 0
  %352 = vmatprep.subr.bf16.mxu0 0
  %353 = vmatpush2.bf16.msra.mxu0 0
  %354 = vmatprep.subr.bf16.mxu0 0
  %355 = vmatpush2.bf16.msra.mxu0 0
  %356 = vmatprep.subr.bf16.mxu0 0
  %357 = vmatpush2.bf16.msra.mxu0 0
  %358 = vmatprep.mubr.bf16.mxu0 0
  %359 = vmatmul.mubr.bf16.gmra.mxu0 %v242
  %v360 = vpop.f32.mrf.mxu0
  %v361 = vadd.f32 0.0, %v360
  %v362 = vpop.f32.mrf.mxu0
  %v363 = vadd.f32 0.0, %v362
  %v364 = vpop.f32.mrf.mxu0
  %v365 = vpop.f32.mrf.mxu0
  %366 = vdwg.mxu0
  %367 = vmatprep.subr.bf16.mxu0 0
  %368 = vmatpush1.bf16.msra.mxu0 0
  %369 = vmatprep.subr.bf16.mxu0 0
  %370 = vmatpush1.bf16.msra.mxu0 0
  %371 = vmatprep.subr.bf16.mxu0 0
  %372 = vmatpush1.bf16.msra.mxu0 0
  %373 = vmatprep.subr.bf16.mxu0 0
  %374 = vmatpush1.bf16.msra.mxu0 0
  %375 = vmatprep.subr.bf16.mxu0 %v202
  %376 = vmatpush1.bf16.msra.mxu0 %v201
  %377 = vmatprep.subr.bf16.mxu0 %v193
  %378 = vmatpush1.bf16.msra.mxu0 %v192
  %379 = vmatprep.subr.bf16.mxu0 %v184
  %380 = vmatpush1.bf16.msra.mxu0 %v183
  %381 = vmatprep.subr.bf16.mxu0 %v175
  %382 = vmatpush1.bf16.msra.mxu0 %v174
  %383 = vmatprep.subr.bf16.mxu0 0
  %384 = vmatpush2.bf16.msra.mxu0 0
  %385 = vmatprep.subr.bf16.mxu0 0
  %386 = vmatpush2.bf16.msra.mxu0 0
  %387 = vmatprep.subr.bf16.mxu0 0
  %388 = vmatpush2.bf16.msra.mxu0 0
  %389 = vmatprep.subr.bf16.mxu0 0
  %390 = vmatpush2.bf16.msra.mxu0 0
  %391 = vmatprep.subr.bf16.mxu0 0
  %392 = vmatpush2.bf16.msra.mxu0 0
  %393 = vmatprep.subr.bf16.mxu0 0
  %394 = vmatpush2.bf16.msra.mxu0 0
  %395 = vmatprep.subr.bf16.mxu0 0
  %396 = vmatpush2.bf16.msra.mxu0 0
  %397 = vmatprep.subr.bf16.mxu0 0
  %398 = vmatpush2.bf16.msra.mxu0 0
  %399 = vmatprep.mubr.bf16.mxu0 0
  %400 = vmatmul.mubr.bf16.gmra.mxu0 %v242
  %v401 = vpop.f32.mrf.mxu0
  %v402 = vadd.f32 0.0, %v401
  %v403 = vpop.f32.mrf.mxu0
  %v404 = vadd.f32 0.0, %v403
  %v405 = vpop.f32.mrf.mxu0
  %v406 = vpop.f32.mrf.mxu0
  %407 = vdwg.mxu0
  %408 = vmatprep.subr.bf16.mxu0 0
  %409 = vmatpush1.bf16.msra.mxu0 0
  %410 = vmatprep.subr.bf16.mxu0 0
  %411 = vmatpush1.bf16.msra.mxu0 0
  %412 = vmatprep.subr.bf16.mxu0 0
  %413 = vmatpush1.bf16.msra.mxu0 0
  %414 = vmatprep.subr.bf16.mxu0 0
  %415 = vmatpush1.bf16.msra.mxu0 0
  %416 = vmatprep.subr.bf16.mxu0 0
  %417 = vmatpush1.bf16.msra.mxu0 %v203
  %418 = vmatprep.subr.bf16.mxu0 0
  %419 = vmatpush1.bf16.msra.mxu0 %v194
  %420 = vmatprep.subr.bf16.mxu0 0
  %421 = vmatpush1.bf16.msra.mxu0 %v185
  %422 = vmatprep.subr.bf16.mxu0 0
  %423 = vmatpush1.bf16.msra.mxu0 %v176
  %424 = vmatprep.subr.bf16.mxu0 0
  %425 = vmatpush2.bf16.msra.mxu0 0
  %426 = vmatprep.subr.bf16.mxu0 0
  %427 = vmatpush2.bf16.msra.mxu0 0
  %428 = vmatprep.subr.bf16.mxu0 0
  %429 = vmatpush2.bf16.msra.mxu0 0
  %430 = vmatprep.subr.bf16.mxu0 0
  %431 = vmatpush2.bf16.msra.mxu0 0
  %432 = vmatprep.subr.bf16.mxu0 0
  %433 = vmatpush2.bf16.msra.mxu0 0
  %434 = vmatprep.subr.bf16.mxu0 0
  %435 = vmatpush2.bf16.msra.mxu0 0
  %436 = vmatprep.subr.bf16.mxu0 0
  %437 = vmatpush2.bf16.msra.mxu0 0
  %438 = vmatprep.subr.bf16.mxu0 0
  %439 = vmatpush2.bf16.msra.mxu0 0
  %440 = vmatprep.mubr.bf16.mxu0 0
  %441 = vmatmul.mubr.bf16.gmra.mxu0 %v242
  %v442 = vpop.f32.mrf.mxu0
  %v443 = vadd.f32 0.0, %v442
  %v444 = vpop.f32.mrf.mxu0
  %v445 = vpop.f32.mrf.mxu0
  %v446 = vpop.f32.mrf.mxu0
  %447 = vdwg.mxu0
  %v448 = vadd.f32 %v279, %v281
  %v449 = vadd.f32 %v448, %v320
  %v450 = vadd.f32 %v449, %v322
  %v451 = vadd.f32 %v450, %v361
  %v452 = vadd.f32 %v451, %v363
  %v453 = vadd.f32 %v452, %v402
  %v454 = vadd.f32 %v453, %v404
  %v455 = vadd.f32 %v454, %v443
  %456 = vadd.xlane.f32.xlu0 %v455
  %v457 = vpop.xlane.xlu0 %456
  %v458 = vmul.f32 %v279, %v279
  %v459 = vmul.f32 %v281, %v281
  %v460 = vmul.f32 %v320, %v320
  %v461 = vmul.f32 %v322, %v322
  %v462 = vmul.f32 %v361, %v361
  %v463 = vmul.f32 %v363, %v363
  %v464 = vmul.f32 %v402, %v402
  %v465 = vmul.f32 %v404, %v404
  %v466 = vmul.f32 %v443, %v443
  %v467 = vadd.f32 %v458, %v459
  %v468 = vadd.f32 %v467, %v460
  %v469 = vadd.f32 %v468, %v461
  %v470 = vadd.f32 %v469, %v462
  %v471 = vadd.f32 %v470, %v463
  %v472 = vadd.f32 %v471, %v464
  %v473 = vadd.f32 %v472, %v465
  %v474 = vadd.f32 %v473, %v466
  %475 = vadd.xlane.f32.xlu0 %v474
  %v476 = vpop.xlane.xlu0 %475
  %v477 = vmul.f32 %v457, 0.00086805556
  %v478 = vmul.f32 %v476, 0.00086805556
  %v479 = vmul.f32 %v477, %v477
  %v480 = vsub.f32 %v478, %v479
  %v481 = vmax.f32 %v480, 0.0
  %v482 = vld [vmem:[%s1] sm:$0xff]
  %v483 = vadd.f32 %v481, 1e-05
  %v484 = vrsqrt.pop %v483
  %v485 = vmul.f32 %v482, %v484
  %v486 = vmul.f32 %v477, %v485
  %488 = vrot.lane.b32.xlu0 %v486, 1
  %v489 = vpop.permute.xlu0 %488
  %v491 = vsub.f32 %v482, %v489
  %493 = vset.pattern.permute.xlu0 0
  %494 = vperm.xlu0 %493, %v485
  %v495 = vpop.permute.xlu0 %494
  %v497 = vmul.f32 %v279, %v495
  %v498 = vmul.f32 %v281, %v495
  %v499 = vmul.f32 %v320, %v495
  %v500 = vmul.f32 %v322, %v495
  %v501 = vmul.f32 %v361, %v495
  %v502 = vmul.f32 %v363, %v495
  %v503 = vmul.f32 %v402, %v495
  %v504 = vmul.f32 %v404, %v495
  %v505 = vmul.f32 %v443, %v495
  %507 = vset.pattern.permute.xlu0 1
  %508 = vperm.xlu0 %507, %v491
  %v509 = vpop.permute.xlu0 %508
  %v511 = vadd.f32 %v497, %v509
  %v512 = vadd.f32 %v498, %v509
  %v513 = vadd.f32 %v499, %v509
  %v514 = vadd.f32 %v500, %v509
  %v515 = vadd.f32 %v501, %v509
  %v516 = vadd.f32 %v502, %v509
  %v517 = vadd.f32 %v503, %v509
  %v518 = vadd.f32 %v504, %v509
  %v519 = vadd.f32 %v505, %v509
  %vm520 = vcmp.ge.f32.partialorder %v511, 0.0
  %vm521 = vcmp.ge.f32.partialorder %v512, 0.0
  %vm522 = vcmp.ge.f32.partialorder %v513, 0.0
  %vm523 = vcmp.ge.f32.partialorder %v514, 0.0
  %vm524 = vcmp.ge.f32.partialorder %v515, 0.0
  %vm525 = vcmp.ge.f32.partialorder %v516, 0.0
  %vm526 = vcmp.ge.f32.partialorder %v517, 0.0
  %vm527 = vcmp.ge.f32.partialorder %v518, 0.0
  %vm528 = vcmp.ge.f32.partialorder %v519, 0.0
  %v529 = vmul.f32 %v511, 0.2
  %v530 = vmul.f32 %v512, 0.2
  %v531 = vmul.f32 %v513, 0.2
  %v532 = vmul.f32 %v514, 0.2
  %v533 = vmul.f32 %v515, 0.2
  %v534 = vmul.f32 %v516, 0.2
  %v535 = vmul.f32 %v517, 0.2
  %v536 = vmul.f32 %v518, 0.2
  %v537 = vmul.f32 %v519, 0.2
  %v538 = vsel %vm520, %v511, %v529
  %v539 = vsel %vm521, %v512, %v530
  %v540 = vsel %vm522, %v513, %v531
  %v541 = vsel %vm523, %v514, %v532
  %v542 = vsel %vm524, %v515, %v533
  %v543 = vsel %vm525, %v516, %v534
  %v544 = vsel %vm526, %v517, %v535
  %v545 = vsel %vm527, %v518, %v536
  %v546 = vsel %vm528, %v519, %v537
  %v547 = vpack.c.bf16 %v538, %v538
  %v548 = vpack.c.bf16 %v539, %v539
  %v549 = vpack.c.bf16 %v540, %v540
  %v550 = vpack.c.bf16 %v541, %v541
  %v551 = vpack.c.bf16 %v542, %v542
  %v552 = vpack.c.bf16 %v543, %v543
  %v553 = vpack.c.bf16 %v544, %v544
  %v554 = vpack.c.bf16 %v545, %v545
  %v555 = vpack.c.bf16 %v546, %v546
  %v565 = vunpack.c.l.b16 %v547
  %v566 = vunpack.c.l.b16 %v548
  %v567 = vunpack.c.l.b16 %v549
  %v568 = vunpack.c.l.b16 %v550
  %v569 = vunpack.c.l.b16 %v551
  %v570 = vunpack.c.l.b16 %v552
  %v571 = vunpack.c.l.b16 %v553
  %v572 = vunpack.c.l.b16 %v554
  %v573 = vunpack.c.l.b16 %v555
  %v574 = vpack.c.b16 %v566, %v565
  %v575 = vpack.c.b16 %v568, %v567
  %v576 = vpack.c.b16 %v570, %v569
  %v577 = vpack.c.b16 %v572, %v571
  %v578 = vpack.c.b16 %v573, %v573
  %584 = vst [vmem:[%s3] sm:$0xff] %v574
  %585 = vst [vmem:[%s3 + $0x8] sm:$0xff] %v575
  %586 = vst [vmem:[%s3 + $0x10] sm:$0xff] %v576
  %587 = vst [vmem:[%s3 + $0x18] sm:$0xff] %v577
  %588 = vst [vmem:[%s3 + $0x20] sm:$0xf] %v578
  // Predicated region
  $region14: #{discriminator_forward.7} parent=0 // pred_check
    _
  $region15: #{discriminator_forward.7} parent=0 // pred_check_branch
    %590 = sbr.rel (0) target = $region17
  $region16: #{discriminator_forward.7} parent=0 // pred_region
    _
  $region17: #{discriminator_forward.7} parent=0 // pred_fallthru
    _
  // Predicated region
  $region18: #{discriminator_forward.7} parent=0 // pred_check
    _
  $region19: #{discriminator_forward.7} parent=0 // pred_check_branch
    %592 = sbr.rel (0) target = $region21
  $region20: #{discriminator_forward.7} parent=0 // pred_region
    _
  $region21: #{discriminator_forward.7} parent=0 // pred_fallthru
    _

// kernel: discriminator_forward.8
$region0: #{discriminator_forward.8}
  #allocation0 [shape = 'u32[]', space=smem, size = 0x4, offset = 0x4, fixed_abs, tag = 'smem constant byte address 0x4 - core index']
  #allocation1 [shape = 'u32[144,128]{1,0:T(1,128)}', space=vmem, size = 0x12000, scoped, tag = 'internal scratch']
  #allocation2 [shape = 'f32[16,2]{1,0:T(8,128)}', space=vmem, size = 0x2000, scoped, tag = 'scratch operand']
  %s0 = inlined_call_operand.vmem [shape: bf16[16,128], index: 0, kind: input, shape index: {}]
  %s1 = inlined_call_operand.vmem [shape: f32[16,2], index: 1, kind: input, shape index: {}]
  %s2 = inlined_call_operand.vmem [shape: bf16[128,384], index: 2, kind: input, shape index: {}]
  %s3 = inlined_call_operand.vmem [shape: bf16[16,384], index: 3, kind: output, shape index: {}]
  %s4 = sld [smem:[#allocation0]]
  $region22: #{discriminator_forward.8} parent=0
    _
  %s6 = ssub.s32 1, %s4
  %s7 = scalar_select 0, %s6, %s4
  // Predicated region
  $region2: #{discriminator_forward.8} parent=0 // pred_check
    _
  $region3: #{discriminator_forward.8} parent=0 // pred_check_branch
    %9 = sbr.rel (0) target = $region5
  $region4: #{discriminator_forward.8} parent=0 // pred_region
    _
  $region5: #{discriminator_forward.8} parent=0 // pred_fallthru
    _
  // Predicated region
  $region6: #{discriminator_forward.8} parent=0 // pred_check
    _
  $region7: #{discriminator_forward.8} parent=0 // pred_check_branch
    %11 = sbr.rel (0) target = $region9
  $region8: #{discriminator_forward.8} parent=0 // pred_region
    _
  $region9: #{discriminator_forward.8} parent=0 // pred_fallthru
    _
  // Predicated region
  $region10: #{discriminator_forward.8} parent=0 // pred_check
    _
  $region11: #{discriminator_forward.8} parent=0 // pred_check_branch
    %13 = sbr.rel (0) target = $region13
  $region12: #{discriminator_forward.8} parent=0 // pred_region
    _
  $region13: #{discriminator_forward.8} parent=0 // pred_fallthru
    _
  %v15 = vld [vmem:[%s0] sm:$0xf]
  %v16 = vld [vmem:[%s0 + $0x4] sm:$0xf]
  %v17 = vld [vmem:[%s2] sm:$0xff]
  %v18 = vld [vmem:[%s2 + $0x8] sm:$0xf]
  %v19 = vld [vmem:[%s2 + $0xc] sm:$0xff]
  %v20 = vld [vmem:[%s2 + $0x14] sm:$0xf]
  %v21 = vld [vmem:[%s2 + $0x18] sm:$0xff]
  %v22 = vld [vmem:[%s2 + $0x20] sm:$0xf]
  %v23 = vld [vmem:[%s2 + $0x24] sm:$0xff]
  %v24 = vld [vmem:[%s2 + $0x2c] sm:$0xf]
  %v25 = vld [vmem:[%s2 + $0x30] sm:$0xff]
  %v26 = vld [vmem:[%s2 + $0x38] sm:$0xf]
  %v27 = vld [vmem:[%s2 + $0x3c] sm:$0xff]
  %v28 = vld [vmem:[%s2 + $0x44] sm:$0xf]
  %v29 = vld [vmem:[%s2 + $0x48] sm:$0xff]
  %v30 = vld [vmem:[%s2 + $0x50] sm:$0xf]
  %v31 = vld [vmem:[%s2 + $0x54] sm:$0xff]
  %v32 = vld [vmem:[%s2 + $0x5c] sm:$0xf]
  %v33 = vld [vmem:[%s2 + $0x60] sm:$0xff]
  %v34 = vld [vmem:[%s2 + $0x68] sm:$0xf]
  %v35 = vld [vmem:[%s2 + $0x6c] sm:$0xff]
  %v36 = vld [vmem:[%s2 + $0x74] sm:$0xf]
  %v37 = vld [vmem:[%s2 + $0x78] sm:$0xff]
  %v38 = vld [vmem:[%s2 + $0x80] sm:$0xf]
  %v39 = vld [vmem:[%s2 + $0x84] sm:$0xff]
  %v40 = vld [vmem:[%s2 + $0x8c] sm:$0xf]
  %v41 = vld [vmem:[%s2 + $0x90] sm:$0xff]
  %v42 = vld [vmem:[%s2 + $0x98] sm:$0xf]
  %v43 = vld [vmem:[%s2 + $0x9c] sm:$0xff]
  %v44 = vld [vmem:[%s2 + $0xa4] sm:$0xf]
  %v45 = vld [vmem:[%s2 + $0xa8] sm:$0xff]
  %v46 = vld [vmem:[%s2 + $0xb0] sm:$0xf]
  %v47 = vld [vmem:[%s2 + $0xb4] sm:$0xff]
  %v48 = vld [vmem:[%s2 + $0xbc] sm:$0xf]
  %v51 = vunpack.c.l.b16 %v15
  %v52 = vunpack.c.l.b16 %v16
  %v53 = vpack.c.b16 %v52, %v51
  %v87 = vunpack.c.l.b16 %v17
  %v88 = vunpack.c.h.b16 %v17
  %v89 = vunpack.c.l.b16 %v18
  %v90 = vunpack.c.l.b16 %v19
  %v91 = vunpack.c.h.b16 %v19
  %v92 = vunpack.c.l.b16 %v20
  %v93 = vunpack.c.l.b16 %v21
  %v94 = vunpack.c.h.b16 %v21
  %v95 = vunpack.c.l.b16 %v22
  %v96 = vunpack.c.l.b16 %v23
  %v97 = vunpack.c.h.b16 %v23
  %v98 = vunpack.c.l.b16 %v24
  %v99 = vunpack.c.l.b16 %v25
  %v100 = vunpack.c.h.b16 %v25
  %v101 = vunpack.c.l.b16 %v26
  %v102 = vunpack.c.l.b16 %v27
  %v103 = vunpack.c.h.b16 %v27
  %v104 = vunpack.c.l.b16 %v28
  %v105 = vunpack.c.l.b16 %v29
  %v106 = vunpack.c.h.b16 %v29
  %v107 = vunpack.c.l.b16 %v30
  %v108 = vunpack.c.l.b16 %v31
  %v109 = vunpack.c.h.b16 %v31
  %v110 = vunpack.c.l.b16 %v32
  %v111 = vunpack.c.l.b16 %v33
  %v112 = vunpack.c.h.b16 %v33
  %v113 = vunpack.c.l.b16 %v34
  %v114 = vunpack.c.l.b16 %v35
  %v115 = vunpack.c.h.b16 %v35
  %v116 = vunpack.c.l.b16 %v36
  %v117 = vunpack.c.l.b16 %v37
  %v118 = vunpack.c.h.b16 %v37
  %v119 = vunpack.c.l.b16 %v38
  %v120 = vunpack.c.l.b16 %v39
  %v121 = vunpack.c.h.b16 %v39
  %v122 = vunpack.c.l.b16 %v40
  %v123 = vunpack.c.l.b16 %v41
  %v124 = vunpack.c.h.b16 %v41
  %v125 = vunpack.c.l.b16 %v42
  %v126 = vunpack.c.l.b16 %v43
  %v127 = vunpack.c.h.b16 %v43
  %v128 = vunpack.c.l.b16 %v44
  %v129 = vunpack.c.l.b16 %v45
  %v130 = vunpack.c.h.b16 %v45
  %v131 = vunpack.c.l.b16 %v46
  %v132 = vunpack.c.l.b16 %v47
  %v133 = vunpack.c.h.b16 %v47
  %v134 = vunpack.c.l.b16 %v48
  %v135 = vpack.c.b16 %v90, %v87
  %v136 = vpack.c.b16 %v91, %v88
  %v137 = vpack.c.b16 %v92, %v89
  %v138 = vpack.c.b16 %v96, %v93
  %v139 = vpack.c.b16 %v97, %v94
  %v140 = vpack.c.b16 %v98, %v95
  %v141 = vpack.c.b16 %v102, %v99
  %v142 = vpack.c.b16 %v103, %v100
  %v143 = vpack.c.b16 %v104, %v101
  %v144 = vpack.c.b16 %v108, %v105
  %v145 = vpack.c.b16 %v109, %v106
  %v146 = vpack.c.b16 %v110, %v107
  %v147 = vpack.c.b16 %v114, %v111
  %v148 = vpack.c.b16 %v115, %v112
  %v149 = vpack.c.b16 %v116, %v113
  %v150 = vpack.c.b16 %v120, %v117
  %v151 = vpack.c.b16 %v121, %v118
  %v152 = vpack.c.b16 %v122, %v119
  %v153 = vpack.c.b16 %v126, %v123
  %v154 = vpack.c.b16 %v127, %v124
  %v155 = vpack.c.b16 %v128, %v125
  %v156 = vpack.c.b16 %v132, %v129
  %v157 = vpack.c.b16 %v133, %v130
  %v158 = vpack.c.b16 %v134, %v131
  %183 = vmatprep.subr.bf16.mxu0 %v157
  %184 = vmatpush1.bf16.msra.mxu0 %v156
  %185 = vmatprep.subr.bf16.mxu0 %v154
  %186 = vmatpush1.bf16.msra.mxu0 %v153
  %187 = vmatprep.subr.bf16.mxu0 %v151
  %188 = vmatpush1.bf16.msra.mxu0 %v150
  %189 = vmatprep.subr.bf16.mxu0 %v148
  %190 = vmatpush1.bf16.msra.mxu0 %v147
  %191 = vmatprep.subr.bf16.mxu0 %v145
  %192 = vmatpush1.bf16.msra.mxu0 %v144
  %193 = vmatprep.subr.bf16.mxu0 %v142
  %194 = vmatpush1.bf16.msra.mxu0 %v141
  %195 = vmatprep.subr.bf16.mxu0 %v139
  %196 = vmatpush1.bf16.msra.mxu0 %v138
  %197 = vmatprep.subr.bf16.mxu0 %v136
  %198 = vmatpush1.bf16.msra.mxu0 %v135
  %199 = vmatprep.subr.bf16.mxu0 0
  %200 = vmatpush2.bf16.msra.mxu0 0
  %201 = vmatprep.subr.bf16.mxu0 0
  %202 = vmatpush2.bf16.msra.mxu0 0
  %203 = vmatprep.subr.bf16.mxu0 0
  %204 = vmatpush2.bf16.msra.mxu0 0
  %205 = vmatprep.subr.bf16.mxu0 0
  %206 = vmatpush2.bf16.msra.mxu0 0
  %207 = vmatprep.subr.bf16.mxu0 0
  %208 = vmatpush2.bf16.msra.mxu0 0
  %209 = vmatprep.subr.bf16.mxu0 0
  %210 = vmatpush2.bf16.msra.mxu0 0
  %211 = vmatprep.subr.bf16.mxu0 0
  %212 = vmatpush2.bf16.msra.mxu0 0
  %213 = vmatprep.subr.bf16.mxu0 0
  %214 = vmatpush2.bf16.msra.mxu0 0
  %215 = vmatprep.mubr.bf16.mxu0 0
  %216 = vmatmul.mubr.bf16.gmra.mxu0 %v53
  %v217 = vpop.f32.mrf.mxu0
  %v218 = vadd.f32 0.0, %v217
  %v219 = vpop.f32.mrf.mxu0
  %v220 = vadd.f32 0.0, %v219
  %v221 = vpop.f32.mrf.mxu0
  %v222 = vadd.f32 0.0, %v221
  %v223 = vpop.f32.mrf.mxu0
  %v224 = vadd.f32 0.0, %v223
  %225 = vdwg.mxu0
  %226 = vmatprep.subr.bf16.mxu0 0
  %227 = vmatpush1.bf16.msra.mxu0 %v158
  %228 = vmatprep.subr.bf16.mxu0 0
  %229 = vmatpush1.bf16.msra.mxu0 %v155
  %230 = vmatprep.subr.bf16.mxu0 0
  %231 = vmatpush1.bf16.msra.mxu0 %v152
  %232 = vmatprep.subr.bf16.mxu0 0
  %233 = vmatpush1.bf16.msra.mxu0 %v149
  %234 = vmatprep.subr.bf16.mxu0 0
  %235 = vmatpush1.bf16.msra.mxu0 %v146
  %236 = vmatprep.subr.bf16.mxu0 0
  %237 = vmatpush1.bf16.msra.mxu0 %v143
  %238 = vmatprep.subr.bf16.mxu0 0
  %239 = vmatpush1.bf16.msra.mxu0 %v140
  %240 = vmatprep.subr.bf16.mxu0 0
  %241 = vmatpush1.bf16.msra.mxu0 %v137
  %242 = vmatprep.subr.bf16.mxu0 0
  %243 = vmatpush2.bf16.msra.mxu0 0
  %244 = vmatprep.subr.bf16.mxu0 0
  %245 = vmatpush2.bf16.msra.mxu0 0
  %246 = vmatprep.subr.bf16.mxu0 0
  %247 = vmatpush2.bf16.msra.mxu0 0
  %248 = vmatprep.subr.bf16.mxu0 0
  %249 = vmatpush2.bf16.msra.mxu0 0
  %250 = vmatprep.subr.bf16.mxu0 0
  %251 = vmatpush2.bf16.msra.mxu0 0
  %252 = vmatprep.subr.bf16.mxu0 0
  %253 = vmatpush2.bf16.msra.mxu0 0
  %254 = vmatprep.subr.bf16.mxu0 0
  %255 = vmatpush2.bf16.msra.mxu0 0
  %256 = vmatprep.subr.bf16.mxu0 0
  %257 = vmatpush2.bf16.msra.mxu0 0
  %258 = vmatprep.mubr.bf16.mxu0 0
  %259 = vmatmul.mubr.bf16.gmra.mxu0 %v53
  %v260 = vpop.f32.mrf.mxu0
  %v261 = vadd.f32 0.0, %v260
  %v262 = vpop.f32.mrf.mxu0
  %v263 = vpop.f32.mrf.mxu0
  %v264 = vadd.f32 0.0, %v263
  %v265 = vpop.f32.mrf.mxu0
  %266 = vdwg.mxu0
  %v267 = vadd.f32 %v218, %v220
  %v268 = vadd.f32 %v267, %v261
  %269 = vadd.xlane.f32.xlu0 %v268
  %v270 = vpop.xlane.xlu0 %269
  %v271 = vadd.f32 %v222, %v224
  %v272 = vadd.f32 %v271, %v264
  %273 = vadd.xlane.f32.xlu0 %v272
  %v274 = vpop.xlane.xlu0 %273
  %v275 = vmul.f32 %v218, %v218
  %v276 = vmul.f32 %v220, %v220
  %v277 = vmul.f32 %v261, %v261
  %v278 = vmul.f32 %v222, %v222
  %v279 = vmul.f32 %v224, %v224
  %v280 = vmul.f32 %v264, %v264
  %v281 = vadd.f32 %v275, %v276
  %v282 = vadd.f32 %v281, %v277
  %283 = vadd.xlane.f32.xlu0 %v282
  %v284 = vpop.xlane.xlu0 %283
  %v285 = vadd.f32 %v278, %v279
  %v286 = vadd.f32 %v285, %v280
  %287 = vadd.xlane.f32.xlu0 %v286
  %v288 = vpop.xlane.xlu0 %287
  %v289 = vmul.f32 %v270, 0.0034722222
  %v290 = vmul.f32 %v274, 0.0034722222
  %v291 = vmul.f32 %v284, 0.0034722222
  %v292 = vmul.f32 %v288, 0.0034722222
  %v293 = vmul.f32 %v289, %v289
  %v294 = vmul.f32 %v290, %v290
  %v295 = vsub.f32 %v291, %v293
  %v296 = vsub.f32 %v292, %v294
  %v297 = vmax.f32 %v295, 0.0
  %v298 = vmax.f32 %v296, 0.0
  %v299 = vld [vmem:[%s1] sm:$0xff]
  %v300 = vld [vmem:[%s1 + $0x8] sm:$0xff]
  %v301 = vadd.f32 %v297, 1e-05
  %v302 = vadd.f32 %v298, 1e-05
  %v303 = vrsqrt.pop %v301
  %v304 = vrsqrt.pop %v302
  %v305 = vmul.f32 %v299, %v303
  %v306 = vmul.f32 %v300, %v304
  %v307 = vmul.f32 %v289, %v305
  %v308 = vmul.f32 %v290, %v306
  %311 = vrot.lane.b32.xlu0 %v307, 1
  %v312 = vpop.permute.xlu0 %311
  %313 = vrot.lane.b32.xlu0 %v308, 1
  %v314 = vpop.permute.xlu0 %313
  %v317 = vsub.f32 %v299, %v312
  %v318 = vsub.f32 %v300, %v314
  %320 = vset.pattern.permute.xlu0 0
  %321 = vperm.xlu0 %320, %v305
  %v322 = vpop.permute.xlu0 %321
  %325 = vset.pattern.permute.xlu0 0
  %326 = vperm.xlu0 %325, %v306
  %v327 = vpop.permute.xlu0 %326
  %v329 = vmul.f32 %v218, %v322
  %v330 = vmul.f32 %v220, %v322
  %v331 = vmul.f32 %v261, %v322
  %v332 = vmul.f32 %v222, %v327
  %v333 = vmul.f32 %v224, %v327
  %v334 = vmul.f32 %v264, %v327
  %336 = vset.pattern.permute.xlu0 1
  %337 = vperm.xlu0 %336, %v317
  %v338 = vpop.permute.xlu0 %337
  %341 = vset.pattern.permute.xlu0 1
  %342 = vperm.xlu0 %341, %v318
  %v343 = vpop.permute.xlu0 %342
  %v345 = vadd.f32 %v329, %v338
  %v346 = vadd.f32 %v330, %v338
  %v347 = vadd.f32 %v331, %v338
  %v348 = vadd.f32 %v332, %v343
  %v349 = vadd.f32 %v333, %v343
  %v350 = vadd.f32 %v334, %v343
  %vm351 = vcmp.ge.f32.partialorder %v345, 0.0
  %vm352 = vcmp.ge.f32.partialorder %v346, 0.0
  %vm353 = vcmp.ge.f32.partialorder %v347, 0.0
  %vm354 = vcmp.ge.f32.partialorder %v348, 0.0
  %vm355 = vcmp.ge.f32.partialorder %v349, 0.0
  %vm356 = vcmp.ge.f32.partialorder %v350, 0.0
  %v357 = vmul.f32 %v345, 0.2
  %v358 = vmul.f32 %v346, 0.2
  %v359 = vmul.f32 %v347, 0.2
  %v360 = vmul.f32 %v348, 0.2
  %v361 = vmul.f32 %v349, 0.2
  %v362 = vmul.f32 %v350, 0.2
  %v363 = vsel %vm351, %v345, %v357
  %v364 = vsel %vm352, %v346, %v358
  %v365 = vsel %vm353, %v347, %v359
  %v366 = vsel %vm354, %v348, %v360
  %v367 = vsel %vm355, %v349, %v361
  %v368 = vsel %vm356, %v350, %v362
  %v369 = vpack.c.bf16 %v366, %v363
  %v370 = vpack.c.bf16 %v367, %v364
  %v371 = vpack.c.bf16 %v368, %v365
  %v375 = vunpack.c.l.b16 %v369
  %v376 = vunpack.c.l.b16 %v370
  %v377 = vunpack.c.l.b16 %v371
  %v378 = vunpack.c.h.b16 %v369
  %v379 = vunpack.c.h.b16 %v370
  %v380 = vunpack.c.h.b16 %v371
  %v381 = vpack.c.b16 %v376, %v375
  %v382 = vpack.c.b16 %v377, %v377
  %v383 = vpack.c.b16 %v379, %v378
  %v384 = vpack.c.b16 %v380, %v380
  %389 = vst [vmem:[%s3] sm:$0xff] %v381
  %390 = vst [vmem:[%s3 + $0x8] sm:$0xf] %v382
  %391 = vst [vmem:[%s3 + $0xc] sm:$0xff] %v383
  %392 = vst [vmem:[%s3 + $0x14] sm:$0xf] %v384
  // Predicated region
  $region14: #{discriminator_forward.8} parent=0 // pred_check
    _
  $region15: #{discriminator_forward.8} parent=0 // pred_check_branch
    %394 = sbr.rel (0) target = $region17
  $region16: #{discriminator_forward.8} parent=0 // pred_region
    _
  $region17: #{discriminator_forward.8} parent=0 // pred_fallthru
    _
  // Predicated region
  $region18: #{discriminator_forward.8} parent=0 // pred_check
    _
  $region19: #{discriminator_forward.8} parent=0 // pred_check_branch
    %396 = sbr.rel (0) target = $region21
  $region20: #{discriminator_forward.8} parent=0 // pred_region
    _
  $region21: #{discriminator_forward.8} parent=0 // pred_fallthru
    _

// kernel: discriminator_forward.9
$region0: #{discriminator_forward.9}
  #allocation0 [shape = 'u32[]', space=smem, size = 0x4, offset = 0x4, fixed_abs, tag = 'smem constant byte address 0x4 - core index']
  #allocation1 [shape = 'u32[144,128]{1,0:T(1,128)}', space=vmem, size = 0x12000, scoped, tag = 'internal scratch']
  #allocation2 [shape = 'f32[32,2]{1,0:T(8,128)}', space=vmem, size = 0x4000, scoped, tag = 'scratch operand']
  %s0 = inlined_call_operand.vmem [shape: bf16[32,256], index: 0, kind: input, shape index: {}]
  %s1 = inlined_call_operand.vmem [shape: f32[32,2], index: 1, kind: input, shape index: {}]
  %s2 = inlined_call_operand.vmem [shape: bf16[256,128], index: 2, kind: input, shape index: {}]
  %s3 = inlined_call_operand.vmem [shape: bf16[32,128], index: 3, kind: output, shape index: {}]
  %s4 = sld [smem:[#allocation0]]
  $region22: #{discriminator_forward.9} parent=0
    _
  %s6 = ssub.s32 1, %s4
  %s7 = scalar_select 0, %s6, %s4
  // Predicated region
  $region2: #{discriminator_forward.9} parent=0 // pred_check
    _
  $region3: #{discriminator_forward.9} parent=0 // pred_check_branch
    %9 = sbr.rel (0) target = $region5
  $region4: #{discriminator_forward.9} parent=0 // pred_region
    _
  $region5: #{discriminator_forward.9} parent=0 // pred_fallthru
    _
  // Predicated region
  $region6: #{discriminator_forward.9} parent=0 // pred_check
    _
  $region7: #{discriminator_forward.9} parent=0 // pred_check_branch
    %11 = sbr.rel (0) target = $region9
  $region8: #{discriminator_forward.9} parent=0 // pred_region
    _
  $region9: #{discriminator_forward.9} parent=0 // pred_fallthru
    _
  // Predicated region
  $region10: #{discriminator_forward.9} parent=0 // pred_check
    _
  $region11: #{discriminator_forward.9} parent=0 // pred_check_branch
    %13 = sbr.rel (0) target = $region13
  $region12: #{discriminator_forward.9} parent=0 // pred_region
    _
  $region13: #{discriminator_forward.9} parent=0 // pred_fallthru
    _
  %v15 = vld [vmem:[%s0] sm:$0xff]
  %v16 = vld [vmem:[%s0 + $0x8] sm:$0xff]
  %v17 = vld [vmem:[%s0 + $0x10] sm:$0xff]
  %v18 = vld [vmem:[%s0 + $0x18] sm:$0xff]
  %v19 = vld [vmem:[%s2] sm:$0xf]
  %v20 = vld [vmem:[%s2 + $0x4] sm:$0xf]
  %v21 = vld [vmem:[%s2 + $0x8] sm:$0xf]
  %v22 = vld [vmem:[%s2 + $0xc] sm:$0xf]
  %v23 = vld [vmem:[%s2 + $0x10] sm:$0xf]
  %v24 = vld [vmem:[%s2 + $0x14] sm:$0xf]
  %v25 = vld [vmem:[%s2 + $0x18] sm:$0xf]
  %v26 = vld [vmem:[%s2 + $0x1c] sm:$0xf]
  %v27 = vld [vmem:[%s2 + $0x20] sm:$0xf]
  %v28 = vld [vmem:[%s2 + $0x24] sm:$0xf]
  %v29 = vld [vmem:[%s2 + $0x28] sm:$0xf]
  %v30 = vld [vmem:[%s2 + $0x2c] sm:$0xf]
  %v31 = vld [vmem:[%s2 + $0x30] sm:$0xf]
  %v32 = vld [vmem:[%s2 + $0x34] sm:$0xf]
  %v33 = vld [vmem:[%s2 + $0x38] sm:$0xf]
  %v34 = vld [vmem:[%s2 + $0x3c] sm:$0xf]
  %v35 = vld [vmem:[%s2 + $0x40] sm:$0xf]
  %v36 = vld [vmem:[%s2 + $0x44] sm:$0xf]
  %v37 = vld [vmem:[%s2 + $0x48] sm:$0xf]
  %v38 = vld [vmem:[%s2 + $0x4c] sm:$0xf]
  %v39 = vld [vmem:[%s2 + $0x50] sm:$0xf]
  %v40 = vld [vmem:[%s2 + $0x54] sm:$0xf]
  %v41 = vld [vmem:[%s2 + $0x58] sm:$0xf]
  %v42 = vld [vmem:[%s2 + $0x5c] sm:$0xf]
  %v43 = vld [vmem:[%s2 + $0x60] sm:$0xf]
  %v44 = vld [vmem:[%s2 + $0x64] sm:$0xf]
  %v45 = vld [vmem:[%s2 + $0x68] sm:$0xf]
  %v46 = vld [vmem:[%s2 + $0x6c] sm:$0xf]
  %v47 = vld [vmem:[%s2 + $0x70] sm:$0xf]
  %v48 = vld [vmem:[%s2 + $0x74] sm:$0xf]
  %v49 = vld [vmem:[%s2 + $0x78] sm:$0xf]
  %v50 = vld [vmem:[%s2 + $0x7c] sm:$0xf]
  %v55 = vunpack.c.l.b16 %v15
  %v56 = vunpack.c.h.b16 %v15
  %v57 = vunpack.c.l.b16 %v16
  %v58 = vunpack.c.h.b16 %v16
  %v59 = vunpack.c.l.b16 %v17
  %v60 = vunpack.c.h.b16 %v17
  %v61 = vunpack.c.l.b16 %v18
  %v62 = vunpack.c.h.b16 %v18
  %v63 = vpack.c.b16 %v57, %v55
  %v64 = vpack.c.b16 %v58, %v56
  %v65 = vpack.c.b16 %v61, %v59
  %v66 = vpack.c.b16 %v62, %v60
  %v103 = vunpack.c.l.b16 %v19
  %v104 = vunpack.c.l.b16 %v20
  %v105 = vunpack.c.l.b16 %v21
  %v106 = vunpack.c.l.b16 %v22
  %v107 = vunpack.c.l.b16 %v23
  %v108 = vunpack.c.l.b16 %v24
  %v109 = vunpack.c.l.b16 %v25
  %v110 = vunpack.c.l.b16 %v26
  %v111 = vunpack.c.l.b16 %v27
  %v112 = vunpack.c.l.b16 %v28
  %v113 = vunpack.c.l.b16 %v29
  %v114 = vunpack.c.l.b16 %v30
  %v115 = vunpack.c.l.b16 %v31
  %v116 = vunpack.c.l.b16 %v32
  %v117 = vunpack.c.l.b16 %v33
  %v118 = vunpack.c.l.b16 %v34
  %v119 = vunpack.c.l.b16 %v35
  %v120 = vunpack.c.l.b16 %v36
  %v121 = vunpack.c.l.b16 %v37
  %v122 = vunpack.c.l.b16 %v38
  %v123 = vunpack.c.l.b16 %v39
  %v124 = vunpack.c.l.b16 %v40
  %v125 = vunpack.c.l.b16 %v41
  %v126 = vunpack.c.l.b16 %v42
  %v127 = vunpack.c.l.b16 %v43
  %v128 = vunpack.c.l.b16 %v44
  %v129 = vunpack.c.l.b16 %v45
  %v130 = vunpack.c.l.b16 %v46
  %v131 = vunpack.c.l.b16 %v47
  %v132 = vunpack.c.l.b16 %v48
  %v133 = vunpack.c.l.b16 %v49
  %v134 = vunpack.c.l.b16 %v50
  %v135 = vpack.c.b16 %v104, %v103
  %v136 = vpack.c.b16 %v106, %v105
  %v137 = vpack.c.b16 %v108, %v107
  %v138 = vpack.c.b16 %v110, %v109
  %v139 = vpack.c.b16 %v112, %v111
  %v140 = vpack.c.b16 %v114, %v113
  %v141 = vpack.c.b16 %v116, %v115
  %v142 = vpack.c.b16 %v118, %v117
  %v143 = vpack.c.b16 %v120, %v119
  %v144 = vpack.c.b16 %v122, %v121
  %v145 = vpack.c.b16 %v124, %v123
  %v146 = vpack.c.b16 %v126, %v125
  %v147 = vpack.c.b16 %v128, %v127
  %v148 = vpack.c.b16 %v130, %v129
  %v149 = vpack.c.b16 %v132, %v131
  %v150 = vpack.c.b16 %v134, %v133
  %167 = vmatprep.subr.bf16.mxu0 0
  %168 = vmatpush1.bf16.msra.mxu0 %v142
  %169 = vmatprep.subr.bf16.mxu0 0
  %170 = vmatpush1.bf16.msra.mxu0 %v141
  %171 = vmatprep.subr.bf16.mxu0 0
  %172 = vmatpush1.bf16.msra.mxu0 %v140
  %173 = vmatprep.subr.bf16.mxu0 0
  %174 = vmatpush1.bf16.msra.mxu0 %v139
  %175 = vmatprep.subr.bf16.mxu0 0
  %176 = vmatpush1.bf16.msra.mxu0 %v138
  %177 = vmatprep.subr.bf16.mxu0 0
  %178 = vmatpush1.bf16.msra.mxu0 %v137
  %179 = vmatprep.subr.bf16.mxu0 0
  %180 = vmatpush1.bf16.msra.mxu0 %v136
  %181 = vmatprep.subr.bf16.mxu0 0
  %182 = vmatpush1.bf16.msra.mxu0 %v135
  %183 = vmatprep.subr.bf16.mxu0 0
  %184 = vmatpush2.bf16.msra.mxu0 %v150
  %185 = vmatprep.subr.bf16.mxu0 0
  %186 = vmatpush2.bf16.msra.mxu0 %v149
  %187 = vmatprep.subr.bf16.mxu0 0
  %188 = vmatpush2.bf16.msra.mxu0 %v148
  %189 = vmatprep.subr.bf16.mxu0 0
  %190 = vmatpush2.bf16.msra.mxu0 %v147
  %191 = vmatprep.subr.bf16.mxu0 0
  %192 = vmatpush2.bf16.msra.mxu0 %v146
  %193 = vmatprep.subr.bf16.mxu0 0
  %194 = vmatpush2.bf16.msra.mxu0 %v145
  %195 = vmatprep.subr.bf16.mxu0 0
  %196 = vmatpush2.bf16.msra.mxu0 %v144
  %197 = vmatprep.subr.bf16.mxu0 0
  %198 = vmatpush2.bf16.msra.mxu0 %v143
  %199 = vmatprep.mubr.bf16.mxu0 %v64
  %200 = vmatmul.mubr.bf16.gmra.mxu0 %v63
  %v201 = vpop.f32.mrf.mxu0
  %v202 = vadd.f32 0.0, %v201
  %v203 = vpop.f32.mrf.mxu0
  %v204 = vpop.f32.mrf.mxu0
  %v205 = vadd.f32 0.0, %v204
  %v206 = vpop.f32.mrf.mxu0
  %207 = vmatprep.mubr.bf16.mxu0 %v66
  %208 = vmatmul.mubr.bf16.gmra.mxu0 %v65
  %v209 = vpop.f32.mrf.mxu0
  %v210 = vadd.f32 0.0, %v209
  %v211 = vpop.f32.mrf.mxu0
  %v212 = vpop.f32.mrf.mxu0
  %v213 = vadd.f32 0.0, %v212
  %v214 = vpop.f32.mrf.mxu0
  %215 = vdwg.mxu0
  %216 = vadd.xlane.f32.xlu0 %v202
  %v217 = vpop.xlane.xlu0 %216
  %218 = vadd.xlane.f32.xlu0 %v205
  %v219 = vpop.xlane.xlu0 %218
  %220 = vadd.xlane.f32.xlu0 %v210
  %v221 = vpop.xlane.xlu0 %220
  %222 = vadd.xlane.f32.xlu0 %v213
  %v223 = vpop.xlane.xlu0 %222
  %v224 = vmul.f32 %v202, %v202
  %v225 = vmul.f32 %v205, %v205
  %v226 = vmul.f32 %v210, %v210
  %v227 = vmul.f32 %v213, %v213
  %228 = vadd.xlane.f32.xlu0 %v224
  %v229 = vpop.xlane.xlu0 %228
  %230 = vadd.xlane.f32.xlu0 %v225
  %v231 = vpop.xlane.xlu0 %230
  %232 = vadd.xlane.f32.xlu0 %v226
  %v233 = vpop.xlane.xlu0 %232
  %234 = vadd.xlane.f32.xlu0 %v227
  %v235 = vpop.xlane.xlu0 %234
  %v236 = vmul.f32 %v217, 0.013888889
  %v237 = vmul.f32 %v219, 0.013888889
  %v238 = vmul.f32 %v221, 0.013888889
  %v239 = vmul.f32 %v223, 0.013888889
  %v240 = vmul.f32 %v229, 0.013888889
  %v241 = vmul.f32 %v231, 0.013888889
  %v242 = vmul.f32 %v233, 0.013888889
  %v243 = vmul.f32 %v235, 0.013888889
  %v244 = vmul.f32 %v236, %v236
  %v245 = vmul.f32 %v237, %v237
  %v246 = vmul.f32 %v238, %v238
  %v247 = vmul.f32 %v239, %v239
  %v248 = vsub.f32 %v240, %v244
  %v249 = vsub.f32 %v241, %v245
  %v250 = vsub.f32 %v242, %v246
  %v251 = vsub.f32 %v243, %v247
  %v252 = vmax.f32 %v248, 0.0
  %v253 = vmax.f32 %v249, 0.0
  %v254 = vmax.f32 %v250, 0.0
  %v255 = vmax.f32 %v251, 0.0
  %v256 = vld [vmem:[%s1] sm:$0xff]
  %v257 = vld [vmem:[%s1 + $0x8] sm:$0xff]
  %v258 = vld [vmem:[%s1 + $0x10] sm:$0xff]
  %v259 = vld [vmem:[%s1 + $0x18] sm:$0xff]
  %v260 = vadd.f32 %v252, 1e-05
  %v261 = vadd.f32 %v253, 1e-05
  %v262 = vadd.f32 %v254, 1e-05
  %v263 = vadd.f32 %v255, 1e-05
  %v264 = vrsqrt.pop %v260
  %v265 = vrsqrt.pop %v261
  %v266 = vrsqrt.pop %v262
  %v267 = vrsqrt.pop %v263
  %v268 = vmul.f32 %v256, %v264
  %v269 = vmul.f32 %v257, %v265
  %v270 = vmul.f32 %v258, %v266
  %v271 = vmul.f32 %v259, %v267
  %v272 = vmul.f32 %v236, %v268
  %v273 = vmul.f32 %v237, %v269
  %v274 = vmul.f32 %v238, %v270
  %v275 = vmul.f32 %v239, %v271
  %280 = vrot.lane.b32.xlu0 %v272, 1
  %v281 = vpop.permute.xlu0 %280
  %282 = vrot.lane.b32.xlu0 %v273, 1
  %v283 = vpop.permute.xlu0 %282
  %284 = vrot.lane.b32.xlu0 %v274, 1
  %v285 = vpop.permute.xlu0 %284
  %286 = vrot.lane.b32.xlu0 %v275, 1
  %v287 = vpop.permute.xlu0 %286
  %v292 = vsub.f32 %v256, %v281
  %v293 = vsub.f32 %v257, %v283
  %v294 = vsub.f32 %v258, %v285
  %v295 = vsub.f32 %v259, %v287
  %297 = vset.pattern.permute.xlu0 0
  %298 = vperm.xlu0 %297, %v268
  %v299 = vpop.permute.xlu0 %298
  %302 = vset.pattern.permute.xlu0 0
  %303 = vperm.xlu0 %302, %v269
  %v304 = vpop.permute.xlu0 %303
  %307 = vset.pattern.permute.xlu0 0
  %308 = vperm.xlu0 %307, %v270
  %v309 = vpop.permute.xlu0 %308
  %312 = vset.pattern.permute.xlu0 0
  %313 = vperm.xlu0 %312, %v271
  %v314 = vpop.permute.xlu0 %313
  %v316 = vmul.f32 %v202, %v299
  %v317 = vmul.f32 %v205, %v304
  %v318 = vmul.f32 %v210, %v309
  %v319 = vmul.f32 %v213, %v314
  %321 = vset.pattern.permute.xlu0 1
  %322 = vperm.xlu0 %321, %v292
  %v323 = vpop.permute.xlu0 %322
  %326 = vset.pattern.permute.xlu0 1
  %327 = vperm.xlu0 %326, %v293
  %v328 = vpop.permute.xlu0 %327
  %331 = vset.pattern.permute.xlu0 1
  %332 = vperm.xlu0 %331, %v294
  %v333 = vpop.permute.xlu0 %332
  %336 = vset.pattern.permute.xlu0 1
  %337 = vperm.xlu0 %336, %v295
  %v338 = vpop.permute.xlu0 %337
  %v340 = vadd.f32 %v316, %v323
  %v341 = vadd.f32 %v317, %v328
  %v342 = vadd.f32 %v318, %v333
  %v343 = vadd.f32 %v319, %v338
  %vm344 = vcmp.ge.f32.partialorder %v340, 0.0
  %vm345 = vcmp.ge.f32.partialorder %v341, 0.0
  %vm346 = vcmp.ge.f32.partialorder %v342, 0.0
  %vm347 = vcmp.ge.f32.partialorder %v343, 0.0
  %v348 = vmul.f32 %v340, 0.2
  %v349 = vmul.f32 %v341, 0.2
  %v350 = vmul.f32 %v342, 0.2
  %v351 = vmul.f32 %v343, 0.2
  %v352 = vsel %vm344, %v340, %v348
  %v353 = vsel %vm345, %v341, %v349
  %v354 = vsel %vm346, %v342, %v350
  %v355 = vsel %vm347, %v343, %v351
  %v356 = vpack.c.bf16 %v353, %v352
  %v357 = vpack.c.bf16 %v355, %v354
  %v360 = vunpack.c.l.b16 %v356
  %v361 = vunpack.c.h.b16 %v356
  %v362 = vunpack.c.l.b16 %v357
  %v363 = vunpack.c.h.b16 %v357
  %v364 = vpack.c.b16 %v360, %v360
  %v365 = vpack.c.b16 %v361, %v361
  %v366 = vpack.c.b16 %v362, %v362
  %v367 = vpack.c.b16 %v363, %v363
  %372 = vst [vmem:[%s3] sm:$0xf] %v364
  %373 = vst [vmem:[%s3 + $0x4] sm:$0xf] %v365
  %374 = vst [vmem:[%s3 + $0x8] sm:$0xf] %v366
  %375 = vst [vmem:[%s3 + $0xc] sm:$0xf] %v367
  // Predicated region
  $region14: #{discriminator_forward.9} parent=0 // pred_check
    _
  $region15: #{discriminator_forward.9} parent=0 // pred_check_branch
    %377 = sbr.rel (0) target = $region17
  $region16: #{discriminator_forward.9} parent=0 // pred_region
    _
  $region17: #{discriminator_forward.9} parent=0 // pred_fallthru
    _
  // Predicated region
  $region18: #{discriminator_forward.9} parent=0 // pred_check
    _
  $region19: #{discriminator_forward.9} parent=0 // pred_check_branch
    %379 = sbr.rel (0) target = $region21
  $region20: #{discriminator_forward.9} parent=0 // pred_region
    _
  $region21: #{discriminator_forward.9} parent=0 // pred_fallthru
    _

// kernel: discriminator_forward.10
$region0: #{discriminator_forward.10}
  #allocation0 [shape = 'u32[]', space=smem, size = 0x4, offset = 0x4, fixed_abs, tag = 'smem constant byte address 0x4 - core index']
  #allocation1 [shape = 'u32[144,128]{1,0:T(1,128)}', space=vmem, size = 0x12000, scoped, tag = 'internal scratch']
  #allocation2 [shape = 'f32[48,2]{1,0:T(8,128)}', space=vmem, size = 0x6000, scoped, tag = 'scratch operand']
  %s0 = inlined_call_operand.vmem [shape: bf16[48,288], index: 0, kind: input, shape index: {}]
  %s1 = inlined_call_operand.vmem [shape: f32[48,2], index: 1, kind: input, shape index: {}]
  %s2 = inlined_call_operand.vmem [shape: bf16[288,128], index: 2, kind: input, shape index: {}]
  %s3 = inlined_call_operand.vmem [shape: bf16[48,128], index: 3, kind: output, shape index: {}]
  %s4 = sld [smem:[#allocation0]]
  $region22: #{discriminator_forward.10} parent=0
    _
  %s6 = ssub.s32 1, %s4
  %s7 = scalar_select 0, %s6, %s4
  // Predicated region
  $region2: #{discriminator_forward.10} parent=0 // pred_check
    _
  $region3: #{discriminator_forward.10} parent=0 // pred_check_branch
    %9 = sbr.rel (0) target = $region5
  $region4: #{discriminator_forward.10} parent=0 // pred_region
    _
  $region5: #{discriminator_forward.10} parent=0 // pred_fallthru
    _
  // Predicated region
  $region6: #{discriminator_forward.10} parent=0 // pred_check
    _
  $region7: #{discriminator_forward.10} parent=0 // pred_check_branch
    %11 = sbr.rel (0) target = $region9
  $region8: #{discriminator_forward.10} parent=0 // pred_region
    _
  $region9: #{discriminator_forward.10} parent=0 // pred_fallthru
    _
  // Predicated region
  $region10: #{discriminator_forward.10} parent=0 // pred_check
    _
  $region11: #{discriminator_forward.10} parent=0 // pred_check_branch
    %13 = sbr.rel (0) target = $region13
  $region12: #{discriminator_forward.10} parent=0 // pred_region
    _
  $region13: #{discriminator_forward.10} parent=0 // pred_fallthru
    _
  %v15 = vld [vmem:[%s0] sm:$0xff]
  %v16 = vld [vmem:[%s0 + $0x8] sm:$0xf]
  %v17 = vld [vmem:[%s0 + $0xc] sm:$0xff]
  %v18 = vld [vmem:[%s0 + $0x14] sm:$0xf]
  %v19 = vld [vmem:[%s0 + $0x18] sm:$0xff]
  %v20 = vld [vmem:[%s0 + $0x20] sm:$0xf]
  %v21 = vld [vmem:[%s0 + $0x24] sm:$0xff]
  %v22 = vld [vmem:[%s0 + $0x2c] sm:$0xf]
  %v23 = vld [vmem:[%s0 + $0x30] sm:$0xff]
  %v24 = vld [vmem:[%s0 + $0x38] sm:$0xf]
  %v25 = vld [vmem:[%s0 + $0x3c] sm:$0xff]
  %v26 = vld [vmem:[%s0 + $0x44] sm:$0xf]
  %v27 = vld [vmem:[%s2] sm:$0xf]
  %v28 = vld [vmem:[%s2 + $0x4] sm:$0xf]
  %v29 = vld [vmem:[%s2 + $0x8] sm:$0xf]
  %v30 = vld [vmem:[%s2 + $0xc] sm:$0xf]
  %v31 = vld [vmem:[%s2 + $0x10] sm:$0xf]
  %v32 = vld [vmem:[%s2 + $0x14] sm:$0xf]
  %v33 = vld [vmem:[%s2 + $0x18] sm:$0xf]
  %v34 = vld [vmem:[%s2 + $0x1c] sm:$0xf]
  %v35 = vld [vmem:[%s2 + $0x20] sm:$0xf]
  %v36 = vld [vmem:[%s2 + $0x24] sm:$0xf]
  %v37 = vld [vmem:[%s2 + $0x28] sm:$0xf]
  %v38 = vld [vmem:[%s2 + $0x2c] sm:$0xf]
  %v39 = vld [vmem:[%s2 + $0x30] sm:$0xf]
  %v40 = vld [vmem:[%s2 + $0x34] sm:$0xf]
  %v41 = vld [vmem:[%s2 + $0x38] sm:$0xf]
  %v42 = vld [vmem:[%s2 + $0x3c] sm:$0xf]
  %v43 = vld [vmem:[%s2 + $0x40] sm:$0xf]
  %v44 = vld [vmem:[%s2 + $0x44] sm:$0xf]
  %v45 = vld [vmem:[%s2 + $0x48] sm:$0xf]
  %v46 = vld [vmem:[%s2 + $0x4c] sm:$0xf]
  %v47 = vld [vmem:[%s2 + $0x50] sm:$0xf]
  %v48 = vld [vmem:[%s2 + $0x54] sm:$0xf]
  %v49 = vld [vmem:[%s2 + $0x58] sm:$0xf]
  %v50 = vld [vmem:[%s2 + $0x5c] sm:$0xf]
  %v51 = vld [vmem:[%s2 + $0x60] sm:$0xf]
  %v52 = vld [vmem:[%s2 + $0x64] sm:$0xf]
  %v53 = vld [vmem:[%s2 + $0x68] sm:$0xf]
  %v54 = vld [vmem:[%s2 + $0x6c] sm:$0xf]
  %v55 = vld [vmem:[%s2 + $0x70] sm:$0xf]
  %v56 = vld [vmem:[%s2 + $0x74] sm:$0xf]
  %v57 = vld [vmem:[%s2 + $0x78] sm:$0xf]
  %v58 = vld [vmem:[%s2 + $0x7c] sm:$0xf]
  %v59 = vld [vmem:[%s2 + $0x80] sm:$0xf]
  %v60 = vld [vmem:[%s2 + $0x84] sm:$0xf]
  %v61 = vld [vmem:[%s2 + $0x88] sm:$0xf]
  %v62 = vld [vmem:[%s2 + $0x8c] sm:$0xf]
  %v75 = vunpack.c.l.b16 %v15
  %v76 = vunpack.c.h.b16 %v15
  %v77 = vunpack.c.l.b16 %v16
  %v78 = vunpack.c.l.b16 %v17
  %v79 = vunpack.c.h.b16 %v17
  %v80 = vunpack.c.l.b16 %v18
  %v81 = vunpack.c.l.b16 %v19
  %v82 = vunpack.c.h.b16 %v19
  %v83 = vunpack.c.l.b16 %v20
  %v84 = vunpack.c.l.b16 %v21
  %v85 = vunpack.c.h.b16 %v21
  %v86 = vunpack.c.l.b16 %v22
  %v87 = vunpack.c.l.b16 %v23
  %v88 = vunpack.c.h.b16 %v23
  %v89 = vunpack.c.l.b16 %v24
  %v90 = vunpack.c.l.b16 %v25
  %v91 = vunpack.c.h.b16 %v25
  %v92 = vunpack.c.l.b16 %v26
  %v93 = vpack.c.b16 %v78, %v75
  %v94 = vpack.c.b16 %v79, %v76
  %v95 = vpack.c.b16 %v80, %v77
  %v96 = vpack.c.b16 %v84, %v81
  %v97 = vpack.c.b16 %v85, %v82
  %v98 = vpack.c.b16 %v86, %v83
  %v99 = vpack.c.b16 %v90, %v87
  %v100 = vpack.c.b16 %v91, %v88
  %v101 = vpack.c.b16 %v92, %v89
  %v144 = vunpack.c.l.b16 %v27
  %v145 = vunpack.c.l.b16 %v28
  %v146 = vunpack.c.l.b16 %v29
  %v147 = vunpack.c.l.b16 %v30
  %v148 = vunpack.c.l.b16 %v31
  %v149 = vunpack.c.l.b16 %v32
  %v150 = vunpack.c.l.b16 %v33
  %v151 = vunpack.c.l.b16 %v34
  %v152 = vunpack.c.l.b16 %v35
  %v153 = vunpack.c.l.b16 %v36
  %v154 = vunpack.c.l.b16 %v37
  %v155 = vunpack.c.l.b16 %v38
  %v156 = vunpack.c.l.b16 %v39
  %v157 = vunpack.c.l.b16 %v40
  %v158 = vunpack.c.l.b16 %v41
  %v159 = vunpack.c.l.b16 %v42
  %v160 = vunpack.c.l.b16 %v43
  %v161 = vunpack.c.l.b16 %v44
  %v162 = vunpack.c.l.b16 %v45
  %v163 = vunpack.c.l.b16 %v46
  %v164 = vunpack.c.l.b16 %v47
  %v165 = vunpack.c.l.b16 %v48
  %v166 = vunpack.c.l.b16 %v49
  %v167 = vunpack.c.l.b16 %v50
  %v168 = vunpack.c.l.b16 %v51
  %v169 = vunpack.c.l.b16 %v52
  %v170 = vunpack.c.l.b16 %v53
  %v171 = vunpack.c.l.b16 %v54
  %v172 = vunpack.c.l.b16 %v55
  %v173 = vunpack.c.l.b16 %v56
  %v174 = vunpack.c.l.b16 %v57
  %v175 = vunpack.c.l.b16 %v58
  %v176 = vunpack.c.l.b16 %v59
  %v177 = vunpack.c.l.b16 %v60
  %v178 = vunpack.c.l.b16 %v61
  %v179 = vunpack.c.l.b16 %v62
  %v180 = vpack.c.b16 %v145, %v144
  %v181 = vpack.c.b16 %v147, %v146
  %v182 = vpack.c.b16 %v149, %v148
  %v183 = vpack.c.b16 %v151, %v150
  %v184 = vpack.c.b16 %v153, %v152
  %v185 = vpack.c.b16 %v155, %v154
  %v186 = vpack.c.b16 %v157, %v156
  %v187 = vpack.c.b16 %v159, %v158
  %v188 = vpack.c.b16 %v161, %v160
  %v189 = vpack.c.b16 %v163, %v162
  %v190 = vpack.c.b16 %v165, %v164
  %v191 = vpack.c.b16 %v167, %v166
  %v192 = vpack.c.b16 %v169, %v168
  %v193 = vpack.c.b16 %v171, %v170
  %v194 = vpack.c.b16 %v173, %v172
  %v195 = vpack.c.b16 %v175, %v174
  %v196 = vpack.c.b16 %v177, %v176
  %v197 = vpack.c.b16 %v179, %v178
  %vm216 = vcmask 261120
  %v218 = vsel %vm216, %v95, 0
  %v221 = vsel %vm216, %v98, 0
  %v224 = vsel %vm216, %v101, 0
  %226 = vmatprep.subr.bf16.mxu0 0
  %227 = vmatpush1.bf16.msra.mxu0 %v187
  %228 = vmatprep.subr.bf16.mxu0 0
  %229 = vmatpush1.bf16.msra.mxu0 %v186
  %230 = vmatprep.subr.bf16.mxu0 0
  %231 = vmatpush1.bf16.msra.mxu0 %v185
  %232 = vmatprep.subr.bf16.mxu0 0
  %233 = vmatpush1.bf16.msra.mxu0 %v184
  %234 = vmatprep.subr.bf16.mxu0 0
  %235 = vmatpush1.bf16.msra.mxu0 %v183
  %236 = vmatprep.subr.bf16.mxu0 0
  %237 = vmatpush1.bf16.msra.mxu0 %v182
  %238 = vmatprep.subr.bf16.mxu0 0
  %239 = vmatpush1.bf16.msra.mxu0 %v181
  %240 = vmatprep.subr.bf16.mxu0 0
  %241 = vmatpush1.bf16.msra.mxu0 %v180
  %242 = vmatprep.subr.bf16.mxu0 0
  %243 = vmatpush2.bf16.msra.mxu0 %v195
  %244 = vmatprep.subr.bf16.mxu0 0
  %245 = vmatpush2.bf16.msra.mxu0 %v194
  %246 = vmatprep.subr.bf16.mxu0 0
  %247 = vmatpush2.bf16.msra.mxu0 %v193
  %248 = vmatprep.subr.bf16.mxu0 0
  %249 = vmatpush2.bf16.msra.mxu0 %v192
  %250 = vmatprep.subr.bf16.mxu0 0
  %251 = vmatpush2.bf16.msra.mxu0 %v191
  %252 = vmatprep.subr.bf16.mxu0 0
  %253 = vmatpush2.bf16.msra.mxu0 %v190
  %254 = vmatprep.subr.bf16.mxu0 0
  %255 = vmatpush2.bf16.msra.mxu0 %v189
  %256 = vmatprep.subr.bf16.mxu0 0
  %257 = vmatpush2.bf16.msra.mxu0 %v188
  %258 = vmatprep.mubr.bf16.mxu0 %v94
  %259 = vmatmul.mubr.bf16.gmra.mxu0 %v93
  %v260 = vpop.f32.mrf.mxu0
  %v261 = vadd.f32 0.0, %v260
  %v262 = vpop.f32.mrf.mxu0
  %v263 = vpop.f32.mrf.mxu0
  %v264 = vadd.f32 0.0, %v263
  %v265 = vpop.f32.mrf.mxu0
  %266 = vmatprep.mubr.bf16.mxu0 %v97
  %267 = vmatmul.mubr.bf16.gmra.mxu0 %v96
  %v268 = vpop.f32.mrf.mxu0
  %v269 = vadd.f32 0.0, %v268
  %v270 = vpop.f32.mrf.mxu0
  %v271 = vpop.f32.mrf.mxu0
  %v272 = vadd.f32 0.0, %v271
  %v273 = vpop.f32.mrf.mxu0
  %274 = vmatprep.mubr.bf16.mxu0 %v100
  %275 = vmatmul.mubr.bf16.gmra.mxu0 %v99
  %v276 = vpop.f32.mrf.mxu0
  %v277 = vadd.f32 0.0, %v276
  %v278 = vpop.f32.mrf.mxu0
  %v279 = vpop.f32.mrf.mxu0
  %v280 = vadd.f32 0.0, %v279
  %v281 = vpop.f32.mrf.mxu0
  %282 = vdwg.mxu0
  %283 = vmatprep.subr.bf16.mxu0 0
  %284 = vmatpush1.bf16.msra.mxu0 0
  %285 = vmatprep.subr.bf16.mxu0 0
  %286 = vmatpush1.bf16.msra.mxu0 0
  %287 = vmatprep.subr.bf16.mxu0 0
  %288 = vmatpush1.bf16.msra.mxu0 0
  %289 = vmatprep.subr.bf16.mxu0 0
  %290 = vmatpush1.bf16.msra.mxu0 0
  %291 = vmatprep.subr.bf16.mxu0 0
  %292 = vmatpush1.bf16.msra.mxu0 0
  %293 = vmatprep.subr.bf16.mxu0 0
  %294 = vmatpush1.bf16.msra.mxu0 0
  %295 = vmatprep.subr.bf16.mxu0 0
  %296 = vmatpush1.bf16.msra.mxu0 %v197
  %297 = vmatprep.subr.bf16.mxu0 0
  %298 = vmatpush1.bf16.msra.mxu0 %v196
  %299 = vmatprep.subr.bf16.mxu0 0
  %300 = vmatpush2.bf16.msra.mxu0 0
  %301 = vmatprep.subr.bf16.mxu0 0
  %302 = vmatpush2.bf16.msra.mxu0 0
  %303 = vmatprep.subr.bf16.mxu0 0
  %304 = vmatpush2.bf16.msra.mxu0 0
  %305 = vmatprep.subr.bf16.mxu0 0
  %306 = vmatpush2.bf16.msra.mxu0 0
  %307 = vmatprep.subr.bf16.mxu0 0
  %308 = vmatpush2.bf16.msra.mxu0 0
  %309 = vmatprep.subr.bf16.mxu0 0
  %310 = vmatpush2.bf16.msra.mxu0 0
  %311 = vmatprep.subr.bf16.mxu0 0
  %312 = vmatpush2.bf16.msra.mxu0 0
  %313 = vmatprep.subr.bf16.mxu0 0
  %314 = vmatpush2.bf16.msra.mxu0 0
  %315 = vmatprep.mubr.bf16.mxu0 0
  %316 = vmatmul.mubr.bf16.gmra.mxu0 %v218
  %v317 = vpop.f32.mrf.mxu0
  %v318 = vadd.f32 %v261, %v317
  %v319 = vpop.f32.mrf.mxu0
  %v320 = vpop.f32.mrf.mxu0
  %v321 = vadd.f32 %v264, %v320
  %v322 = vpop.f32.mrf.mxu0
  %323 = vmatprep.mubr.bf16.mxu0 0
  %324 = vmatmul.mubr.bf16.gmra.mxu0 %v221
  %v325 = vpop.f32.mrf.mxu0
  %v326 = vadd.f32 %v269, %v325
  %v327 = vpop.f32.mrf.mxu0
  %v328 = vpop.f32.mrf.mxu0
  %v329 = vadd.f32 %v272, %v328
  %v330 = vpop.f32.mrf.mxu0
  %331 = vmatprep.mubr.bf16.mxu0 0
  %332 = vmatmul.mubr.bf16.gmra.mxu0 %v224
  %v333 = vpop.f32.mrf.mxu0
  %v334 = vadd.f32 %v277, %v333
  %v335 = vpop.f32.mrf.mxu0
  %v336 = vpop.f32.mrf.mxu0
  %v337 = vadd.f32 %v280, %v336
  %v338 = vpop.f32.mrf.mxu0
  %339 = vdwg.mxu0
  %340 = vadd.xlane.f32.xlu0 %v318
  %v341 = vpop.xlane.xlu0 %340
  %342 = vadd.xlane.f32.xlu0 %v321
  %v343 = vpop.xlane.xlu0 %342
  %344 = vadd.xlane.f32.xlu0 %v326
  %v345 = vpop.xlane.xlu0 %344
  %346 = vadd.xlane.f32.xlu0 %v329
  %v347 = vpop.xlane.xlu0 %346
  %348 = vadd.xlane.f32.xlu0 %v334
  %v349 = vpop.xlane.xlu0 %348
  %350 = vadd.xlane.f32.xlu0 %v337
  %v351 = vpop.xlane.xlu0 %350
  %v352 = vmul.f32 %v318, %v318
  %v353 = vmul.f32 %v321, %v321
  %v354 = vmul.f32 %v326, %v326
  %v355 = vmul.f32 %v329, %v329
  %v356 = vmul.f32 %v334, %v334
  %v357 = vmul.f32 %v337, %v337
  %358 = vadd.xlane.f32.xlu0 %v352
  %v359 = vpop.xlane.xlu0 %358
  %360 = vadd.xlane.f32.xlu0 %v353
  %v361 = vpop.xlane.xlu0 %360
  %362 = vadd.xlane.f32.xlu0 %v354
  %v363 = vpop.xlane.xlu0 %362
  %364 = vadd.xlane.f32.xlu0 %v355
  %v365 = vpop.xlane.xlu0 %364
  %366 = vadd.xlane.f32.xlu0 %v356
  %v367 = vpop.xlane.xlu0 %366
  %368 = vadd.xlane.f32.xlu0 %v357
  %v369 = vpop.xlane.xlu0 %368
  %v370 = vmul.f32 %v341, 0.03125
  %v371 = vmul.f32 %v343, 0.03125
  %v372 = vmul.f32 %v345, 0.03125
  %v373 = vmul.f32 %v347, 0.03125
  %v374 = vmul.f32 %v349, 0.03125
  %v375 = vmul.f32 %v351, 0.03125
  %v376 = vmul.f32 %v359, 0.03125
  %v377 = vmul.f32 %v361, 0.03125
  %v378 = vmul.f32 %v363, 0.03125
  %v379 = vmul.f32 %v365, 0.03125
  %v380 = vmul.f32 %v367, 0.03125
  %v381 = vmul.f32 %v369, 0.03125
  %v382 = vmul.f32 %v370, %v370
  %v383 = vmul.f32 %v371, %v371
  %v384 = vmul.f32 %v372, %v372
  %v385 = vmul.f32 %v373, %v373
  %v386 = vmul.f32 %v374, %v374
  %v387 = vmul.f32 %v375, %v375
  %v388 = vsub.f32 %v376, %v382
  %v389 = vsub.f32 %v377, %v383
  %v390 = vsub.f32 %v378, %v384
  %v391 = vsub.f32 %v379, %v385
  %v392 = vsub.f32 %v380, %v386
  %v393 = vsub.f32 %v381, %v387
  %v394 = vmax.f32 %v388, 0.0
  %v395 = vmax.f32 %v389, 0.0
  %v396 = vmax.f32 %v390, 0.0
  %v397 = vmax.f32 %v391, 0.0
  %v398 = vmax.f32 %v392, 0.0
  %v399 = vmax.f32 %v393, 0.0
  %v400 = vld [vmem:[%s1] sm:$0xff]
  %v401 = vld [vmem:[%s1 + $0x8] sm:$0xff]
  %v402 = vld [vmem:[%s1 + $0x10] sm:$0xff]
  %v403 = vld [vmem:[%s1 + $0x18] sm:$0xff]
  %v404 = vld [vmem:[%s1 + $0x20] sm:$0xff]
  %v405 = vld [vmem:[%s1 + $0x28] sm:$0xff]
  %v406 = vadd.f32 %v394, 1e-05
  %v407 = vadd.f32 %v395, 1e-05
  %v408 = vadd.f32 %v396, 1e-05
  %v409 = vadd.f32 %v397, 1e-05
  %v410 = vadd.f32 %v398, 1e-05
  %v411 = vadd.f32 %v399, 1e-05
  %v412 = vrsqrt.pop %v406
  %v413 = vrsqrt.pop %v407
  %v414 = vrsqrt.pop %v408
  %v415 = vrsqrt.pop %v409
  %v416 = vrsqrt.pop %v410
  %v417 = vrsqrt.pop %v411
  %v418 = vmul.f32 %v400, %v412
  %v419 = vmul.f32 %v401, %v413
  %v420 = vmul.f32 %v402, %v414
  %v421 = vmul.f32 %v403, %v415
  %v422 = vmul.f32 %v404, %v416
  %v423 = vmul.f32 %v405, %v417
  %v424 = vmul.f32 %v370, %v418
  %v425 = vmul.f32 %v371, %v419
  %v426 = vmul.f32 %v372, %v420
  %v427 = vmul.f32 %v373, %v421
  %v428 = vmul.f32 %v374, %v422
  %v429 = vmul.f32 %v375, %v423
  %436 = vrot.lane.b32.xlu0 %v424, 1
  %v437 = vpop.permute.xlu0 %436
  %438 = vrot.lane.b32.xlu0 %v425, 1
  %v439 = vpop.permute.xlu0 %438
  %440 = vrot.lane.b32.xlu0 %v426, 1
  %v441 = vpop.permute.xlu0 %440
  %442 = vrot.lane.b32.xlu0 %v427, 1
  %v443 = vpop.permute.xlu0 %442
  %444 = vrot.lane.b32.xlu0 %v428, 1
  %v445 = vpop.permute.xlu0 %444
  %446 = vrot.lane.b32.xlu0 %v429, 1
  %v447 = vpop.permute.xlu0 %446
  %v454 = vsub.f32 %v400, %v437
  %v455 = vsub.f32 %v401, %v439
  %v456 = vsub.f32 %v402, %v441
  %v457 = vsub.f32 %v403, %v443
  %v458 = vsub.f32 %v404, %v445
  %v459 = vsub.f32 %v405, %v447
  %461 = vset.pattern.permute.xlu0 0
  %462 = vperm.xlu0 %461, %v418
  %v463 = vpop.permute.xlu0 %462
  %466 = vset.pattern.permute.xlu0 0
  %467 = vperm.xlu0 %466, %v419
  %v468 = vpop.permute.xlu0 %467
  %471 = vset.pattern.permute.xlu0 0
  %472 = vperm.xlu0 %471, %v420
  %v473 = vpop.permute.xlu0 %472
  %476 = vset.pattern.permute.xlu0 0
  %477 = vperm.xlu0 %476, %v421
  %v478 = vpop.permute.xlu0 %477
  %481 = vset.pattern.permute.xlu0 0
  %482 = vperm.xlu0 %481, %v422
  %v483 = vpop.permute.xlu0 %482
  %486 = vset.pattern.permute.xlu0 0
  %487 = vperm.xlu0 %486, %v423
  %v488 = vpop.permute.xlu0 %487
  %v490 = vmul.f32 %v318, %v463
  %v491 = vmul.f32 %v321, %v468
  %v492 = vmul.f32 %v326, %v473
  %v493 = vmul.f32 %v329, %v478
  %v494 = vmul.f32 %v334, %v483
  %v495 = vmul.f32 %v337, %v488
  %497 = vset.pattern.permute.xlu0 1
  %498 = vperm.xlu0 %497, %v454
  %v499 = vpop.permute.xlu0 %498
  %502 = vset.pattern.permute.xlu0 1
  %503 = vperm.xlu0 %502, %v455
  %v504 = vpop.permute.xlu0 %503
  %507 = vset.pattern.permute.xlu0 1
  %508 = vperm.xlu0 %507, %v456
  %v509 = vpop.permute.xlu0 %508
  %512 = vset.pattern.permute.xlu0 1
  %513 = vperm.xlu0 %512, %v457
  %v514 = vpop.permute.xlu0 %513
  %517 = vset.pattern.permute.xlu0 1
  %518 = vperm.xlu0 %517, %v458
  %v519 = vpop.permute.xlu0 %518
  %522 = vset.pattern.permute.xlu0 1
  %523 = vperm.xlu0 %522, %v459
  %v524 = vpop.permute.xlu0 %523
  %v526 = vadd.f32 %v490, %v499
  %v527 = vadd.f32 %v491, %v504
  %v528 = vadd.f32 %v492, %v509
  %v529 = vadd.f32 %v493, %v514
  %v530 = vadd.f32 %v494, %v519
  %v531 = vadd.f32 %v495, %v524
  %vm532 = vcmp.ge.f32.partialorder %v526, 0.0
  %vm533 = vcmp.ge.f32.partialorder %v527, 0.0
  %vm534 = vcmp.ge.f32.partialorder %v528, 0.0
  %vm535 = vcmp.ge.f32.partialorder %v529, 0.0
  %vm536 = vcmp.ge.f32.partialorder %v530, 0.0
  %vm537 = vcmp.ge.f32.partialorder %v531, 0.0
  %v538 = vmul.f32 %v526, 0.2
  %v539 = vmul.f32 %v527, 0.2
  %v540 = vmul.f32 %v528, 0.2
  %v541 = vmul.f32 %v529, 0.2
  %v542 = vmul.f32 %v530, 0.2
  %v543 = vmul.f32 %v531, 0.2
  %v544 = vsel %vm532, %v526, %v538
  %v545 = vsel %vm533, %v527, %v539
  %v546 = vsel %vm534, %v528, %v540
  %v547 = vsel %vm535, %v529, %v541
  %v548 = vsel %vm536, %v530, %v542
  %v549 = vsel %vm537, %v531, %v543
  %v550 = vpack.c.bf16 %v545, %v544
  %v551 = vpack.c.bf16 %v547, %v546
  %v552 = vpack.c.bf16 %v549, %v548
  %v556 = vunpack.c.l.b16 %v550
  %v557 = vunpack.c.h.b16 %v550
  %v558 = vunpack.c.l.b16 %v551
  %v559 = vunpack.c.h.b16 %v551
  %v560 = vunpack.c.l.b16 %v552
  %v561 = vunpack.c.h.b16 %v552
  %v562 = vpack.c.b16 %v556, %v556
  %v563 = vpack.c.b16 %v557, %v557
  %v564 = vpack.c.b16 %v558, %v558
  %v565 = vpack.c.b16 %v559, %v559
  %v566 = vpack.c.b16 %v560, %v560
  %v567 = vpack.c.b16 %v561, %v561
  %574 = vst [vmem:[%s3] sm:$0xf] %v562
  %575 = vst [vmem:[%s3 + $0x4] sm:$0xf] %v563
  %576 = vst [vmem:[%s3 + $0x8] sm:$0xf] %v564
  %577 = vst [vmem:[%s3 + $0xc] sm:$0xf] %v565
  %578 = vst [vmem:[%s3 + $0x10] sm:$0xf] %v566
  %579 = vst [vmem:[%s3 + $0x14] sm:$0xf] %v567
  // Predicated region
  $region14: #{discriminator_forward.10} parent=0 // pred_check
    _
  $region15: #{discriminator_forward.10} parent=0 // pred_check_branch
    %581 = sbr.rel (0) target = $region17
  $region16: #{discriminator_forward.10} parent=0 // pred_region
    _
  $region17: #{discriminator_forward.10} parent=0 // pred_fallthru
    _
  // Predicated region
  $region18: #{discriminator_forward.10} parent=0 // pred_check
    _
  $region19: #{discriminator_forward.10} parent=0 // pred_check_branch
    %583 = sbr.rel (0) target = $region21
  $region20: #{discriminator_forward.10} parent=0 // pred_region
    _
  $region21: #{discriminator_forward.10} parent=0 // pred_fallthru
    _

// kernel: discriminator_forward.11
$region0: #{discriminator_forward.11}
  #allocation0 [shape = 'u32[]', space=smem, size = 0x4, offset = 0x4, fixed_abs, tag = 'smem constant byte address 0x4 - core index']
  #allocation1 [shape = 'u32[144,128]{1,0:T(1,128)}', space=vmem, size = 0x12000, scoped, tag = 'internal scratch']
  %s0 = inlined_call_operand.vmem [shape: bf16[2,768], index: 0, kind: input, shape index: {}]
  %s1 = inlined_call_operand.vmem [shape: bf16[768,8], index: 1, kind: input, shape index: {}]
  %s2 = inlined_call_operand.vmem [shape: f32[1,7], index: 2, kind: input, shape index: {}]
  %s3 = inlined_call_operand.vmem [shape: f32[2,1], index: 3, kind: output, shape index: {0}]
  %s4 = inlined_call_operand.hbm [shape: f32[2,7], index: 4, kind: output, shape index: {1}]
  %5 = xla_tuple %s3, %s4
  %s6 = sld [smem:[#allocation0]]
  $region30: #{discriminator_forward.11} parent=0
    _
  %s8 = ssub.s32 1, %s6
  %s9 = scalar_select 0, %s8, %s6
  $region1: #{discriminator_forward.11} parent=0
    #allocation2 [shape = 'u8[1024]{0}', space=vmem, size = 0x400, scoped, tag = 'output window, operand 1, single buffered']
    #allocation3 [shape = 's32[1]{0}', space=sflag, size = 0x4, scoped, tag = 'scoped memory for discriminator_forward.11']
    %10 = vsyncpa [#allocation3], 0
    // Predicated region
    $region2: #{discriminator_forward.11} parent=1 // pred_check
      _
    $region3: #{discriminator_forward.11} parent=1 // pred_check_branch
      %12 = sbr.rel (0) target = $region5
    $region4: #{discriminator_forward.11} parent=1 // pred_region
      _
    $region5: #{discriminator_forward.11} parent=1 // pred_fallthru
      _
    // Predicated region
    $region6: #{discriminator_forward.11} parent=1 // pred_check
      _
    $region7: #{discriminator_forward.11} parent=1 // pred_check_branch
      %14 = sbr.rel (0) target = $region9
    $region8: #{discriminator_forward.11} parent=1 // pred_region
      _
    $region9: #{discriminator_forward.11} parent=1 // pred_fallthru
      _
    // Predicated region
    $region10: #{discriminator_forward.11} parent=1 // pred_check
      _
    $region11: #{discriminator_forward.11} parent=1 // pred_check_branch
      %16 = sbr.rel (0) target = $region13
    $region12: #{discriminator_forward.11} parent=1 // pred_region
      _
    $region13: #{discriminator_forward.11} parent=1 // pred_fallthru
      _
    %v18 = vld [vmem:[%s0] sm:$0x3f]
    %v19 = vld [vmem:[%s1] sm:$0xf]
    %v20 = vld [vmem:[%s1 + $0x4] sm:$0xf]
    %v21 = vld [vmem:[%s1 + $0x8] sm:$0xf]
    %v22 = vld [vmem:[%s1 + $0xc] sm:$0xf]
    %v23 = vld [vmem:[%s1 + $0x10] sm:$0xf]
    %v24 = vld [vmem:[%s1 + $0x14] sm:$0xf]
    %v25 = vld [vmem:[%s1 + $0x18] sm:$0xf]
    %v26 = vld [vmem:[%s1 + $0x1c] sm:$0xf]
    %v27 = vld [vmem:[%s1 + $0x20] sm:$0xf]
    %v28 = vld [vmem:[%s1 + $0x24] sm:$0xf]
    %v29 = vld [vmem:[%s1 + $0x28] sm:$0xf]
    %v30 = vld [vmem:[%s1 + $0x2c] sm:$0xf]
    %v31 = vld [vmem:[%s1 + $0x30] sm:$0xf]
    %v32 = vld [vmem:[%s1 + $0x34] sm:$0xf]
    %v33 = vld [vmem:[%s1 + $0x38] sm:$0xf]
    %v34 = vld [vmem:[%s1 + $0x3c] sm:$0xf]
    %v35 = vld [vmem:[%s1 + $0x40] sm:$0xf]
    %v36 = vld [vmem:[%s1 + $0x44] sm:$0xf]
    %v37 = vld [vmem:[%s1 + $0x48] sm:$0xf]
    %v38 = vld [vmem:[%s1 + $0x4c] sm:$0xf]
    %v39 = vld [vmem:[%s1 + $0x50] sm:$0xf]
    %v40 = vld [vmem:[%s1 + $0x54] sm:$0xf]
    %v41 = vld [vmem:[%s1 + $0x58] sm:$0xf]
    %v42 = vld [vmem:[%s1 + $0x5c] sm:$0xf]
    %v43 = vld [vmem:[%s1 + $0x60] sm:$0xf]
    %v44 = vld [vmem:[%s1 + $0x64] sm:$0xf]
    %v45 = vld [vmem:[%s1 + $0x68] sm:$0xf]
    %v46 = vld [vmem:[%s1 + $0x6c] sm:$0xf]
    %v47 = vld [vmem:[%s1 + $0x70] sm:$0xf]
    %v48 = vld [vmem:[%s1 + $0x74] sm:$0xf]
    %v49 = vld [vmem:[%s1 + $0x78] sm:$0xf]
    %v50 = vld [vmem:[%s1 + $0x7c] sm:$0xf]
    %v51 = vld [vmem:[%s1 + $0x80] sm:$0xf]
    %v52 = vld [vmem:[%s1 + $0x84] sm:$0xf]
    %v53 = vld [vmem:[%s1 + $0x88] sm:$0xf]
    %v54 = vld [vmem:[%s1 + $0x8c] sm:$0xf]
    %v55 = vld [vmem:[%s1 + $0x90] sm:$0xf]
    %v56 = vld [vmem:[%s1 + $0x94] sm:$0xf]
    %v57 = vld [vmem:[%s1 + $0x98] sm:$0xf]
    %v58 = vld [vmem:[%s1 + $0x9c] sm:$0xf]
    %v59 = vld [vmem:[%s1 + $0xa0] sm:$0xf]
    %v60 = vld [vmem:[%s1 + $0xa4] sm:$0xf]
    %v61 = vld [vmem:[%s1 + $0xa8] sm:$0xf]
    %v62 = vld [vmem:[%s1 + $0xac] sm:$0xf]
    %v63 = vld [vmem:[%s1 + $0xb0] sm:$0xf]
    %v64 = vld [vmem:[%s1 + $0xb4] sm:$0xf]
    %v65 = vld [vmem:[%s1 + $0xb8] sm:$0xf]
    %v66 = vld [vmem:[%s1 + $0xbc] sm:$0xf]
    %v67 = vld [vmem:[%s1 + $0xc0] sm:$0xf]
    %v68 = vld [vmem:[%s1 + $0xc4] sm:$0xf]
    %v69 = vld [vmem:[%s1 + $0xc8] sm:$0xf]
    %v70 = vld [vmem:[%s1 + $0xcc] sm:$0xf]
    %v71 = vld [vmem:[%s1 + $0xd0] sm:$0xf]
    %v72 = vld [vmem:[%s1 + $0xd4] sm:$0xf]
    %v73 = vld [vmem:[%s1 + $0xd8] sm:$0xf]
    %v74 = vld [vmem:[%s1 + $0xdc] sm:$0xf]
    %v75 = vld [vmem:[%s1 + $0xe0] sm:$0xf]
    %v76 = vld [vmem:[%s1 + $0xe4] sm:$0xf]
    %v77 = vld [vmem:[%s1 + $0xe8] sm:$0xf]
    %v78 = vld [vmem:[%s1 + $0xec] sm:$0xf]
    %v79 = vld [vmem:[%s1 + $0xf0] sm:$0xf]
    %v80 = vld [vmem:[%s1 + $0xf4] sm:$0xf]
    %v81 = vld [vmem:[%s1 + $0xf8] sm:$0xf]
    %v82 = vld [vmem:[%s1 + $0xfc] sm:$0xf]
    %v83 = vld [vmem:[%s1 + $0x100] sm:$0xf]
    %v84 = vld [vmem:[%s1 + $0x104] sm:$0xf]
    %v85 = vld [vmem:[%s1 + $0x108] sm:$0xf]
    %v86 = vld [vmem:[%s1 + $0x10c] sm:$0xf]
    %v87 = vld [vmem:[%s1 + $0x110] sm:$0xf]
    %v88 = vld [vmem:[%s1 + $0x114] sm:$0xf]
    %v89 = vld [vmem:[%s1 + $0x118] sm:$0xf]
    %v90 = vld [vmem:[%s1 + $0x11c] sm:$0xf]
    %v91 = vld [vmem:[%s1 + $0x120] sm:$0xf]
    %v92 = vld [vmem:[%s1 + $0x124] sm:$0xf]
    %v93 = vld [vmem:[%s1 + $0x128] sm:$0xf]
    %v94 = vld [vmem:[%s1 + $0x12c] sm:$0xf]
    %v95 = vld [vmem:[%s1 + $0x130] sm:$0xf]
    %v96 = vld [vmem:[%s1 + $0x134] sm:$0xf]
    %v97 = vld [vmem:[%s1 + $0x138] sm:$0xf]
    %v98 = vld [vmem:[%s1 + $0x13c] sm:$0xf]
    %v99 = vld [vmem:[%s1 + $0x140] sm:$0xf]
    %v100 = vld [vmem:[%s1 + $0x144] sm:$0xf]
    %v101 = vld [vmem:[%s1 + $0x148] sm:$0xf]
    %v102 = vld [vmem:[%s1 + $0x14c] sm:$0xf]
    %v103 = vld [vmem:[%s1 + $0x150] sm:$0xf]
    %v104 = vld [vmem:[%s1 + $0x154] sm:$0xf]
    %v105 = vld [vmem:[%s1 + $0x158] sm:$0xf]
    %v106 = vld [vmem:[%s1 + $0x15c] sm:$0xf]
    %v107 = vld [vmem:[%s1 + $0x160] sm:$0xf]
    %v108 = vld [vmem:[%s1 + $0x164] sm:$0xf]
    %v109 = vld [vmem:[%s1 + $0x168] sm:$0xf]
    %v110 = vld [vmem:[%s1 + $0x16c] sm:$0xf]
    %v111 = vld [vmem:[%s1 + $0x170] sm:$0xf]
    %v112 = vld [vmem:[%s1 + $0x174] sm:$0xf]
    %v113 = vld [vmem:[%s1 + $0x178] sm:$0xf]
    %v114 = vld [vmem:[%s1 + $0x17c] sm:$0xf]
    %v116 = vcombine.high %v18, %v18
    %v118 = vunpack.c.l.s4 1966171168
    %v119 = vunpack.c.0.s8 %v118
    %v120 = vlaneseq
    %v121 = vshrl.u32 %v120, 7
    %v122 = vsub.s32 %v119, %v121
    %v123 = vrot.slane %v18, %v122
    %v125 = vunpack.c.l.s4 1966171168
    %v126 = vunpack.c.0.s8 %v125
    %v127 = vlaneseq
    %v128 = vshrl.u32 %v127, 7
    %v129 = vsub.s32 %v126, %v128
    %v130 = vrot.slane %v116, %v129
    %v131 = vcombine.high %v123, %v123
    %v132 = vcombine.high %v130, %v130
    %v134 = vunpack.c.l.s4 1966171168
    %v135 = vunpack.c.0.s8 %v134
    %v136 = vlaneseq
    %v137 = vshrl.u32 %v136, 7
    %v138 = vsub.s32 %v135, %v137
    %v139 = vrot.slane %v123, %v138
    %v141 = vunpack.c.l.s4 1966171168
    %v142 = vunpack.c.0.s8 %v141
    %v143 = vlaneseq
    %v144 = vshrl.u32 %v143, 7
    %v145 = vsub.s32 %v142, %v144
    %v146 = vrot.slane %v130, %v145
    %v148 = vunpack.c.l.s4 1966171168
    %v149 = vunpack.c.0.s8 %v148
    %v150 = vlaneseq
    %v151 = vshrl.u32 %v150, 7
    %v152 = vsub.s32 %v149, %v151
    %v153 = vrot.slane %v131, %v152
    %v155 = vunpack.c.l.s4 1966171168
    %v156 = vunpack.c.0.s8 %v155
    %v157 = vlaneseq
    %v158 = vshrl.u32 %v157, 7
    %v159 = vsub.s32 %v156, %v158
    %v160 = vrot.slane %v132, %v159
    %v161 = vcombine.high %v139, %v139
    %v162 = vcombine.high %v153, %v153
    %v265 = vunpack.c.l.b16 %v19
    %v266 = vunpack.c.l.b16 %v20
    %v267 = vunpack.c.l.b16 %v21
    %v268 = vunpack.c.l.b16 %v22
    %v269 = vunpack.c.l.b16 %v23
    %v270 = vunpack.c.l.b16 %v24
    %v271 = vunpack.c.l.b16 %v25
    %v272 = vunpack.c.l.b16 %v26
    %v273 = vunpack.c.l.b16 %v27
    %v274 = vunpack.c.l.b16 %v28
    %v275 = vunpack.c.l.b16 %v29
    %v276 = vunpack.c.l.b16 %v30
    %v277 = vunpack.c.l.b16 %v31
    %v278 = vunpack.c.l.b16 %v32
    %v279 = vunpack.c.l.b16 %v33
    %v280 = vunpack.c.l.b16 %v34
    %v281 = vunpack.c.l.b16 %v35
    %v282 = vunpack.c.l.b16 %v36
    %v283 = vunpack.c.l.b16 %v37
    %v284 = vunpack.c.l.b16 %v38
    %v285 = vunpack.c.l.b16 %v39
    %v286 = vunpack.c.l.b16 %v40
    %v287 = vunpack.c.l.b16 %v41
    %v288 = vunpack.c.l.b16 %v42
    %v289 = vunpack.c.l.b16 %v43
    %v290 = vunpack.c.l.b16 %v44
    %v291 = vunpack.c.l.b16 %v45
    %v292 = vunpack.c.l.b16 %v46
    %v293 = vunpack.c.l.b16 %v47
    %v294 = vunpack.c.l.b16 %v48
    %v295 = vunpack.c.l.b16 %v49
    %v296 = vunpack.c.l.b16 %v50
    %v297 = vunpack.c.l.b16 %v51
    %v298 = vunpack.c.l.b16 %v52
    %v299 = vunpack.c.l.b16 %v53
    %v300 = vunpack.c.l.b16 %v54
    %v301 = vunpack.c.l.b16 %v55
    %v302 = vunpack.c.l.b16 %v56
    %v303 = vunpack.c.l.b16 %v57
    %v304 = vunpack.c.l.b16 %v58
    %v305 = vunpack.c.l.b16 %v59
    %v306 = vunpack.c.l.b16 %v60
    %v307 = vunpack.c.l.b16 %v61
    %v308 = vunpack.c.l.b16 %v62
    %v309 = vunpack.c.l.b16 %v63
    %v310 = vunpack.c.l.b16 %v64
    %v311 = vunpack.c.l.b16 %v65
    %v312 = vunpack.c.l.b16 %v66
    %v313 = vunpack.c.l.b16 %v67
    %v314 = vunpack.c.l.b16 %v68
    %v315 = vunpack.c.l.b16 %v69
    %v316 = vunpack.c.l.b16 %v70
    %v317 = vunpack.c.l.b16 %v71
    %v318 = vunpack.c.l.b16 %v72
    %v319 = vunpack.c.l.b16 %v73
    %v320 = vunpack.c.l.b16 %v74
    %v321 = vunpack.c.l.b16 %v75
    %v322 = vunpack.c.l.b16 %v76
    %v323 = vunpack.c.l.b16 %v77
    %v324 = vunpack.c.l.b16 %v78
    %v325 = vunpack.c.l.b16 %v79
    %v326 = vunpack.c.l.b16 %v80
    %v327 = vunpack.c.l.b16 %v81
    %v328 = vunpack.c.l.b16 %v82
    %v329 = vunpack.c.l.b16 %v83
    %v330 = vunpack.c.l.b16 %v84
    %v331 = vunpack.c.l.b16 %v85
    %v332 = vunpack.c.l.b16 %v86
    %v333 = vunpack.c.l.b16 %v87
    %v334 = vunpack.c.l.b16 %v88
    %v335 = vunpack.c.l.b16 %v89
    %v336 = vunpack.c.l.b16 %v90
    %v337 = vunpack.c.l.b16 %v91
    %v338 = vunpack.c.l.b16 %v92
    %v339 = vunpack.c.l.b16 %v93
    %v340 = vunpack.c.l.b16 %v94
    %v341 = vunpack.c.l.b16 %v95
    %v342 = vunpack.c.l.b16 %v96
    %v343 = vunpack.c.l.b16 %v97
    %v344 = vunpack.c.l.b16 %v98
    %v345 = vunpack.c.l.b16 %v99
    %v346 = vunpack.c.l.b16 %v100
    %v347 = vunpack.c.l.b16 %v101
    %v348 = vunpack.c.l.b16 %v102
    %v349 = vunpack.c.l.b16 %v103
    %v350 = vunpack.c.l.b16 %v104
    %v351 = vunpack.c.l.b16 %v105
    %v352 = vunpack.c.l.b16 %v106
    %v353 = vunpack.c.l.b16 %v107
    %v354 = vunpack.c.l.b16 %v108
    %v355 = vunpack.c.l.b16 %v109
    %v356 = vunpack.c.l.b16 %v110
    %v357 = vunpack.c.l.b16 %v111
    %v358 = vunpack.c.l.b16 %v112
    %v359 = vunpack.c.l.b16 %v113
    %v360 = vunpack.c.l.b16 %v114
    %v361 = vpack.c.b16 %v266, %v265
    %v362 = vpack.c.b16 %v268, %v267
    %v363 = vpack.c.b16 %v270, %v269
    %v364 = vpack.c.b16 %v272, %v271
    %v365 = vpack.c.b16 %v274, %v273
    %v366 = vpack.c.b16 %v276, %v275
    %v367 = vpack.c.b16 %v278, %v277
    %v368 = vpack.c.b16 %v280, %v279
    %v369 = vpack.c.b16 %v282, %v281
    %v370 = vpack.c.b16 %v284, %v283
    %v371 = vpack.c.b16 %v286, %v285
    %v372 = vpack.c.b16 %v288, %v287
    %v373 = vpack.c.b16 %v290, %v289
    %v374 = vpack.c.b16 %v292, %v291
    %v375 = vpack.c.b16 %v294, %v293
    %v376 = vpack.c.b16 %v296, %v295
    %v377 = vpack.c.b16 %v298, %v297
    %v378 = vpack.c.b16 %v300, %v299
    %v379 = vpack.c.b16 %v302, %v301
    %v380 = vpack.c.b16 %v304, %v303
    %v381 = vpack.c.b16 %v306, %v305
    %v382 = vpack.c.b16 %v308, %v307
    %v383 = vpack.c.b16 %v310, %v309
    %v384 = vpack.c.b16 %v312, %v311
    %v385 = vpack.c.b16 %v314, %v313
    %v386 = vpack.c.b16 %v316, %v315
    %v387 = vpack.c.b16 %v318, %v317
    %v388 = vpack.c.b16 %v320, %v319
    %v389 = vpack.c.b16 %v322, %v321
    %v390 = vpack.c.b16 %v324, %v323
    %v391 = vpack.c.b16 %v326, %v325
    %v392 = vpack.c.b16 %v328, %v327
    %v393 = vpack.c.b16 %v330, %v329
    %v394 = vpack.c.b16 %v332, %v331
    %v395 = vpack.c.b16 %v334, %v333
    %v396 = vpack.c.b16 %v336, %v335
    %v397 = vpack.c.b16 %v338, %v337
    %v398 = vpack.c.b16 %v340, %v339
    %v399 = vpack.c.b16 %v342, %v341
    %v400 = vpack.c.b16 %v344, %v343
    %v401 = vpack.c.b16 %v346, %v345
    %v402 = vpack.c.b16 %v348, %v347
    %v403 = vpack.c.b16 %v350, %v349
    %v404 = vpack.c.b16 %v352, %v351
    %v405 = vpack.c.b16 %v354, %v353
    %v406 = vpack.c.b16 %v356, %v355
    %v407 = vpack.c.b16 %v358, %v357
    %v408 = vpack.c.b16 %v360, %v359
    %457 = vmatprep.subr.bf16.mxu0 0
    %458 = vmatpush1.bf16.msra.mxu0 %v368
    %459 = vmatprep.subr.bf16.mxu0 0
    %460 = vmatpush1.bf16.msra.mxu0 %v367
    %461 = vmatprep.subr.bf16.mxu0 0
    %462 = vmatpush1.bf16.msra.mxu0 %v366
    %463 = vmatprep.subr.bf16.mxu0 0
    %464 = vmatpush1.bf16.msra.mxu0 %v365
    %465 = vmatprep.subr.bf16.mxu0 0
    %466 = vmatpush1.bf16.msra.mxu0 %v364
    %467 = vmatprep.subr.bf16.mxu0 0
    %468 = vmatpush1.bf16.msra.mxu0 %v363
    %469 = vmatprep.subr.bf16.mxu0 0
    %470 = vmatpush1.bf16.msra.mxu0 %v362
    %471 = vmatprep.subr.bf16.mxu0 0
    %472 = vmatpush1.bf16.msra.mxu0 %v361
    %473 = vmatprep.subr.bf16.mxu0 0
    %474 = vmatpush2.bf16.msra.mxu0 %v376
    %475 = vmatprep.subr.bf16.mxu0 0
    %476 = vmatpush2.bf16.msra.mxu0 %v375
    %477 = vmatprep.subr.bf16.mxu0 0
    %478 = vmatpush2.bf16.msra.mxu0 %v374
    %479 = vmatprep.subr.bf16.mxu0 0
    %480 = vmatpush2.bf16.msra.mxu0 %v373
    %481 = vmatprep.subr.bf16.mxu0 0
    %482 = vmatpush2.bf16.msra.mxu0 %v372
    %483 = vmatprep.subr.bf16.mxu0 0
    %484 = vmatpush2.bf16.msra.mxu0 %v371
    %485 = vmatprep.subr.bf16.mxu0 0
    %486 = vmatpush2.bf16.msra.mxu0 %v370
    %487 = vmatprep.subr.bf16.mxu0 0
    %488 = vmatpush2.bf16.msra.mxu0 %v369
    %489 = vmatprep.mubr.bf16.mxu0 %v153
    %490 = vmatmul.mubr.bf16.gmra.mxu0 %v139
    %v491 = vpop.f32.mrf.mxu0
    %v492 = vadd.f32 0.0, %v491
    %v493 = vpop.f32.mrf.mxu0
    %v494 = vpop.f32.mrf.mxu0
    %v495 = vpop.f32.mrf.mxu0
    %496 = vdwg.mxu0
    %497 = vmatprep.subr.bf16.mxu0 0
    %498 = vmatpush1.bf16.msra.mxu0 %v384
    %499 = vmatprep.subr.bf16.mxu0 0
    %500 = vmatpush1.bf16.msra.mxu0 %v383
    %501 = vmatprep.subr.bf16.mxu0 0
    %502 = vmatpush1.bf16.msra.mxu0 %v382
    %503 = vmatprep.subr.bf16.mxu0 0
    %504 = vmatpush1.bf16.msra.mxu0 %v381
    %505 = vmatprep.subr.bf16.mxu0 0
    %506 = vmatpush1.bf16.msra.mxu0 %v380
    %507 = vmatprep.subr.bf16.mxu0 0
    %508 = vmatpush1.bf16.msra.mxu0 %v379
    %509 = vmatprep.subr.bf16.mxu0 0
    %510 = vmatpush1.bf16.msra.mxu0 %v378
    %511 = vmatprep.subr.bf16.mxu0 0
    %512 = vmatpush1.bf16.msra.mxu0 %v377
    %513 = vmatprep.subr.bf16.mxu0 0
    %514 = vmatpush2.bf16.msra.mxu0 %v392
    %515 = vmatprep.subr.bf16.mxu0 0
    %516 = vmatpush2.bf16.msra.mxu0 %v391
    %517 = vmatprep.subr.bf16.mxu0 0
    %518 = vmatpush2.bf16.msra.mxu0 %v390
    %519 = vmatprep.subr.bf16.mxu0 0
    %520 = vmatpush2.bf16.msra.mxu0 %v389
    %521 = vmatprep.subr.bf16.mxu0 0
    %522 = vmatpush2.bf16.msra.mxu0 %v388
    %523 = vmatprep.subr.bf16.mxu0 0
    %524 = vmatpush2.bf16.msra.mxu0 %v387
    %525 = vmatprep.subr.bf16.mxu0 0
    %526 = vmatpush2.bf16.msra.mxu0 %v386
    %527 = vmatprep.subr.bf16.mxu0 0
    %528 = vmatpush2.bf16.msra.mxu0 %v385
    %529 = vmatprep.mubr.bf16.mxu0 %v162
    %530 = vmatmul.mubr.bf16.gmra.mxu0 %v161
    %v531 = vpop.f32.mrf.mxu0
    %v532 = vadd.f32 %v492, %v531
    %v533 = vpop.f32.mrf.mxu0
    %v534 = vpop.f32.mrf.mxu0
    %v535 = vpop.f32.mrf.mxu0
    %536 = vdwg.mxu0
    %537 = vmatprep.subr.bf16.mxu0 0
    %538 = vmatpush1.bf16.msra.mxu0 %v400
    %539 = vmatprep.subr.bf16.mxu0 0
    %540 = vmatpush1.bf16.msra.mxu0 %v399
    %541 = vmatprep.subr.bf16.mxu0 0
    %542 = vmatpush1.bf16.msra.mxu0 %v398
    %543 = vmatprep.subr.bf16.mxu0 0
    %544 = vmatpush1.bf16.msra.mxu0 %v397
    %545 = vmatprep.subr.bf16.mxu0 0
    %546 = vmatpush1.bf16.msra.mxu0 %v396
    %547 = vmatprep.subr.bf16.mxu0 0
    %548 = vmatpush1.bf16.msra.mxu0 %v395
    %549 = vmatprep.subr.bf16.mxu0 0
    %550 = vmatpush1.bf16.msra.mxu0 %v394
    %551 = vmatprep.subr.bf16.mxu0 0
    %552 = vmatpush1.bf16.msra.mxu0 %v393
    %553 = vmatprep.subr.bf16.mxu0 0
    %554 = vmatpush2.bf16.msra.mxu0 %v408
    %555 = vmatprep.subr.bf16.mxu0 0
    %556 = vmatpush2.bf16.msra.mxu0 %v407
    %557 = vmatprep.subr.bf16.mxu0 0
    %558 = vmatpush2.bf16.msra.mxu0 %v406
    %559 = vmatprep.subr.bf16.mxu0 0
    %560 = vmatpush2.bf16.msra.mxu0 %v405
    %561 = vmatprep.subr.bf16.mxu0 0
    %562 = vmatpush2.bf16.msra.mxu0 %v404
    %563 = vmatprep.subr.bf16.mxu0 0
    %564 = vmatpush2.bf16.msra.mxu0 %v403
    %565 = vmatprep.subr.bf16.mxu0 0
    %566 = vmatpush2.bf16.msra.mxu0 %v402
    %567 = vmatprep.subr.bf16.mxu0 0
    %568 = vmatpush2.bf16.msra.mxu0 %v401
    %569 = vmatprep.mubr.bf16.mxu0 %v160
    %570 = vmatmul.mubr.bf16.gmra.mxu0 %v146
    %v571 = vpop.f32.mrf.mxu0
    %v572 = vadd.f32 %v532, %v571
    %v573 = vpop.f32.mrf.mxu0
    %v574 = vpop.f32.mrf.mxu0
    %v575 = vpop.f32.mrf.mxu0
    %576 = vdwg.mxu0
    %v577 = vxor.u32 %v572, 2147483648
    %v578 = vmul.f32 %v577, 1.442695
    %v579 = vpow.pop %v578
    %v580 = vadd.f32 %v579, 1.0
    %v581 = vrcp.pop %v580
    %v582 = vmul.f32 1.0, %v581
    %vm583 = vcmask 1024
    %584 = vst.msk [vmem:[%s3] sm:$0x3] %vm583, %v582
    %v585 = vld [vmem:[%s2] sm:$0x1]
    %v587 = vlaneseq
    %v588 = vshrl.u32 %v587, 7
    %v589 = vsub.s32 0, %v588
    %v590 = vrot.slane %v585, %v589
    %591 = vrot.lane.b32.xlu0 %v590, 1
    %v592 = vpop.permute.xlu0 %591
    %v594 = vadd.f32 %v572, %v592
    %596 = vrot.lane.b32.xlu0 %v594, 127
    %v597 = vpop.permute.xlu0 %596
    %vm599 = vcmask 50176
    %600 = vst.msk [vmem:[#allocation2] sm:$0x3] %vm599, %v597
    // Predicated region
    $region14: #{discriminator_forward.11} parent=1 // pred_check
      _
    $region15: #{discriminator_forward.11} parent=1 // pred_check_branch
      %602 = sbr.rel (0) target = $region17
    $region16: #{discriminator_forward.11} parent=1 // pred_region
      _
    $region17: #{discriminator_forward.11} parent=1 // pred_fallthru
      _
    // Predicated region
    $region18: #{discriminator_forward.11} parent=1 // pred_check
      _
    $region19: #{discriminator_forward.11} parent=1 // pred_check_branch
      %604 = sbr.rel (0) target = $region21
    $region20: #{discriminator_forward.11} parent=1 // pred_region
      %s606 = ssub.s32 32, 32
      %607 = vsyncadd [#allocation3], %s606
      %s609 = sshll.u32 [#allocation2], 4
      %s610 = int_to_ptr.vmem [resolvable:$true] %s609
      %612 = dma.vmem_to_hbm [thread:$0]  %s610, 32, %s4, [#allocation3]
    $region21: #{discriminator_forward.11} parent=1 // pred_fallthru
      _
    // Predicated region
    $region22: #{discriminator_forward.11} parent=1 // pred_check
      _
    $region23: #{discriminator_forward.11} parent=1 // pred_check_branch
      %614 = sbr.rel (0) target = $region25
    $region24: #{discriminator_forward.11} parent=1 // pred_region
      _
    $region25: #{discriminator_forward.11} parent=1 // pred_fallthru
      _
    // Predicated region
    $region26: #{discriminator_forward.11} parent=1 // pred_check
      _
    $region27: #{discriminator_forward.11} parent=1 // pred_check_branch
      %616 = sbr.rel (0) target = $region29
    $region28: #{discriminator_forward.11} parent=1 // pred_region
      %617 = dma.done [#allocation3], 32
    $region29: #{discriminator_forward.11} parent=1 // pred_fallthru
      _
    %618 = vsyncpa [#allocation3], 1

</llo_original>
